<compile_context>
chip_gen: v6e
topology: v6e:2x2x1
jax: 0.10.0
libtpu: 0.0.40
codegen_flags: <defaults>
</compile_context>

<pallas_src>
import functools

import jax
import jax.numpy as jnp
import numpy as np
from jax import lax
from jax.experimental import pallas as pl
from jax.experimental.pallas import tpu as pltpu


# ----------------------------------------------------------------------------
# Fused Pallas kernel: all transformer layers + output head in one call
# ----------------------------------------------------------------------------
def fused_transformer_kernel(
    x_ref,
    wqkv_ref, bqkv_ref,
    wo_ref, bo_ref,
    w1_ref, b1_ref,
    w2_ref, b2_ref,
    wout_ref, bout_ref,
    att_ref, logp_ref,
    x_scratch, mask_scratch,
    *, num_heads, d_heads, causal,
):
    f32, bf16 = jnp.float32, jnp.bfloat16
    d_internal = num_heads * d_heads
    layer = pl.program_id(0)

    # Layer 0: load embedded input into the persistent VMEM activation buffer
    # and build the causal additive mask once (reused by every layer).
    @pl.when(layer == 0)
    def _():
        x_scratch[...] = x_ref[...]
        if causal:
            row = lax.broadcasted_iota(jnp.int32, mask_scratch.shape, 0)
            col = lax.broadcasted_iota(jnp.int32, mask_scratch.shape, 1)
            mask_scratch[...] = jnp.where(col > row, f32(-1e30), f32(0.0))

    x = x_scratch[...]                                   # (T, d_model), f32, VMEM-resident
    T = x.shape[0]

    # ---- fused Q|K|V projection: one bf16 MXU matmul, f32 accumulation -----
    qkv = jnp.dot(x.astype(bf16), wqkv_ref[0],
                  preferred_element_type=f32) + bqkv_ref[0]            # (T, 3*d_internal)
    q = qkv[:, 0 * d_internal:1 * d_internal]
    k = qkv[:, 1 * d_internal:2 * d_internal]
    v = qkv[:, 2 * d_internal:3 * d_internal]

    # ---- head split: one reshape + one transpose per tensor ----------------
    # K goes straight to (H, dh, T) so the scores matmul is MXU-native NN.
    qh = jnp.transpose(q.reshape(T, num_heads, d_heads), (1, 0, 2))    # (H, T, dh)
    khT = jnp.transpose(k.reshape(T, num_heads, d_heads), (1, 2, 0))   # (H, dh, T)
    vh = jnp.transpose(v.reshape(T, num_heads, d_heads), (1, 0, 2))    # (H, T, dh)

    scale = f32(1.0 / np.sqrt(d_heads))
    scores = jnp.einsum("htd,hds->hts", qh.astype(bf16), khT.astype(bf16),
                        preferred_element_type=f32) * scale            # (H, T, T) f32

    if causal:
        scores = scores + mask_scratch[...][None]

    # ---- softmax in f32 (EUP reciprocal) ------------------------------------
    m = jnp.max(scores, axis=-1, keepdims=True)
    e = jnp.exp(scores - m)
    denom = jnp.sum(e, axis=-1, keepdims=True)
    att = e * pl.reciprocal(denom, approx=True)                        # (H, T, T) f32

    # Lane-dense store of all heads of this layer: last dim = T*T (multiple of 128).
    att_ref[0] = att.reshape(num_heads, T * T)

    ctx = jnp.einsum("hts,hsd->htd", att.astype(bf16), vh.astype(bf16),
                     preferred_element_type=f32)                       # (H, T, dh) f32

    # ---- output projection: single fused (T, H*dh) x (H*dh, d_model) matmul -
    attn_cat = jnp.transpose(ctx, (1, 0, 2)).reshape(T, d_internal)    # (T, d_internal)
    attn_out = jnp.dot(attn_cat.astype(bf16), wo_ref[0],
                       preferred_element_type=f32) + bo_ref[0]

    res1 = attn_out + x                                                # residual 1

    # ---- feedforward: Linear -> ReLU -> Linear, residual --------------------
    hmid = jnp.maximum(
        jnp.dot(res1.astype(bf16), w1_ref[0], preferred_element_type=f32) + b1_ref[0],
        0.0)
    ff = jnp.dot(hmid.astype(bf16), w2_ref[0], preferred_element_type=f32) + b2_ref[0]

    x_new = ff + res1
    x_scratch[...] = x_new

    # ---- fused output head on the last grid step (lane-dense padded classes)
    @pl.when(layer == pl.num_programs(0) - 1)
    def _():
        logits = jnp.dot(x_new.astype(bf16), wout_ref[...],
                         preferred_element_type=f32) + bout_ref[...]   # (T, 128)
        # Padded class columns carry bias -1e30 -> exp underflows to 0, so the
        # log-sum-exp equals the one over the real classes only.
        mx = jnp.max(logits, axis=-1, keepdims=True)
        lse = jnp.log(jnp.sum(jnp.exp(logits - mx), axis=-1, keepdims=True)) + mx
        logp_ref[...] = logits - lse                                   # log_softmax


# ----------------------------------------------------------------------------
# Wrapper: one pallas_call over a (num_layers,) grid
# ----------------------------------------------------------------------------
def transformer_forward(indices, params, *, num_heads, d_heads, num_classes, causal):
    # Embedding lookup + positional encoding (glue in plain JAX).
    x = jnp.take(params["embedding"], indices, axis=0)                 # (T, d_model)
    T, d_model = x.shape
    x = x + params["pos_embedding"][:T]

    d_internal = num_heads * d_heads
    num_layers = params["wqkv"].shape[0]
    padded_classes = params["w_out"].shape[1]

    kernel = functools.partial(
        fused_transformer_kernel,
        num_heads=num_heads, d_heads=d_heads, causal=causal,
    )

    def per_layer(shape):
        return pl.BlockSpec((1,) + shape, lambda l, nd=len(shape): (l,) + (0,) * nd)

    def shared(shape):
        return pl.BlockSpec(shape, lambda l, nd=len(shape): (0,) * nd)

    in_specs = [
        shared((T, d_model)),                                # x (embedded input)
        per_layer((d_model, 3 * d_internal)),                # wqkv   (bf16)
        per_layer((1, 3 * d_internal)),                      # bqkv   (f32)
        per_layer((d_internal, d_model)),                    # wo     (bf16, 2D)
        per_layer((1, d_model)),                             # bo     (f32)
        per_layer((d_model, 2 * d_model)),                   # w1     (bf16)
        per_layer((1, 2 * d_model)),                         # b1     (f32)
        per_layer((2 * d_model, d_model)),                   # w2     (bf16)
        per_layer((1, d_model)),                             # b2     (f32)
        shared((d_model, padded_classes)),                   # w_out  (bf16, padded)
        shared((1, padded_classes)),                         # b_out  (f32, padded)
    ]
    out_specs = (
        pl.BlockSpec((1, num_heads, T * T), lambda l: (l, 0, 0)),      # attention maps (lane-dense)
        pl.BlockSpec((T, padded_classes), lambda l: (0, 0)),           # padded log-probs
    )
    out_shape = (
        jax.ShapeDtypeStruct((num_layers, num_heads, T * T), jnp.float32),
        jax.ShapeDtypeStruct((T, padded_classes), jnp.float32),
    )

    att_flat, logp_pad = pl.pallas_call(
        kernel,
        grid=(num_layers,),
        in_specs=in_specs,
        out_specs=out_specs,
        out_shape=out_shape,
        scratch_shapes=[pltpu.VMEM((T, d_model), jnp.float32),         # x carried across layers
                        pltpu.VMEM((T, T), jnp.float32)],              # hoisted causal mask
        compiler_params=pltpu.CompilerParams(dimension_semantics=("arbitrary",)),
    )(
        x,
        params["wqkv"], params["bqkv"],
        params["wo"], params["bo"],
        params["w1"], params["b1"],
        params["w2"], params["b2"],
        params["w_out"], params["b_out"],
    )

    att_maps = att_flat.reshape(num_layers, num_heads, T, T)
    log_probs = logp_pad[:, :num_classes]
    return log_probs, [att_maps[l] for l in range(num_layers)]


# ----------------------------------------------------------------------------
# Parameter construction (deterministic, synthetic; stacked per-layer arrays)
# Weights stored bf16 (MXU-native), biases f32; output head padded to 128 lanes.
# ----------------------------------------------------------------------------
def init_params(key, *, vocab_size, num_positions, d_model, d_internal,
                num_classes, num_layers, num_heads):
    ks = jax.random.split(key, 4 + num_layers)
    scale = 0.1
    normal = lambda k, s: scale * jax.random.normal(k, s, jnp.float32)
    bf16 = jnp.bfloat16

    padded_classes = ((num_classes + 127) // 128) * 128
    w_out = jnp.zeros((d_model, padded_classes), jnp.float32)
    w_out = w_out.at[:, :num_classes].set(normal(ks[2], (d_model, num_classes)))
    b_out = jnp.full((1, padded_classes), -1e30, jnp.float32)
    b_out = b_out.at[:, :num_classes].set(normal(ks[3], (1, num_classes)))

    params = {
        "embedding": normal(ks[0], (vocab_size, d_model)),
        "pos_embedding": normal(ks[1], (num_positions, d_model)),
        "w_out": w_out.astype(bf16),
        "b_out": b_out,
    }

    wqkv, bqkv, wo, bo, w1, b1, w2, b2 = ([] for _ in range(8))
    for l in range(num_layers):
        lk = jax.random.split(ks[4 + l], 12)
        wq, bq = normal(lk[0], (d_model, d_internal)), normal(lk[1], (1, d_internal))
        wk, bk = normal(lk[2], (d_model, d_internal)), normal(lk[3], (1, d_internal))
        wv, bv = normal(lk[4], (d_model, d_internal)), normal(lk[5], (1, d_internal))
        wqkv.append(jnp.concatenate([wq, wk, wv], axis=1).astype(bf16))   # (d_model, 3*d_internal)
        bqkv.append(jnp.concatenate([bq, bk, bv], axis=1))                # (1, 3*d_internal) f32
        wo.append(normal(lk[6], (d_internal, d_model)).astype(bf16))      # (d_internal, d_model)
        bo.append(normal(lk[7], (1, d_model)))
        w1.append(normal(lk[8], (d_model, 2 * d_model)).astype(bf16))
        b1.append(normal(lk[9], (1, 2 * d_model)))
        w2.append(normal(lk[10], (2 * d_model, d_model)).astype(bf16))
        b2.append(normal(lk[11], (1, d_model)))

    for name, lst in [("wqkv", wqkv), ("bqkv", bqkv), ("wo", wo), ("bo", bo),
                      ("w1", w1), ("b1", b1), ("w2", w2), ("b2", b2)]:
        params[name] = jnp.stack(lst, axis=0)
    return params


# ----------------------------------------------------------------------------
# Pure-JAX reference (same math as the PyTorch module, with the same bf16
# matmul-operand rounding + f32 accumulation as the kernel) for validation.
# ----------------------------------------------------------------------------
def reference_forward(indices, params, *, num_heads, d_heads, num_classes, causal):
    f32, bf16 = jnp.float32, jnp.bfloat16
    x = jnp.take(params["embedding"], indices, axis=0)
    T, d_model = x.shape
    x = x + params["pos_embedding"][:T]
    d_internal = num_heads * d_heads
    num_layers = params["wqkv"].shape[0]
    atts = []
    for l in range(num_layers):
        qkv = jnp.dot(x.astype(bf16), params["wqkv"][l],
                      preferred_element_type=f32) + params["bqkv"][l]
        q = qkv[:, :d_internal]
        k = qkv[:, d_internal:2 * d_internal]
        v = qkv[:, 2 * d_internal:]
        qh = q.reshape(T, num_heads, d_heads).transpose(1, 0, 2)
        kh = k.reshape(T, num_heads, d_heads).transpose(1, 0, 2)
        vh = v.reshape(T, num_heads, d_heads).transpose(1, 0, 2)
        scores = jnp.einsum("htd,hsd->hts", qh.astype(bf16), kh.astype(bf16),
                            preferred_element_type=f32) / np.sqrt(d_heads)
        if causal:
            mask = jnp.triu(jnp.ones((T, T), dtype=bool), k=1)
            scores = scores + jnp.where(mask, jnp.float32(-1e30), jnp.float32(0.0))[None]
        att = jax.nn.softmax(scores, axis=-1)
        atts.append(att)
        ctx = jnp.einsum("hts,hsd->htd", att.astype(bf16), vh.astype(bf16),
                         preferred_element_type=f32)
        attn_cat = ctx.transpose(1, 0, 2).reshape(T, d_internal)
        res1 = jnp.dot(attn_cat.astype(bf16), params["wo"][l],
                       preferred_element_type=f32) + params["bo"][l] + x
        hmid = jnp.maximum(
            jnp.dot(res1.astype(bf16), params["w1"][l], preferred_element_type=f32)
            + params["b1"][l], 0.0)
        x = jnp.dot(hmid.astype(bf16), params["w2"][l], preferred_element_type=f32) \
            + params["b2"][l] + res1
    logits = jnp.dot(x.astype(bf16), params["w_out"][:, :num_classes],
                     preferred_element_type=f32) + params["b_out"][:, :num_classes]
    return jax.nn.log_softmax(logits, axis=-1), atts


# ----------------------------------------------------------------------------
if __name__ == "__main__":
    # small, deterministic config consistent with the module
    vocab_size = 10
    num_positions = 20
    d_model = 32
    d_internal = 32
    num_classes = 3
    num_layers = 2
    num_heads = 4
    causal_mask = True
    seq_len = 16
    d_heads = d_internal // num_heads

    key = jax.random.PRNGKey(0)
    pkey, ikey = jax.random.split(key)
    params = init_params(
        pkey,
        vocab_size=vocab_size, num_positions=num_positions,
        d_model=d_model, d_internal=d_internal,
        num_classes=num_classes, num_layers=num_layers, num_heads=num_heads,
    )
    indices = jax.random.randint(ikey, (seq_len,), 0, vocab_size, dtype=jnp.int32)

    fwd = jax.jit(functools.partial(
        transformer_forward, num_heads=num_heads, d_heads=d_heads,
        num_classes=num_classes, causal=causal_mask))
    log_probs, attention_maps = fwd(indices, params)
    jax.block_until_ready(log_probs)
    for a in attention_maps:
        jax.block_until_ready(a)

    # structural checks
    assert log_probs.shape == (seq_len, num_classes)
    assert all(a.shape == (num_heads, seq_len, seq_len) for a in attention_maps)
    assert jnp.allclose(jnp.sum(jnp.exp(log_probs), axis=-1), 1.0, atol=1e-4)
    assert all(jnp.allclose(jnp.sum(a, axis=-1), 1.0, atol=1e-2) for a in attention_maps)

    # numerical check against pure-JAX reference (tolerance covers approx reciprocal)
    ref_lp, ref_atts = reference_forward(
        indices, params, num_heads=num_heads, d_heads=d_heads,
        num_classes=num_classes, causal=causal_mask)
    assert jnp.allclose(log_probs, ref_lp, atol=1e-2), "log-prob mismatch vs reference"
    for a, ra in zip(attention_maps, ref_atts):
        assert jnp.allclose(a, ra, atol=1e-2), "attention-map mismatch vs reference"

    print("KERNEL_OK")
</pallas_src>

<mosaic_0001>
module attributes {stable_mosaic.version = 11 : i64} {
  func.func @fused_transformer_kernel(%arg0: i32, %arg1: memref<16x32xf32, #tpu.memory_space<vmem>>, %arg2: memref<1x32x96xbf16, #tpu.memory_space<vmem>>, %arg3: memref<1x1x96xf32, #tpu.memory_space<vmem>>, %arg4: memref<1x32x32xbf16, #tpu.memory_space<vmem>>, %arg5: memref<1x1x32xf32, #tpu.memory_space<vmem>>, %arg6: memref<1x32x64xbf16, #tpu.memory_space<vmem>>, %arg7: memref<1x1x64xf32, #tpu.memory_space<vmem>>, %arg8: memref<1x64x32xbf16, #tpu.memory_space<vmem>>, %arg9: memref<1x1x32xf32, #tpu.memory_space<vmem>>, %arg10: memref<32x128xbf16, #tpu.memory_space<vmem>>, %arg11: memref<1x128xf32, #tpu.memory_space<vmem>>, %arg12: memref<1x4x256xf32, #tpu.memory_space<vmem>>, %arg13: memref<16x128xf32, #tpu.memory_space<vmem>>, %arg14: memref<16x32xf32, #tpu.memory_space<vmem>>, %arg15: memref<16x16xf32, #tpu.memory_space<vmem>>) attributes {dimension_semantics = [#tpu.dimension_semantics<arbitrary>], iteration_bounds = array<i64: 2>, scalar_prefetch = 0 : i64, scratch_operands = 2 : i64, tpu.core_type = #tpu.core_type<tc>, window_params = [{pipeline_mode = #tpu.pipeline_mode<synchronous>, transform_indices = @transform_0, window_bounds = array<i64: 16, 32>}, {transform_indices = @transform_1, window_bounds = array<i64: 1, 32, 96>}, {transform_indices = @transform_2, window_bounds = array<i64: 1, 1, 96>}, {transform_indices = @transform_3, window_bounds = array<i64: 1, 32, 32>}, {transform_indices = @transform_4, window_bounds = array<i64: 1, 1, 32>}, {transform_indices = @transform_5, window_bounds = array<i64: 1, 32, 64>}, {transform_indices = @transform_6, window_bounds = array<i64: 1, 1, 64>}, {transform_indices = @transform_7, window_bounds = array<i64: 1, 64, 32>}, {transform_indices = @transform_8, window_bounds = array<i64: 1, 1, 32>}, {pipeline_mode = #tpu.pipeline_mode<synchronous>, transform_indices = @transform_9, window_bounds = array<i64: 32, 128>}, {pipeline_mode = #tpu.pipeline_mode<synchronous>, transform_indices = @transform_10, window_bounds = array<i64: 1, 128>}, {transform_indices = @transform_11, window_bounds = array<i64: 1, 4, 256>}, {pipeline_mode = #tpu.pipeline_mode<synchronous>, transform_indices = @transform_12, window_bounds = array<i64: 16, 128>}]} {
    %c0_i32 = arith.constant 0 : i32
    %0 = arith.cmpi eq, %arg0, %c0_i32 : i32
    %1 = arith.extui %0 : i1 to i32
    %c0_i32_0 = arith.constant 0 : i32
    %2 = arith.cmpi ne, %1, %c0_i32_0 : i32
    scf.if %2 {
      %c0_43 = arith.constant 0 : index
      %c0_44 = arith.constant 0 : index
      %81 = vector.load %arg1[%c0_43, %c0_44] : memref<16x32xf32, #tpu.memory_space<vmem>>, vector<16x32xf32>
      %c0_45 = arith.constant 0 : index
      %c0_46 = arith.constant 0 : index
      %82 = vector.load %arg14[%c0_45, %c0_46] : memref<16x32xf32, #tpu.memory_space<vmem>>, vector<16x32xf32>
      tpu.vector_store %arg14[%c0_45, %c0_46], %81 {strides = array<i32>} : memref<16x32xf32, #tpu.memory_space<vmem>>, vector<16x32xf32>,
      %83 = tpu.iota {dimensions = array<i32: 0>} : vector<16x16xi32>
      %84 = tpu.iota {dimensions = array<i32: 1>} : vector<16x16xi32>
      %85 = arith.cmpi sgt, %84, %83 : vector<16x16xi32>
      %cst_47 = arith.constant -1.000000e+30 : f32
      %cst_48 = arith.constant 0.000000e+00 : f32
      %86 = vector.broadcast %cst_47 : f32 to vector<16x16xf32>
      %87 = vector.broadcast %cst_48 : f32 to vector<16x16xf32>
      %88 = arith.select %85, %86, %87 : vector<16x16xi1>, vector<16x16xf32>
      %c0_49 = arith.constant 0 : index
      %c0_50 = arith.constant 0 : index
      %89 = vector.load %arg15[%c0_49, %c0_50] : memref<16x16xf32, #tpu.memory_space<vmem>>, vector<16x16xf32>
      tpu.vector_store %arg15[%c0_49, %c0_50], %88 {strides = array<i32>} : memref<16x16xf32, #tpu.memory_space<vmem>>, vector<16x16xf32>,
    } else {
    }
    %c0 = arith.constant 0 : index
    %c0_1 = arith.constant 0 : index
    %3 = vector.load %arg14[%c0, %c0_1] : memref<16x32xf32, #tpu.memory_space<vmem>>, vector<16x32xf32>
    %4 = arith.truncf %3 : vector<16x32xf32> to vector<16x32xbf16>
    %c0_2 = arith.constant 0 : index
    %c0_3 = arith.constant 0 : index
    %c0_4 = arith.constant 0 : index
    %5 = vector.load %arg2[%c0_2, %c0_3, %c0_4] : memref<1x32x96xbf16, #tpu.memory_space<vmem>>, vector<1x32x96xbf16>
    %6 = vector.shape_cast %5 : vector<1x32x96xbf16> to vector<32x96xbf16>
    %cst = arith.constant dense<0.000000e+00> : vector<16x96xf32>
    %7 = tpu.matmul %4, %6, %cst {dimension_numbers = #tpu.dot_dimension_numbers<[1], [0], [0], [1], [0, 0, 1, 1], [], []>} : vector<16x32xbf16>, vector<32x96xbf16>, vector<16x96xf32> -> vector<16x96xf32>
    %c0_5 = arith.constant 0 : index
    %c0_6 = arith.constant 0 : index
    %c0_7 = arith.constant 0 : index
    %8 = vector.load %arg3[%c0_5, %c0_6, %c0_7] : memref<1x1x96xf32, #tpu.memory_space<vmem>>, vector<1x1x96xf32>
    %9 = vector.shape_cast %8 : vector<1x1x96xf32> to vector<1x96xf32>
    %10 = vector.broadcast %9 : vector<1x96xf32> to vector<16x96xf32>
    %11 = arith.addf %7, %10 : vector<16x96xf32>
    %12 = vector.extract_strided_slice %11 {offsets = [0, 0], sizes = [16, 32], strides = [1, 1]} : vector<16x96xf32> to vector<16x32xf32>
    %13 = vector.extract_strided_slice %11 {offsets = [0, 32], sizes = [16, 32], strides = [1, 1]} : vector<16x96xf32> to vector<16x32xf32>
    %14 = vector.extract_strided_slice %11 {offsets = [0, 64], sizes = [16, 32], strides = [1, 1]} : vector<16x96xf32> to vector<16x32xf32>
    %15 = vector.shape_cast %12 : vector<16x32xf32> to vector<16x4x8xf32>
    %16 = tpu.transpose %15, [1, 0, 2] : vector<16x4x8xf32> -> vector<4x16x8xf32>
    %17 = vector.shape_cast %13 : vector<16x32xf32> to vector<16x4x8xf32>
    %18 = tpu.transpose %17, [1, 2, 0] : vector<16x4x8xf32> -> vector<4x8x16xf32>
    %19 = vector.shape_cast %14 : vector<16x32xf32> to vector<16x4x8xf32>
    %20 = tpu.transpose %19, [1, 0, 2] : vector<16x4x8xf32> -> vector<4x16x8xf32>
    %21 = arith.truncf %16 : vector<4x16x8xf32> to vector<4x16x8xbf16>
    %22 = arith.truncf %18 : vector<4x8x16xf32> to vector<4x8x16xbf16>
    "tpu.trace_start"() <{level = 10 : i32, message = "htd,hds->hts"}> : () -> ()
    %cst_8 = arith.constant dense<0.000000e+00> : vector<4x16x16xf32>
    %23 = tpu.matmul %21, %22, %cst_8 {dimension_numbers = #tpu.dot_dimension_numbers<[2], [1], [1], [2], [0, 0, 0, 1, 1, 2], [0], [0]>} : vector<4x16x8xbf16>, vector<4x8x16xbf16>, vector<4x16x16xf32> -> vector<4x16x16xf32>
    "tpu.trace_stop"() : () -> ()
    %cst_9 = arith.constant 0.353553385 : f32
    %24 = vector.broadcast %cst_9 : f32 to vector<4x16x16xf32>
    %25 = arith.mulf %23, %24 : vector<4x16x16xf32>
    %c0_10 = arith.constant 0 : index
    %c0_11 = arith.constant 0 : index
    %26 = vector.load %arg15[%c0_10, %c0_11] : memref<16x16xf32, #tpu.memory_space<vmem>>, vector<16x16xf32>
    %27 = vector.shape_cast %26 : vector<16x16xf32> to vector<1x16x16xf32>
    %28 = vector.broadcast %27 : vector<1x16x16xf32> to vector<4x16x16xf32>
    %29 = arith.addf %25, %28 : vector<4x16x16xf32>
    %cst_12 = arith.constant dense<0xFF800000> : vector<4x16xf32>
    %30 = vector.multi_reduction <maximumf>, %29, %cst_12 [2] : vector<4x16x16xf32> to vector<4x16xf32>
    %31 = vector.shape_cast %30 : vector<4x16xf32> to vector<4x16x1xf32>
    %32 = vector.broadcast %31 : vector<4x16x1xf32> to vector<4x16x16xf32>
    %33 = arith.subf %29, %32 : vector<4x16x16xf32>
    %34 = math.exp %33 : vector<4x16x16xf32>
    %cst_13 = arith.constant dense<0.000000e+00> : vector<4x16xf32>
    %35 = vector.multi_reduction <add>, %34, %cst_13 [2] : vector<4x16x16xf32> to vector<4x16xf32>
    %36 = vector.shape_cast %35 : vector<4x16xf32> to vector<4x16x1xf32>
    %37 = tpu.reciprocal %36 {approx = true} : vector<4x16x1xf32> -> vector<4x16x1xf32>
    %38 = vector.broadcast %37 : vector<4x16x1xf32> to vector<4x16x16xf32>
    %39 = arith.mulf %34, %38 : vector<4x16x16xf32>
    %40 = vector.shape_cast %39 : vector<4x16x16xf32> to vector<4x256xf32>
    %c0_14 = arith.constant 0 : index
    %c0_15 = arith.constant 0 : index
    %c0_16 = arith.constant 0 : index
    %41 = vector.load %arg12[%c0_14, %c0_15, %c0_16] : memref<1x4x256xf32, #tpu.memory_space<vmem>>, vector<1x4x256xf32>
    %42 = vector.shape_cast %41 : vector<1x4x256xf32> to vector<4x256xf32>
    %43 = vector.shape_cast %40 : vector<4x256xf32> to vector<1x4x256xf32>
    tpu.vector_store %arg12[%c0_14, %c0_15, %c0_16], %43 {strides = array<i32>} : memref<1x4x256xf32, #tpu.memory_space<vmem>>, vector<1x4x256xf32>,
    %44 = arith.truncf %39 : vector<4x16x16xf32> to vector<4x16x16xbf16>
    %45 = arith.truncf %20 : vector<4x16x8xf32> to vector<4x16x8xbf16>
    "tpu.trace_start"() <{level = 10 : i32, message = "hts,hsd->htd"}> : () -> ()
    %cst_17 = arith.constant dense<0.000000e+00> : vector<4x16x8xf32>
    %46 = tpu.matmul %44, %45, %cst_17 {dimension_numbers = #tpu.dot_dimension_numbers<[2], [1], [1], [2], [0, 0, 0, 1, 1, 2], [0], [0]>} : vector<4x16x16xbf16>, vector<4x16x8xbf16>, vector<4x16x8xf32> -> vector<4x16x8xf32>
    "tpu.trace_stop"() : () -> ()
    %47 = tpu.transpose %46, [1, 0, 2] : vector<4x16x8xf32> -> vector<16x4x8xf32>
    %48 = vector.shape_cast %47 : vector<16x4x8xf32> to vector<16x32xf32>
    %49 = arith.truncf %48 : vector<16x32xf32> to vector<16x32xbf16>
    %c0_18 = arith.constant 0 : index
    %c0_19 = arith.constant 0 : index
    %c0_20 = arith.constant 0 : index
    %50 = vector.load %arg4[%c0_18, %c0_19, %c0_20] : memref<1x32x32xbf16, #tpu.memory_space<vmem>>, vector<1x32x32xbf16>
    %51 = vector.shape_cast %50 : vector<1x32x32xbf16> to vector<32x32xbf16>
    %cst_21 = arith.constant dense<0.000000e+00> : vector<16x32xf32>
    %52 = tpu.matmul %49, %51, %cst_21 {dimension_numbers = #tpu.dot_dimension_numbers<[1], [0], [0], [1], [0, 0, 1, 1], [], []>} : vector<16x32xbf16>, vector<32x32xbf16>, vector<16x32xf32> -> vector<16x32xf32>
    %c0_22 = arith.constant 0 : index
    %c0_23 = arith.constant 0 : index
    %c0_24 = arith.constant 0 : index
    %53 = vector.load %arg5[%c0_22, %c0_23, %c0_24] : memref<1x1x32xf32, #tpu.memory_space<vmem>>, vector<1x1x32xf32>
    %54 = vector.shape_cast %53 : vector<1x1x32xf32> to vector<1x32xf32>
    %55 = vector.broadcast %54 : vector<1x32xf32> to vector<16x32xf32>
    %56 = arith.addf %52, %55 : vector<16x32xf32>
    %57 = arith.addf %56, %3 : vector<16x32xf32>
    %58 = arith.truncf %57 : vector<16x32xf32> to vector<16x32xbf16>
    %c0_25 = arith.constant 0 : index
    %c0_26 = arith.constant 0 : index
    %c0_27 = arith.constant 0 : index
    %59 = vector.load %arg6[%c0_25, %c0_26, %c0_27] : memref<1x32x64xbf16, #tpu.memory_space<vmem>>, vector<1x32x64xbf16>
    %60 = vector.shape_cast %59 : vector<1x32x64xbf16> to vector<32x64xbf16>
    %cst_28 = arith.constant dense<0.000000e+00> : vector<16x64xf32>
    %61 = tpu.matmul %58, %60, %cst_28 {dimension_numbers = #tpu.dot_dimension_numbers<[1], [0], [0], [1], [0, 0, 1, 1], [], []>} : vector<16x32xbf16>, vector<32x64xbf16>, vector<16x64xf32> -> vector<16x64xf32>
    %c0_29 = arith.constant 0 : index
    %c0_30 = arith.constant 0 : index
    %c0_31 = arith.constant 0 : index
    %62 = vector.load %arg7[%c0_29, %c0_30, %c0_31] : memref<1x1x64xf32, #tpu.memory_space<vmem>>, vector<1x1x64xf32>
    %63 = vector.shape_cast %62 : vector<1x1x64xf32> to vector<1x64xf32>
    %64 = vector.broadcast %63 : vector<1x64xf32> to vector<16x64xf32>
    %65 = arith.addf %61, %64 : vector<16x64xf32>
    %cst_32 = arith.constant 0.000000e+00 : f32
    %66 = vector.broadcast %cst_32 : f32 to vector<16x64xf32>
    %67 = arith.maximumf %65, %66 : vector<16x64xf32>
    %68 = arith.truncf %67 : vector<16x64xf32> to vector<16x64xbf16>
    %c0_33 = arith.constant 0 : index
    %c0_34 = arith.constant 0 : index
    %c0_35 = arith.constant 0 : index
    %69 = vector.load %arg8[%c0_33, %c0_34, %c0_35] : memref<1x64x32xbf16, #tpu.memory_space<vmem>>, vector<1x64x32xbf16>
    %70 = vector.shape_cast %69 : vector<1x64x32xbf16> to vector<64x32xbf16>
    %cst_36 = arith.constant dense<0.000000e+00> : vector<16x32xf32>
    %71 = tpu.matmul %68, %70, %cst_36 {dimension_numbers = #tpu.dot_dimension_numbers<[1], [0], [0], [1], [0, 0, 1, 1], [], []>} : vector<16x64xbf16>, vector<64x32xbf16>, vector<16x32xf32> -> vector<16x32xf32>
    %c0_37 = arith.constant 0 : index
    %c0_38 = arith.constant 0 : index
    %c0_39 = arith.constant 0 : index
    %72 = vector.load %arg9[%c0_37, %c0_38, %c0_39] : memref<1x1x32xf32, #tpu.memory_space<vmem>>, vector<1x1x32xf32>
    %73 = vector.shape_cast %72 : vector<1x1x32xf32> to vector<1x32xf32>
    %74 = vector.broadcast %73 : vector<1x32xf32> to vector<16x32xf32>
    %75 = arith.addf %71, %74 : vector<16x32xf32>
    %76 = arith.addf %75, %57 : vector<16x32xf32>
    %c0_40 = arith.constant 0 : index
    %c0_41 = arith.constant 0 : index
    %77 = vector.load %arg14[%c0_40, %c0_41] : memref<16x32xf32, #tpu.memory_space<vmem>>, vector<16x32xf32>
    tpu.vector_store %arg14[%c0_40, %c0_41], %76 {strides = array<i32>} : memref<16x32xf32, #tpu.memory_space<vmem>>, vector<16x32xf32>,
    %c1_i32 = arith.constant 1 : i32
    %78 = arith.cmpi eq, %arg0, %c1_i32 : i32
    %79 = arith.extui %78 : i1 to i32
    %c0_i32_42 = arith.constant 0 : i32
    %80 = arith.cmpi ne, %79, %c0_i32_42 : i32
    scf.if %80 {
      %81 = arith.truncf %76 : vector<16x32xf32> to vector<16x32xbf16>
      %c0_43 = arith.constant 0 : index
      %c0_44 = arith.constant 0 : index
      %82 = vector.load %arg10[%c0_43, %c0_44] : memref<32x128xbf16, #tpu.memory_space<vmem>>, vector<32x128xbf16>
      %cst_45 = arith.constant dense<0.000000e+00> : vector<16x128xf32>
      %83 = tpu.matmul %81, %82, %cst_45 {dimension_numbers = #tpu.dot_dimension_numbers<[1], [0], [0], [1], [0, 0, 1, 1], [], []>} : vector<16x32xbf16>, vector<32x128xbf16>, vector<16x128xf32> -> vector<16x128xf32>
      %c0_46 = arith.constant 0 : index
      %c0_47 = arith.constant 0 : index
      %84 = vector.load %arg11[%c0_46, %c0_47] : memref<1x128xf32, #tpu.memory_space<vmem>>, vector<1x128xf32>
      %85 = vector.broadcast %84 : vector<1x128xf32> to vector<16x128xf32>
      %86 = arith.addf %83, %85 : vector<16x128xf32>
      %cst_48 = arith.constant dense<0xFF800000> : vector<16xf32>
      %87 = vector.multi_reduction <maximumf>, %86, %cst_48 [1] : vector<16x128xf32> to vector<16xf32>
      %88 = vector.shape_cast %87 : vector<16xf32> to vector<16x1xf32>
      %89 = vector.broadcast %88 : vector<16x1xf32> to vector<16x128xf32>
      %90 = arith.subf %86, %89 : vector<16x128xf32>
      %91 = math.exp %90 : vector<16x128xf32>
      %cst_49 = arith.constant dense<0.000000e+00> : vector<16xf32>
      %92 = vector.multi_reduction <add>, %91, %cst_49 [1] : vector<16x128xf32> to vector<16xf32>
      %93 = vector.shape_cast %92 : vector<16xf32> to vector<16x1xf32>
      %94 = math.log %93 : vector<16x1xf32>
      %95 = arith.addf %94, %88 : vector<16x1xf32>
      %96 = vector.broadcast %95 : vector<16x1xf32> to vector<16x128xf32>
      %97 = arith.subf %86, %96 : vector<16x128xf32>
      %c0_50 = arith.constant 0 : index
      %c0_51 = arith.constant 0 : index
      %98 = vector.load %arg13[%c0_50, %c0_51] : memref<16x128xf32, #tpu.memory_space<vmem>>, vector<16x128xf32>
      tpu.vector_store %arg13[%c0_50, %c0_51], %97 {strides = array<i32>} : memref<16x128xf32, #tpu.memory_space<vmem>>, vector<16x128xf32>,
    } else {
    }
    return
  }
  func.func @transform_0(%arg0: i32) -> (i32, i32) {
    %c0_i32 = arith.constant 0 : i32
    %c0_i32_0 = arith.constant 0 : i32
    %c0_i32_1 = arith.constant 0 : i32
    return %c0_i32, %c0_i32_0 : i32, i32
  }
  func.func @transform_1(%arg0: i32) -> (i32, i32, i32) {
    %c0_i32 = arith.constant 0 : i32
    %c0_i32_0 = arith.constant 0 : i32
    %c0_i32_1 = arith.constant 0 : i32
    return %arg0, %c0_i32, %c0_i32_0 : i32, i32, i32
  }
  func.func @transform_2(%arg0: i32) -> (i32, i32, i32) {
    %c0_i32 = arith.constant 0 : i32
    %c0_i32_0 = arith.constant 0 : i32
    %c0_i32_1 = arith.constant 0 : i32
    return %arg0, %c0_i32, %c0_i32_0 : i32, i32, i32
  }
  func.func @transform_3(%arg0: i32) -> (i32, i32, i32) {
    %c0_i32 = arith.constant 0 : i32
    %c0_i32_0 = arith.constant 0 : i32
    %c0_i32_1 = arith.constant 0 : i32
    return %arg0, %c0_i32, %c0_i32_0 : i32, i32, i32
  }
  func.func @transform_4(%arg0: i32) -> (i32, i32, i32) {
    %c0_i32 = arith.constant 0 : i32
    %c0_i32_0 = arith.constant 0 : i32
    %c0_i32_1 = arith.constant 0 : i32
    return %arg0, %c0_i32, %c0_i32_0 : i32, i32, i32
  }
  func.func @transform_5(%arg0: i32) -> (i32, i32, i32) {
    %c0_i32 = arith.constant 0 : i32
    %c0_i32_0 = arith.constant 0 : i32
    %c0_i32_1 = arith.constant 0 : i32
    return %arg0, %c0_i32, %c0_i32_0 : i32, i32, i32
  }
  func.func @transform_6(%arg0: i32) -> (i32, i32, i32) {
    %c0_i32 = arith.constant 0 : i32
    %c0_i32_0 = arith.constant 0 : i32
    %c0_i32_1 = arith.constant 0 : i32
    return %arg0, %c0_i32, %c0_i32_0 : i32, i32, i32
  }
  func.func @transform_7(%arg0: i32) -> (i32, i32, i32) {
    %c0_i32 = arith.constant 0 : i32
    %c0_i32_0 = arith.constant 0 : i32
    %c0_i32_1 = arith.constant 0 : i32
    return %arg0, %c0_i32, %c0_i32_0 : i32, i32, i32
  }
  func.func @transform_8(%arg0: i32) -> (i32, i32, i32) {
    %c0_i32 = arith.constant 0 : i32
    %c0_i32_0 = arith.constant 0 : i32
    %c0_i32_1 = arith.constant 0 : i32
    return %arg0, %c0_i32, %c0_i32_0 : i32, i32, i32
  }
  func.func @transform_9(%arg0: i32) -> (i32, i32) {
    %c0_i32 = arith.constant 0 : i32
    %c0_i32_0 = arith.constant 0 : i32
    %c0_i32_1 = arith.constant 0 : i32
    return %c0_i32, %c0_i32_0 : i32, i32
  }
  func.func @transform_10(%arg0: i32) -> (i32, i32) {
    %c0_i32 = arith.constant 0 : i32
    %c0_i32_0 = arith.constant 0 : i32
    %c0_i32_1 = arith.constant 0 : i32
    return %c0_i32, %c0_i32_0 : i32, i32
  }
  func.func @transform_11(%arg0: i32) -> (i32, i32, i32) {
    %c0_i32 = arith.constant 0 : i32
    %c0_i32_0 = arith.constant 0 : i32
    %c0_i32_1 = arith.constant 0 : i32
    return %arg0, %c0_i32, %c0_i32_0 : i32, i32, i32
  }
  func.func @transform_12(%arg0: i32) -> (i32, i32) {
    %c0_i32 = arith.constant 0 : i32
    %c0_i32_0 = arith.constant 0 : i32
    %c0_i32_1 = arith.constant 0 : i32
    return %c0_i32, %c0_i32_0 : i32, i32
  }
}

</mosaic_0001>

<llo_original>
// kernel: squeeze.2
$region0: #{squeeze.2}
  %s0 = inlined_call_operand.vmem [shape: f32[1,4,256], index: 0, kind: input, shape index: {}]
  %s1 = inlined_call_operand.hbm [shape: f32[4,16,16], index: 1, kind: output, shape index: {}]
  $region1: #{squeeze.2} parent=0
    #allocation0 [shape = 'u8[32768]{0}', space=vmem, size = 0x8000, scoped, tag = 'operand span for operand 1']
    #allocation1 [shape = 's32[1]{0}', space=sflag, size = 0x4, scoped, tag = 'scoped memory for squeeze.2']
    #allocation2 [shape = 'u8[8192]{0}', space=vmem, size = 0x2000, scoped, tag = 'scoped mem for input reshape']
    %2 = vsyncpa [#allocation1], 0
    %s4 = sshll.u32 1, 4
    %s5 = ssub.s32 %s4, 1
    %s6 = scalar_lea.vmem %s0, 4
    %v7 = vld [vmem:[%s6] sm:%s5]
    %s8 = scalar_lea.vmem [#allocation2], 8
    %9 = vst [vmem:[%s8] sm:%s5] %v7
    %v10 = vld [vmem:[%s0] sm:%s5]
    %11 = vst [vmem:[#allocation2] sm:%s5] %v10
    %v12 = vld [vmem:[#allocation2] sm:$0xf]
    %vm13 = vcmask 130048
    %14 = vst.msk [vmem:[#allocation0] ss:$16 sm:$0x3] %vm13, %v12
    %15 = vst.msk [vmem:[#allocation0] ss:$16 sm:$0xc] %vm13, %v12
    %s16 = scalar_lea.vmem [#allocation2], 8
    %v17 = vld [vmem:[%s16] sm:$0xf]
    %vm18 = vcmask 130048
    %s19 = scalar_lea.vmem [#allocation0], 8
    %20 = vst.msk [vmem:[%s19] ss:$16 sm:$0x3] %vm18, %v17
    %s21 = scalar_lea.vmem [#allocation0], 8
    %22 = vst.msk [vmem:[%s21] ss:$16 sm:$0xc] %vm18, %v17
    %v23 = vld.sshfl [vmem:[#allocation2] sm:$0xff pattern:$0xb3a29180]
    %24 = vrot.lane.b32.xlu0 %v23, 112
    %v25 = vpop.permute.xlu0 %24
    %vm26 = vcmask 130048
    %s27 = scalar_lea.vmem [#allocation0], 1
    %28 = vst.msk [vmem:[%s27] ss:$8 sm:$0xf] %vm26, %v25
    %s29 = scalar_lea.vmem [#allocation0], 1
    %30 = vst.msk [vmem:[%s29] ss:$8 sm:$0xf0] %vm26, %v25
    %v31 = vld.sshfl [vmem:[#allocation2] sm:$0xff pattern:$0xb3a29180]
    %32 = vrot.lane.b32.xlu0 %v31, 96
    %v33 = vpop.permute.xlu0 %32
    %vm34 = vcmask 130048
    %s35 = scalar_lea.vmem [#allocation0], 2
    %36 = vst.msk [vmem:[%s35] ss:$8 sm:$0xf] %vm34, %v33
    %s37 = scalar_lea.vmem [#allocation0], 2
    %38 = vst.msk [vmem:[%s37] ss:$8 sm:$0xf0] %vm34, %v33
    %v39 = vld.sshfl [vmem:[#allocation2] sm:$0xff pattern:$0xb3a29180]
    %40 = vrot.lane.b32.xlu0 %v39, 80
    %v41 = vpop.permute.xlu0 %40
    %vm42 = vcmask 130048
    %s43 = scalar_lea.vmem [#allocation0], 3
    %44 = vst.msk [vmem:[%s43] ss:$8 sm:$0xf] %vm42, %v41
    %s45 = scalar_lea.vmem [#allocation0], 3
    %46 = vst.msk [vmem:[%s45] ss:$8 sm:$0xf0] %vm42, %v41
    %v47 = vld.sshfl [vmem:[#allocation2] sm:$0xff pattern:$0xb3a29180]
    %48 = vrot.lane.b32.xlu0 %v47, 64
    %v49 = vpop.permute.xlu0 %48
    %vm50 = vcmask 130048
    %s51 = scalar_lea.vmem [#allocation0], 4
    %52 = vst.msk [vmem:[%s51] ss:$8 sm:$0xf] %vm50, %v49
    %s53 = scalar_lea.vmem [#allocation0], 4
    %54 = vst.msk [vmem:[%s53] ss:$8 sm:$0xf0] %vm50, %v49
    %v55 = vld.sshfl [vmem:[#allocation2] sm:$0xff pattern:$0xb3a29180]
    %56 = vrot.lane.b32.xlu0 %v55, 48
    %v57 = vpop.permute.xlu0 %56
    %vm58 = vcmask 130048
    %s59 = scalar_lea.vmem [#allocation0], 5
    %60 = vst.msk [vmem:[%s59] ss:$8 sm:$0xf] %vm58, %v57
    %s61 = scalar_lea.vmem [#allocation0], 5
    %62 = vst.msk [vmem:[%s61] ss:$8 sm:$0xf0] %vm58, %v57
    %v63 = vld.sshfl [vmem:[#allocation2] sm:$0xff pattern:$0xb3a29180]
    %64 = vrot.lane.b32.xlu0 %v63, 32
    %v65 = vpop.permute.xlu0 %64
    %vm66 = vcmask 130048
    %s67 = scalar_lea.vmem [#allocation0], 6
    %68 = vst.msk [vmem:[%s67] ss:$8 sm:$0xf] %vm66, %v65
    %s69 = scalar_lea.vmem [#allocation0], 6
    %70 = vst.msk [vmem:[%s69] ss:$8 sm:$0xf0] %vm66, %v65
    %v71 = vld.sshfl [vmem:[#allocation2] sm:$0xff pattern:$0xb3a29180]
    %72 = vrot.lane.b32.xlu0 %v71, 16
    %v73 = vpop.permute.xlu0 %72
    %vm74 = vcmask 130048
    %s75 = scalar_lea.vmem [#allocation0], 7
    %76 = vst.msk [vmem:[%s75] ss:$8 sm:$0xf] %vm74, %v73
    %s77 = scalar_lea.vmem [#allocation0], 7
    %78 = vst.msk [vmem:[%s77] ss:$8 sm:$0xf0] %vm74, %v73
    %s80 = ssub.s32 1024, 1024
    %81 = vsyncadd [#allocation1], %s80
    %s83 = sshll.u32 [#allocation0], 4
    %s84 = int_to_ptr.vmem [resolvable:$true] %s83
    %86 = dma.vmem_to_hbm [thread:$0]  %s84, 1024, %s1, [#allocation1]
    %87 = dma.done [#allocation1], 1024
    %88 = vsyncpa [#allocation1], 1

// kernel: transformer_forward.1
$region0: #{transformer_forward.1}
  #allocation0 [shape = 'u32[]', space=smem, size = 0x4, offset = 0x4, fixed_abs, tag = 'smem constant byte address 0x4 - core index']
  #allocation1 [shape = 'u32[144,128]{1,0:T(1,128)}', space=vmem, size = 0x12000, scoped, tag = 'internal scratch']
  #allocation2 [shape = 'f32[16,32]{1,0:T(8,128)}', space=vmem, size = 0x2000, scoped, tag = 'scratch operand']
  #allocation3 [shape = 'f32[16,16]{1,0:T(8,128)}', space=vmem, size = 0x2000, scoped, tag = 'scratch operand']
  %s0 = inlined_call_operand.vmem [shape: f32[16,32], index: 0, kind: input, shape index: {}]
  %s1 = inlined_call_operand.vmem [shape: bf16[2,32,96], index: 1, kind: input, shape index: {}]
  %s2 = inlined_call_operand.vmem [shape: f32[2,1,96], index: 2, kind: input, shape index: {}]
  %s3 = inlined_call_operand.vmem [shape: bf16[2,32,32], index: 3, kind: input, shape index: {}]
  %s4 = inlined_call_operand.vmem [shape: f32[2,1,32], index: 4, kind: input, shape index: {}]
  %s5 = inlined_call_operand.vmem [shape: bf16[2,32,64], index: 5, kind: input, shape index: {}]
  %s6 = inlined_call_operand.vmem [shape: f32[2,1,64], index: 6, kind: input, shape index: {}]
  %s7 = inlined_call_operand.vmem [shape: bf16[2,64,32], index: 7, kind: input, shape index: {}]
  %s8 = inlined_call_operand.vmem [shape: f32[2,1,32], index: 8, kind: input, shape index: {}]
  %s9 = inlined_call_operand.vmem [shape: bf16[32,128], index: 9, kind: input, shape index: {}]
  %s10 = inlined_call_operand.vmem [shape: f32[1,128], index: 10, kind: input, shape index: {}]
  %s11 = inlined_call_operand.vmem [shape: f32[2,4,256], index: 11, kind: output, shape index: {0}]
  %s12 = inlined_call_operand.vmem [shape: f32[16,128], index: 12, kind: output, shape index: {1}]
  %13 = xla_tuple %s11, %s12
  %s14 = sld [smem:[#allocation0]]
  $region93: #{transformer_forward.1} parent=0
    _
  %s16 = ssub.s32 1, %s14
  %s17 = scalar_select 0, %s16, %s14
  loop: start=0, step=1, limit=4
  $region2: #{transformer_forward.1} parent=0 // loop_pre_header
    _
  $region3: #{transformer_forward.1} parent=0 // loop_header
    %s19 = sphi 0, %s23
    %p20 = scmp.ge.s32.totalorder %s19, 4
    %s27 = sphi 0, %s27
    %s29 = sphi 0, %s27
    %s30 = sphi 0, %s29
    %s44 = sphi 0, %s30
    %s50 = sphi 0, %s52
    %s53 = sphi 0, %s50
    %s54 = sphi 0, %s53
    %s70 = sphi 0, %s54
    %s76 = sphi 0, %s78
    %s79 = sphi 0, %s76
    %s80 = sphi 0, %s79
    %s96 = sphi 0, %s80
    %s102 = sphi 0, %s104
    %s105 = sphi 0, %s102
    %s106 = sphi 0, %s105
    %s122 = sphi 0, %s106
    %s128 = sphi 0, %s130
    %s131 = sphi 0, %s128
    %s132 = sphi 0, %s131
    %s148 = sphi 0, %s132
    %s154 = sphi 0, %s156
    %s157 = sphi 0, %s154
    %s158 = sphi 0, %s157
    %s174 = sphi 0, %s158
    %s180 = sphi 0, %s182
    %s183 = sphi 0, %s180
    %s184 = sphi 0, %s183
    %s200 = sphi 0, %s184
    %s206 = sphi 0, %s208
    %s209 = sphi 0, %s206
    %s210 = sphi 0, %s209
    %s226 = sphi 0, %s210
    %s232 = sphi 0, %s234
    %s235 = sphi 0, %s232
    %s236 = sphi 0, %s235
    %s252 = sphi 0, %s236
    %s256 = sphi 0, %s256
    %s258 = sphi 0, %s256
    %s259 = sphi 0, %s258
    %s273 = sphi 0, %s259
    %s277 = sphi 0, %s277
    %s279 = sphi 0, %s277
    %s280 = sphi 0, %s279
    %s294 = sphi 0, %s280
    %s300 = sphi 0, %s302
    %s303 = sphi 0, %s300
    %s304 = sphi 0, %s303
    %s320 = sphi 0, %s304
    %s324 = sphi 0, %s324
    %s326 = sphi 0, %s324
    %s327 = sphi 0, %s326
    %s341 = sphi 0, %s327
  $region4: #{transformer_forward.1} parent=0 // loop_header_branch
    %22 = sbr.rel (%p20) target = $region8
  $region5: #{transformer_forward.1} parent=0 // loop_body
    %s24 = ssub.s32 %s19, 1
    %s25 = ssub.s32 %s19, 2
    %s26 = sadd.s32 %s19, 1
    %s28 = sadd.s32 %s27, 1
    %p31 = scmp.eq.s32.totalorder %s19, 1
    %p32 = scmp.ne.s32.totalorder %s27, %s29
    %p33 = scmp.eq.s32.totalorder %s19, 0
    %p34 = por %p32, %p33
    %p35 = scmp.ne.s32.totalorder %s27, %s29
    %p36 = scmp.eq.s32.totalorder %s24, 1
    %p37 = por %p35, %p36
    %p38 = scmp.ne.s32.totalorder %s29, %s30
    %p39 = scmp.eq.s32.totalorder %s24, 0
    %p40 = por %p38, %p39
    %p41 = scmp.ne.s32.totalorder %s29, %s30
    %p42 = scmp.eq.s32.totalorder %s25, 1
    %p43 = por %p41, %p42
    %p45 = scmp.ne.s32.totalorder %s30, %s44
    %p46 = scmp.eq.s32.totalorder %s25, 0
    %p47 = por %p45, %p46
    %s48 = ssub.s32 %s19, %s26
    %p49 = scmp.eq.s32.totalorder %s48, 0
    %s51 = sadd.s32 %s50, 1
    %s52 = scalar_select %p49, %s50, %s51
    %p55 = pneg %p49
    %p56 = scmp.eq.s32.totalorder %s19, 1
    %p57 = por %p55, %p56
    %p58 = scmp.ne.s32.totalorder %s50, %s53
    %p59 = scmp.eq.s32.totalorder %s19, 0
    %p60 = por %p58, %p59
    %p61 = scmp.ne.s32.totalorder %s50, %s53
    %p62 = scmp.eq.s32.totalorder %s24, 1
    %p63 = por %p61, %p62
    %p64 = scmp.ne.s32.totalorder %s53, %s54
    %p65 = scmp.eq.s32.totalorder %s24, 0
    %p66 = por %p64, %p65
    %p67 = scmp.ne.s32.totalorder %s53, %s54
    %p68 = scmp.eq.s32.totalorder %s25, 1
    %p69 = por %p67, %p68
    %p71 = scmp.ne.s32.totalorder %s54, %s70
    %p72 = scmp.eq.s32.totalorder %s25, 0
    %p73 = por %p71, %p72
    %s74 = ssub.s32 %s19, %s26
    %p75 = scmp.eq.s32.totalorder %s74, 0
    %s77 = sadd.s32 %s76, 1
    %s78 = scalar_select %p75, %s76, %s77
    %p81 = pneg %p75
    %p82 = scmp.eq.s32.totalorder %s19, 1
    %p83 = por %p81, %p82
    %p84 = scmp.ne.s32.totalorder %s76, %s79
    %p85 = scmp.eq.s32.totalorder %s19, 0
    %p86 = por %p84, %p85
    %p87 = scmp.ne.s32.totalorder %s76, %s79
    %p88 = scmp.eq.s32.totalorder %s24, 1
    %p89 = por %p87, %p88
    %p90 = scmp.ne.s32.totalorder %s79, %s80
    %p91 = scmp.eq.s32.totalorder %s24, 0
    %p92 = por %p90, %p91
    %p93 = scmp.ne.s32.totalorder %s79, %s80
    %p94 = scmp.eq.s32.totalorder %s25, 1
    %p95 = por %p93, %p94
    %p97 = scmp.ne.s32.totalorder %s80, %s96
    %p98 = scmp.eq.s32.totalorder %s25, 0
    %p99 = por %p97, %p98
    %s100 = ssub.s32 %s19, %s26
    %p101 = scmp.eq.s32.totalorder %s100, 0
    %s103 = sadd.s32 %s102, 1
    %s104 = scalar_select %p101, %s102, %s103
    %p107 = pneg %p101
    %p108 = scmp.eq.s32.totalorder %s19, 1
    %p109 = por %p107, %p108
    %p110 = scmp.ne.s32.totalorder %s102, %s105
    %p111 = scmp.eq.s32.totalorder %s19, 0
    %p112 = por %p110, %p111
    %p113 = scmp.ne.s32.totalorder %s102, %s105
    %p114 = scmp.eq.s32.totalorder %s24, 1
    %p115 = por %p113, %p114
    %p116 = scmp.ne.s32.totalorder %s105, %s106
    %p117 = scmp.eq.s32.totalorder %s24, 0
    %p118 = por %p116, %p117
    %p119 = scmp.ne.s32.totalorder %s105, %s106
    %p120 = scmp.eq.s32.totalorder %s25, 1
    %p121 = por %p119, %p120
    %p123 = scmp.ne.s32.totalorder %s106, %s122
    %p124 = scmp.eq.s32.totalorder %s25, 0
    %p125 = por %p123, %p124
    %s126 = ssub.s32 %s19, %s26
    %p127 = scmp.eq.s32.totalorder %s126, 0
    %s129 = sadd.s32 %s128, 1
    %s130 = scalar_select %p127, %s128, %s129
    %p133 = pneg %p127
    %p134 = scmp.eq.s32.totalorder %s19, 1
    %p135 = por %p133, %p134
    %p136 = scmp.ne.s32.totalorder %s128, %s131
    %p137 = scmp.eq.s32.totalorder %s19, 0
    %p138 = por %p136, %p137
    %p139 = scmp.ne.s32.totalorder %s128, %s131
    %p140 = scmp.eq.s32.totalorder %s24, 1
    %p141 = por %p139, %p140
    %p142 = scmp.ne.s32.totalorder %s131, %s132
    %p143 = scmp.eq.s32.totalorder %s24, 0
    %p144 = por %p142, %p143
    %p145 = scmp.ne.s32.totalorder %s131, %s132
    %p146 = scmp.eq.s32.totalorder %s25, 1
    %p147 = por %p145, %p146
    %p149 = scmp.ne.s32.totalorder %s132, %s148
    %p150 = scmp.eq.s32.totalorder %s25, 0
    %p151 = por %p149, %p150
    %s152 = ssub.s32 %s19, %s26
    %p153 = scmp.eq.s32.totalorder %s152, 0
    %s155 = sadd.s32 %s154, 1
    %s156 = scalar_select %p153, %s154, %s155
    %p159 = pneg %p153
    %p160 = scmp.eq.s32.totalorder %s19, 1
    %p161 = por %p159, %p160
    %p162 = scmp.ne.s32.totalorder %s154, %s157
    %p163 = scmp.eq.s32.totalorder %s19, 0
    %p164 = por %p162, %p163
    %p165 = scmp.ne.s32.totalorder %s154, %s157
    %p166 = scmp.eq.s32.totalorder %s24, 1
    %p167 = por %p165, %p166
    %p168 = scmp.ne.s32.totalorder %s157, %s158
    %p169 = scmp.eq.s32.totalorder %s24, 0
    %p170 = por %p168, %p169
    %p171 = scmp.ne.s32.totalorder %s157, %s158
    %p172 = scmp.eq.s32.totalorder %s25, 1
    %p173 = por %p171, %p172
    %p175 = scmp.ne.s32.totalorder %s158, %s174
    %p176 = scmp.eq.s32.totalorder %s25, 0
    %p177 = por %p175, %p176
    %s178 = ssub.s32 %s19, %s26
    %p179 = scmp.eq.s32.totalorder %s178, 0
    %s181 = sadd.s32 %s180, 1
    %s182 = scalar_select %p179, %s180, %s181
    %p185 = pneg %p179
    %p186 = scmp.eq.s32.totalorder %s19, 1
    %p187 = por %p185, %p186
    %p188 = scmp.ne.s32.totalorder %s180, %s183
    %p189 = scmp.eq.s32.totalorder %s19, 0
    %p190 = por %p188, %p189
    %p191 = scmp.ne.s32.totalorder %s180, %s183
    %p192 = scmp.eq.s32.totalorder %s24, 1
    %p193 = por %p191, %p192
    %p194 = scmp.ne.s32.totalorder %s183, %s184
    %p195 = scmp.eq.s32.totalorder %s24, 0
    %p196 = por %p194, %p195
    %p197 = scmp.ne.s32.totalorder %s183, %s184
    %p198 = scmp.eq.s32.totalorder %s25, 1
    %p199 = por %p197, %p198
    %p201 = scmp.ne.s32.totalorder %s184, %s200
    %p202 = scmp.eq.s32.totalorder %s25, 0
    %p203 = por %p201, %p202
    %s204 = ssub.s32 %s19, %s26
    %p205 = scmp.eq.s32.totalorder %s204, 0
    %s207 = sadd.s32 %s206, 1
    %s208 = scalar_select %p205, %s206, %s207
    %p211 = pneg %p205
    %p212 = scmp.eq.s32.totalorder %s19, 1
    %p213 = por %p211, %p212
    %p214 = scmp.ne.s32.totalorder %s206, %s209
    %p215 = scmp.eq.s32.totalorder %s19, 0
    %p216 = por %p214, %p215
    %p217 = scmp.ne.s32.totalorder %s206, %s209
    %p218 = scmp.eq.s32.totalorder %s24, 1
    %p219 = por %p217, %p218
    %p220 = scmp.ne.s32.totalorder %s209, %s210
    %p221 = scmp.eq.s32.totalorder %s24, 0
    %p222 = por %p220, %p221
    %p223 = scmp.ne.s32.totalorder %s209, %s210
    %p224 = scmp.eq.s32.totalorder %s25, 1
    %p225 = por %p223, %p224
    %p227 = scmp.ne.s32.totalorder %s210, %s226
    %p228 = scmp.eq.s32.totalorder %s25, 0
    %p229 = por %p227, %p228
    %s230 = ssub.s32 %s19, %s26
    %p231 = scmp.eq.s32.totalorder %s230, 0
    %s233 = sadd.s32 %s232, 1
    %s234 = scalar_select %p231, %s232, %s233
    %p237 = pneg %p231
    %p238 = scmp.eq.s32.totalorder %s19, 1
    %p239 = por %p237, %p238
    %p240 = scmp.ne.s32.totalorder %s232, %s235
    %p241 = scmp.eq.s32.totalorder %s19, 0
    %p242 = por %p240, %p241
    %p243 = scmp.ne.s32.totalorder %s232, %s235
    %p244 = scmp.eq.s32.totalorder %s24, 1
    %p245 = por %p243, %p244
    %p246 = scmp.ne.s32.totalorder %s235, %s236
    %p247 = scmp.eq.s32.totalorder %s24, 0
    %p248 = por %p246, %p247
    %p249 = scmp.ne.s32.totalorder %s235, %s236
    %p250 = scmp.eq.s32.totalorder %s25, 1
    %p251 = por %p249, %p250
    %p253 = scmp.ne.s32.totalorder %s236, %s252
    %p254 = scmp.eq.s32.totalorder %s25, 0
    %p255 = por %p253, %p254
    %s257 = sadd.s32 %s256, 1
    %p260 = scmp.eq.s32.totalorder %s19, 1
    %p261 = scmp.ne.s32.totalorder %s256, %s258
    %p262 = scmp.eq.s32.totalorder %s19, 0
    %p263 = por %p261, %p262
    %p264 = scmp.ne.s32.totalorder %s256, %s258
    %p265 = scmp.eq.s32.totalorder %s24, 1
    %p266 = por %p264, %p265
    %p267 = scmp.ne.s32.totalorder %s258, %s259
    %p268 = scmp.eq.s32.totalorder %s24, 0
    %p269 = por %p267, %p268
    %p270 = scmp.ne.s32.totalorder %s258, %s259
    %p271 = scmp.eq.s32.totalorder %s25, 1
    %p272 = por %p270, %p271
    %p274 = scmp.ne.s32.totalorder %s259, %s273
    %p275 = scmp.eq.s32.totalorder %s25, 0
    %p276 = por %p274, %p275
    %s278 = sadd.s32 %s277, 1
    %p281 = scmp.eq.s32.totalorder %s19, 1
    %p282 = scmp.ne.s32.totalorder %s277, %s279
    %p283 = scmp.eq.s32.totalorder %s19, 0
    %p284 = por %p282, %p283
    %p285 = scmp.ne.s32.totalorder %s277, %s279
    %p286 = scmp.eq.s32.totalorder %s24, 1
    %p287 = por %p285, %p286
    %p288 = scmp.ne.s32.totalorder %s279, %s280
    %p289 = scmp.eq.s32.totalorder %s24, 0
    %p290 = por %p288, %p289
    %p291 = scmp.ne.s32.totalorder %s279, %s280
    %p292 = scmp.eq.s32.totalorder %s25, 1
    %p293 = por %p291, %p292
    %p295 = scmp.ne.s32.totalorder %s280, %s294
    %p296 = scmp.eq.s32.totalorder %s25, 0
    %p297 = por %p295, %p296
    %s298 = ssub.s32 %s19, %s26
    %p299 = scmp.eq.s32.totalorder %s298, 0
    %s301 = sadd.s32 %s300, 1
    %s302 = scalar_select %p299, %s300, %s301
    %p305 = pneg %p299
    %p306 = scmp.eq.s32.totalorder %s19, 1
    %p307 = por %p305, %p306
    %p308 = scmp.ne.s32.totalorder %s300, %s303
    %p309 = scmp.eq.s32.totalorder %s19, 0
    %p310 = por %p308, %p309
    %p311 = scmp.ne.s32.totalorder %s300, %s303
    %p312 = scmp.eq.s32.totalorder %s24, 1
    %p313 = por %p311, %p312
    %p314 = scmp.ne.s32.totalorder %s303, %s304
    %p315 = scmp.eq.s32.totalorder %s24, 0
    %p316 = por %p314, %p315
    %p317 = scmp.ne.s32.totalorder %s303, %s304
    %p318 = scmp.eq.s32.totalorder %s25, 1
    %p319 = por %p317, %p318
    %p321 = scmp.ne.s32.totalorder %s304, %s320
    %p322 = scmp.eq.s32.totalorder %s25, 0
    %p323 = por %p321, %p322
    %s325 = sadd.s32 %s324, 1
    %p328 = scmp.eq.s32.totalorder %s19, 1
    %p329 = scmp.ne.s32.totalorder %s324, %s326
    %p330 = scmp.eq.s32.totalorder %s19, 0
    %p331 = por %p329, %p330
    %p332 = scmp.ne.s32.totalorder %s324, %s326
    %p333 = scmp.eq.s32.totalorder %s24, 1
    %p334 = por %p332, %p333
    %p335 = scmp.ne.s32.totalorder %s326, %s327
    %p336 = scmp.eq.s32.totalorder %s24, 0
    %p337 = por %p335, %p336
    %p338 = scmp.ne.s32.totalorder %s326, %s327
    %p339 = scmp.eq.s32.totalorder %s25, 1
    %p340 = por %p338, %p339
    %p342 = scmp.ne.s32.totalorder %s327, %s341
    %p343 = scmp.eq.s32.totalorder %s25, 0
    %p344 = por %p342, %p343
    %p345 = scmp.le.s32.totalorder 1, %s19
    %p346 = scmp.lt.s32.totalorder %s19, 3
    %p347 = pnand %p345, %p346
    %p348 = pneg %p347
    // Predicated region
    $region9: #{transformer_forward.1} parent=5 // pred_check
      _
    $region10: #{transformer_forward.1} parent=5 // pred_check_branch
      %350 = sbr.rel (%p347) target = $region12
    $region11: #{transformer_forward.1} parent=5 // pred_region
      %s351 = ssub.s32 %s19, 1
      // Predicated region
      $region13: #{transformer_forward.1} parent=11 // pred_check
        %p352 = pneg %p40
      $region14: #{transformer_forward.1} parent=11 // pred_check_branch
        %354 = sbr.rel (%p352) target = $region16
      $region15: #{transformer_forward.1} parent=11 // pred_region
        _
      $region16: #{transformer_forward.1} parent=11 // pred_fallthru
        _
      // Predicated region
      $region17: #{transformer_forward.1} parent=11 // pred_check
        %p355 = pneg %p269
      $region18: #{transformer_forward.1} parent=11 // pred_check_branch
        %357 = sbr.rel (%p355) target = $region20
      $region19: #{transformer_forward.1} parent=11 // pred_region
        _
      $region20: #{transformer_forward.1} parent=11 // pred_fallthru
        _
      // Predicated region
      $region21: #{transformer_forward.1} parent=11 // pred_check
        %p358 = pneg %p290
      $region22: #{transformer_forward.1} parent=11 // pred_check_branch
        %360 = sbr.rel (%p358) target = $region24
      $region23: #{transformer_forward.1} parent=11 // pred_region
        _
      $region24: #{transformer_forward.1} parent=11 // pred_fallthru
        _
    $region12: #{transformer_forward.1} parent=5 // pred_fallthru
      _
    %p361 = scmp.lt.s32.totalorder %s19, 2
    // Predicated region
    $region25: #{transformer_forward.1} parent=5 // pred_check
      %p362 = pneg %p361
    $region26: #{transformer_forward.1} parent=5 // pred_check_branch
      %364 = sbr.rel (%p362) target = $region28
    $region27: #{transformer_forward.1} parent=5 // pred_region
      // Predicated region
      $region29: #{transformer_forward.1} parent=27 // pred_check
        %p365 = pneg %p60
      $region30: #{transformer_forward.1} parent=27 // pred_check_branch
        %367 = sbr.rel (%p365) target = $region32
      $region31: #{transformer_forward.1} parent=27 // pred_region
        %p368 = scmp.lt.s32.totalorder %s19, 1
        %s369 = scalar_select %p368, %s19, 1
        %s370 = smul.addr %s369, 4
        %s371 = smul.addr %s370, 4
        %s372 = scalar_lea.vmem %s1, %s371
      $region32: #{transformer_forward.1} parent=27 // pred_fallthru
        _
      // Predicated region
      $region33: #{transformer_forward.1} parent=27 // pred_check
        %p373 = pneg %p86
      $region34: #{transformer_forward.1} parent=27 // pred_check_branch
        %375 = sbr.rel (%p373) target = $region36
      $region35: #{transformer_forward.1} parent=27 // pred_region
        %p376 = scmp.lt.s32.totalorder %s19, 1
        %s377 = scalar_select %p376, %s19, 1
        %s378 = scalar_lea.vmem %s2, %s377
      $region36: #{transformer_forward.1} parent=27 // pred_fallthru
        _
      // Predicated region
      $region37: #{transformer_forward.1} parent=27 // pred_check
        %p379 = pneg %p112
      $region38: #{transformer_forward.1} parent=27 // pred_check_branch
        %381 = sbr.rel (%p379) target = $region40
      $region39: #{transformer_forward.1} parent=27 // pred_region
        %p382 = scmp.lt.s32.totalorder %s19, 1
        %s383 = scalar_select %p382, %s19, 1
        %s384 = smul.addr %s383, 4
        %s385 = smul.addr %s384, 4
        %s386 = scalar_lea.vmem %s3, %s385
      $region40: #{transformer_forward.1} parent=27 // pred_fallthru
        _
      // Predicated region
      $region41: #{transformer_forward.1} parent=27 // pred_check
        %p387 = pneg %p138
      $region42: #{transformer_forward.1} parent=27 // pred_check_branch
        %389 = sbr.rel (%p387) target = $region44
      $region43: #{transformer_forward.1} parent=27 // pred_region
        %p390 = scmp.lt.s32.totalorder %s19, 1
        %s391 = scalar_select %p390, %s19, 1
        %s392 = scalar_lea.vmem %s4, %s391
      $region44: #{transformer_forward.1} parent=27 // pred_fallthru
        _
      // Predicated region
      $region45: #{transformer_forward.1} parent=27 // pred_check
        %p393 = pneg %p164
      $region46: #{transformer_forward.1} parent=27 // pred_check_branch
        %395 = sbr.rel (%p393) target = $region48
      $region47: #{transformer_forward.1} parent=27 // pred_region
        %p396 = scmp.lt.s32.totalorder %s19, 1
        %s397 = scalar_select %p396, %s19, 1
        %s398 = smul.addr %s397, 4
        %s399 = smul.addr %s398, 4
        %s400 = scalar_lea.vmem %s5, %s399
      $region48: #{transformer_forward.1} parent=27 // pred_fallthru
        _
      // Predicated region
      $region49: #{transformer_forward.1} parent=27 // pred_check
        %p401 = pneg %p190
      $region50: #{transformer_forward.1} parent=27 // pred_check_branch
        %403 = sbr.rel (%p401) target = $region52
      $region51: #{transformer_forward.1} parent=27 // pred_region
        %p404 = scmp.lt.s32.totalorder %s19, 1
        %s405 = scalar_select %p404, %s19, 1
        %s406 = scalar_lea.vmem %s6, %s405
      $region52: #{transformer_forward.1} parent=27 // pred_fallthru
        _
      // Predicated region
      $region53: #{transformer_forward.1} parent=27 // pred_check
        %p407 = pneg %p216
      $region54: #{transformer_forward.1} parent=27 // pred_check_branch
        %409 = sbr.rel (%p407) target = $region56
      $region55: #{transformer_forward.1} parent=27 // pred_region
        %p410 = scmp.lt.s32.totalorder %s19, 1
        %s411 = scalar_select %p410, %s19, 1
        %s412 = smul.addr %s411, 8
        %s413 = smul.addr %s412, 4
        %s414 = scalar_lea.vmem %s7, %s413
      $region56: #{transformer_forward.1} parent=27 // pred_fallthru
        _
      // Predicated region
      $region57: #{transformer_forward.1} parent=27 // pred_check
        %p415 = pneg %p242
      $region58: #{transformer_forward.1} parent=27 // pred_check_branch
        %417 = sbr.rel (%p415) target = $region60
      $region59: #{transformer_forward.1} parent=27 // pred_region
        %p418 = scmp.lt.s32.totalorder %s19, 1
        %s419 = scalar_select %p418, %s19, 1
        %s420 = scalar_lea.vmem %s8, %s419
      $region60: #{transformer_forward.1} parent=27 // pred_fallthru
        _
    $region28: #{transformer_forward.1} parent=5 // pred_fallthru
      _
    %p421 = scmp.le.s32.totalorder 1, %s19
    %p422 = scmp.lt.s32.totalorder %s19, 3
    %p423 = pnand %p421, %p422
    %p424 = pneg %p423
    // Predicated region
    $region61: #{transformer_forward.1} parent=5 // pred_check
      _
    $region62: #{transformer_forward.1} parent=5 // pred_check_branch
      %426 = sbr.rel (%p423) target = $region64
    $region63: #{transformer_forward.1} parent=5 // pred_region
      %s427 = ssub.s32 %s19, 1
      %p428 = pneg %p40
      %p429 = pneg %p37
      %p430 = scmp.lt.s32.totalorder %s24, 1
      %s431 = scalar_select %p430, %s24, 1
      %s432 = smul.addr %s431, 4
      %s433 = smul.addr %s432, 4
      %s434 = scalar_lea.vmem %s1, %s433
      %p435 = pneg %p66
      %p436 = pneg %p63
      %p437 = scmp.lt.s32.totalorder %s24, 1
      %s438 = scalar_select %p437, %s24, 1
      %s439 = scalar_lea.vmem %s2, %s438
      %p440 = pneg %p92
      %p441 = pneg %p89
      %p442 = scmp.lt.s32.totalorder %s24, 1
      %s443 = scalar_select %p442, %s24, 1
      %s444 = smul.addr %s443, 4
      %s445 = smul.addr %s444, 4
      %s446 = scalar_lea.vmem %s3, %s445
      %p447 = pneg %p118
      %p448 = pneg %p115
      %p449 = scmp.lt.s32.totalorder %s24, 1
      %s450 = scalar_select %p449, %s24, 1
      %s451 = scalar_lea.vmem %s4, %s450
      %p452 = pneg %p144
      %p453 = pneg %p141
      %p454 = scmp.lt.s32.totalorder %s24, 1
      %s455 = scalar_select %p454, %s24, 1
      %s456 = smul.addr %s455, 4
      %s457 = smul.addr %s456, 4
      %s458 = scalar_lea.vmem %s5, %s457
      %p459 = pneg %p170
      %p460 = pneg %p167
      %p461 = scmp.lt.s32.totalorder %s24, 1
      %s462 = scalar_select %p461, %s24, 1
      %s463 = scalar_lea.vmem %s6, %s462
      %p464 = pneg %p196
      %p465 = pneg %p193
      %p466 = scmp.lt.s32.totalorder %s24, 1
      %s467 = scalar_select %p466, %s24, 1
      %s468 = smul.addr %s467, 8
      %s469 = smul.addr %s468, 4
      %s470 = scalar_lea.vmem %s7, %s469
      %p471 = pneg %p222
      %p472 = pneg %p219
      %p473 = scmp.lt.s32.totalorder %s24, 1
      %s474 = scalar_select %p473, %s24, 1
      %s475 = scalar_lea.vmem %s8, %s474
      %p476 = pneg %p248
      %p477 = pneg %p245
      %p478 = pneg %p269
      %p479 = pneg %p266
      %p480 = pneg %p290
      %p481 = pneg %p287
      %p482 = pneg %p316
      %p483 = pneg %p313
      %p484 = scmp.lt.s32.totalorder %s24, 1
      %s485 = scalar_select %p484, %s24, 1
      %s486 = smul.addr %s485, 2
      %s487 = smul.addr %s486, 4
      %s488 = scalar_lea.vmem %s11, %s487
      %p489 = pneg %p337
      %p490 = pneg %p334
      %p491 = scmp.lt.s32.totalorder %s24, 1
      %s492 = scalar_select %p491, %s24, 1
      %s493 = smul.addr %s492, 4
      %s494 = smul.addr %s493, 4
      %s495 = scalar_lea.vmem %s1, %s494
      %p496 = scmp.lt.s32.totalorder %s24, 1
      %s497 = scalar_select %p496, %s24, 1
      %s498 = scalar_lea.vmem %s2, %s497
      %p499 = scmp.lt.s32.totalorder %s24, 1
      %s500 = scalar_select %p499, %s24, 1
      %s501 = smul.addr %s500, 4
      %s502 = smul.addr %s501, 4
      %s503 = scalar_lea.vmem %s3, %s502
      %p504 = scmp.lt.s32.totalorder %s24, 1
      %s505 = scalar_select %p504, %s24, 1
      %s506 = scalar_lea.vmem %s4, %s505
      %p507 = scmp.lt.s32.totalorder %s24, 1
      %s508 = scalar_select %p507, %s24, 1
      %s509 = smul.addr %s508, 4
      %s510 = smul.addr %s509, 4
      %s511 = scalar_lea.vmem %s5, %s510
      %p512 = scmp.lt.s32.totalorder %s24, 1
      %s513 = scalar_select %p512, %s24, 1
      %s514 = scalar_lea.vmem %s6, %s513
      %p515 = scmp.lt.s32.totalorder %s24, 1
      %s516 = scalar_select %p515, %s24, 1
      %s517 = smul.addr %s516, 8
      %s518 = smul.addr %s517, 4
      %s519 = scalar_lea.vmem %s7, %s518
      %p520 = scmp.lt.s32.totalorder %s24, 1
      %s521 = scalar_select %p520, %s24, 1
      %s522 = scalar_lea.vmem %s8, %s521
      %p523 = scmp.lt.s32.totalorder %s24, 1
      %s524 = scalar_select %p523, %s24, 1
      %s525 = smul.addr %s524, 2
      %s526 = smul.addr %s525, 4
      %s527 = scalar_lea.vmem %s11, %s526
      %p529 = scmp.eq.s32.totalorder %s24, 0
      // Predicated region
      $region65: #{transformer_forward.1} parent=63 // pred_check
        %p530 = pneg %p529
      $region66: #{transformer_forward.1} parent=63 // pred_check_branch
        %532 = sbr.rel (%p530) target = $region68
      $region67: #{transformer_forward.1} parent=63 // pred_region
        %v533 = vld [vmem:[%s0] sm:$0xff]
        %v534 = vld [vmem:[%s0 + $0x8] sm:$0xff]
        %vm535 = vcmask 261120
        %536 = vst.msk [vmem:[#allocation2] sm:$0xff] %vm535, %v533
        %537 = vst.msk [vmem:[#allocation2 + $0x8] sm:$0xff] %vm535, %v534
        %v538 = vlaneseq
        %v539 = vshrl.u32 %v538, 7
        %v540 = vadd.s32 %v539, 8
        %v541 = vlaneseq
        %v542 = vand.u32 %v541, 127
        %vm543 = vcmp.gt.s32.totalorder %v542, %v539
        %vm544 = vcmp.gt.s32.totalorder %v542, %v540
        %v545 = vsel %vm543, -1e+30, 0.0
        %v546 = vsel %vm544, -1e+30, 0.0
        %vm547 = vcmask 130048
        %548 = vst.msk [vmem:[#allocation3] sm:$0xff] %vm547, %v545
        %549 = vst.msk [vmem:[#allocation3 + $0x8] sm:$0xff] %vm547, %v546
      $region68: #{transformer_forward.1} parent=63 // pred_fallthru
        _
      %v550 = vld [vmem:[#allocation2] sm:$0xff]
      %v551 = vld [vmem:[#allocation2 + $0x8] sm:$0xff]
      %v552 = vpack.c.bf16 %v551, %v550
      %v553 = vld [vmem:[%s495] sm:$0xf]
      %v554 = vld [vmem:[%s495 + $0x4] sm:$0xf]
      %v555 = vld [vmem:[%s495 + $0x8] sm:$0xf]
      %v556 = vld [vmem:[%s495 + $0xc] sm:$0xf]
      %v557 = vld [vmem:[%s498] sm:$0x1]
      %v559 = vlaneseq
      %v560 = vshrl.u32 %v559, 7
      %v561 = vsub.s32 0, %v560
      %v562 = vrot.slane %v557, %v561
      %v568 = vunpack.c.l.b16 %v553
      %v569 = vunpack.c.l.b16 %v554
      %v570 = vunpack.c.l.b16 %v555
      %v571 = vunpack.c.l.b16 %v556
      %v572 = vpack.c.b16 %v569, %v568
      %v573 = vpack.c.b16 %v571, %v570
      %vm576 = vcmask 261120
      %v578 = vsel %vm576, %v552, 0
      %580 = vmatprep.subr.bf16.mxu0 0
      %581 = vmatpush1.bf16.msra.mxu0 0
      %582 = vmatprep.subr.bf16.mxu0 0
      %583 = vmatpush1.bf16.msra.mxu0 0
      %584 = vmatprep.subr.bf16.mxu0 0
      %585 = vmatpush1.bf16.msra.mxu0 0
      %586 = vmatprep.subr.bf16.mxu0 0
      %587 = vmatpush1.bf16.msra.mxu0 0
      %588 = vmatprep.subr.bf16.mxu0 0
      %589 = vmatpush1.bf16.msra.mxu0 0
      %590 = vmatprep.subr.bf16.mxu0 0
      %591 = vmatpush1.bf16.msra.mxu0 0
      %592 = vmatprep.subr.bf16.mxu0 0
      %593 = vmatpush1.bf16.msra.mxu0 %v573
      %594 = vmatprep.subr.bf16.mxu0 0
      %595 = vmatpush1.bf16.msra.mxu0 %v572
      %596 = vmatprep.subr.bf16.mxu0 0
      %597 = vmatpush2.bf16.msra.mxu0 0
      %598 = vmatprep.subr.bf16.mxu0 0
      %599 = vmatpush2.bf16.msra.mxu0 0
      %600 = vmatprep.subr.bf16.mxu0 0
      %601 = vmatpush2.bf16.msra.mxu0 0
      %602 = vmatprep.subr.bf16.mxu0 0
      %603 = vmatpush2.bf16.msra.mxu0 0
      %604 = vmatprep.subr.bf16.mxu0 0
      %605 = vmatpush2.bf16.msra.mxu0 0
      %606 = vmatprep.subr.bf16.mxu0 0
      %607 = vmatpush2.bf16.msra.mxu0 0
      %608 = vmatprep.subr.bf16.mxu0 0
      %609 = vmatpush2.bf16.msra.mxu0 0
      %610 = vmatprep.subr.bf16.mxu0 0
      %611 = vmatpush2.bf16.msra.mxu0 0
      %612 = vmatprep.mubr.bf16.mxu0 0
      %613 = vmatmul.mubr.bf16.gmra.mxu0 %v578
      %v614 = vpop.f32.mrf.mxu0
      %v615 = vadd.f32 %v562, %v614
      %v616 = vpop.f32.mrf.mxu0
      %v617 = vpop.f32.mrf.mxu0
      %v618 = vadd.f32 %v562, %v617
      %v619 = vpop.f32.mrf.mxu0
      %620 = vdwg.mxu0
      %623 = vrot.lane.b32.xlu0 %v615, 120
      %v624 = vpop.permute.xlu0 %623
      %625 = vrot.lane.b32.xlu0 %v618, 120
      %v626 = vpop.permute.xlu0 %625
      %629 = vrot.lane.b32.xlu0 %v615, 112
      %v630 = vpop.permute.xlu0 %629
      %631 = vrot.lane.b32.xlu0 %v618, 112
      %v632 = vpop.permute.xlu0 %631
      %635 = vrot.lane.b32.xlu0 %v615, 104
      %v636 = vpop.permute.xlu0 %635
      %637 = vrot.lane.b32.xlu0 %v618, 104
      %v638 = vpop.permute.xlu0 %637
      %v641 = vcombine.low %v615, %v630
      %v642 = vcombine.high %v615, %v630
      %v644 = vunpack.c.l.s4 1983009808
      %v645 = vunpack.c.0.s8 %v644
      %v646 = vlaneseq
      %v647 = vshrl.u32 %v646, 7
      %v648 = vsub.s32 %v645, %v647
      %v649 = vrot.slane %v641, %v648
      %v651 = vunpack.c.l.s4 1983009808
      %v652 = vunpack.c.0.s8 %v651
      %v653 = vlaneseq
      %v654 = vshrl.u32 %v653, 7
      %v655 = vsub.s32 %v652, %v654
      %v656 = vrot.slane %v642, %v655
      %v657 = vcombine.low %v624, %v636
      %v658 = vcombine.high %v624, %v636
      %v660 = vunpack.c.l.s4 1983009808
      %v661 = vunpack.c.0.s8 %v660
      %v662 = vlaneseq
      %v663 = vshrl.u32 %v662, 7
      %v664 = vsub.s32 %v661, %v663
      %v665 = vrot.slane %v657, %v664
      %v667 = vunpack.c.l.s4 1983009808
      %v668 = vunpack.c.0.s8 %v667
      %v669 = vlaneseq
      %v670 = vshrl.u32 %v669, 7
      %v671 = vsub.s32 %v668, %v670
      %v672 = vrot.slane %v658, %v671
      %v673 = vcombine.low %v649, %v665
      %v674 = vcombine.high %v649, %v665
      %v676 = vunpack.c.l.s4 1934713408
      %v677 = vunpack.c.0.s8 %v676
      %v678 = vlaneseq
      %v679 = vshrl.u32 %v678, 7
      %v680 = vsub.s32 %v677, %v679
      %v681 = vrot.slane %v673, %v680
      %v683 = vunpack.c.l.s4 1934713408
      %v684 = vunpack.c.0.s8 %v683
      %v685 = vlaneseq
      %v686 = vshrl.u32 %v685, 7
      %v687 = vsub.s32 %v684, %v686
      %v688 = vrot.slane %v674, %v687
      %v689 = vcombine.low %v656, %v672
      %v690 = vcombine.high %v656, %v672
      %v692 = vunpack.c.l.s4 1934713408
      %v693 = vunpack.c.0.s8 %v692
      %v694 = vlaneseq
      %v695 = vshrl.u32 %v694, 7
      %v696 = vsub.s32 %v693, %v695
      %v697 = vrot.slane %v689, %v696
      %v699 = vunpack.c.l.s4 1934713408
      %v700 = vunpack.c.0.s8 %v699
      %v701 = vlaneseq
      %v702 = vshrl.u32 %v701, 7
      %v703 = vsub.s32 %v700, %v702
      %v704 = vrot.slane %v690, %v703
      %v705 = vcombine.high %v681, 0.0
      %v706 = vcombine.high %v688, 0.0
      %v707 = vcombine.high %v697, 0.0
      %v708 = vcombine.high %v704, 0.0
      %v709 = vcombine.low %v618, %v632
      %v710 = vcombine.high %v618, %v632
      %v712 = vunpack.c.l.s4 1983009808
      %v713 = vunpack.c.0.s8 %v712
      %v714 = vlaneseq
      %v715 = vshrl.u32 %v714, 7
      %v716 = vsub.s32 %v713, %v715
      %v717 = vrot.slane %v709, %v716
      %v719 = vunpack.c.l.s4 1983009808
      %v720 = vunpack.c.0.s8 %v719
      %v721 = vlaneseq
      %v722 = vshrl.u32 %v721, 7
      %v723 = vsub.s32 %v720, %v722
      %v724 = vrot.slane %v710, %v723
      %v725 = vcombine.low %v626, %v638
      %v726 = vcombine.high %v626, %v638
      %v728 = vunpack.c.l.s4 1983009808
      %v729 = vunpack.c.0.s8 %v728
      %v730 = vlaneseq
      %v731 = vshrl.u32 %v730, 7
      %v732 = vsub.s32 %v729, %v731
      %v733 = vrot.slane %v725, %v732
      %v735 = vunpack.c.l.s4 1983009808
      %v736 = vunpack.c.0.s8 %v735
      %v737 = vlaneseq
      %v738 = vshrl.u32 %v737, 7
      %v739 = vsub.s32 %v736, %v738
      %v740 = vrot.slane %v726, %v739
      %v741 = vcombine.low %v717, %v733
      %v742 = vcombine.high %v717, %v733
      %v744 = vunpack.c.l.s4 1934713408
      %v745 = vunpack.c.0.s8 %v744
      %v746 = vlaneseq
      %v747 = vshrl.u32 %v746, 7
      %v748 = vsub.s32 %v745, %v747
      %v749 = vrot.slane %v741, %v748
      %v751 = vunpack.c.l.s4 1934713408
      %v752 = vunpack.c.0.s8 %v751
      %v753 = vlaneseq
      %v754 = vshrl.u32 %v753, 7
      %v755 = vsub.s32 %v752, %v754
      %v756 = vrot.slane %v742, %v755
      %v757 = vcombine.low %v724, %v740
      %v758 = vcombine.high %v724, %v740
      %v760 = vunpack.c.l.s4 1934713408
      %v761 = vunpack.c.0.s8 %v760
      %v762 = vlaneseq
      %v763 = vshrl.u32 %v762, 7
      %v764 = vsub.s32 %v761, %v763
      %v765 = vrot.slane %v757, %v764
      %v767 = vunpack.c.l.s4 1934713408
      %v768 = vunpack.c.0.s8 %v767
      %v769 = vlaneseq
      %v770 = vshrl.u32 %v769, 7
      %v771 = vsub.s32 %v768, %v770
      %v772 = vrot.slane %v758, %v771
      %v773 = vcombine.high %v749, 0.0
      %v774 = vcombine.high %v756, 0.0
      %v775 = vcombine.high %v765, 0.0
      %v776 = vcombine.high %v772, 0.0
      %v777 = vcombine.low %v681, %v688
      %v779 = vunpack.c.l.s4 1983009808
      %v780 = vunpack.c.0.s8 %v779
      %v781 = vlaneseq
      %v782 = vshrl.u32 %v781, 7
      %v783 = vsub.s32 %v780, %v782
      %v784 = vrot.slane %v777, %v783
      %v785 = vcombine.low %v705, %v706
      %v787 = vunpack.c.l.s4 1983009808
      %v788 = vunpack.c.0.s8 %v787
      %v789 = vlaneseq
      %v790 = vshrl.u32 %v789, 7
      %v791 = vsub.s32 %v788, %v790
      %v792 = vrot.slane %v785, %v791
      %v793 = vcombine.low %v697, %v704
      %v795 = vunpack.c.l.s4 1983009808
      %v796 = vunpack.c.0.s8 %v795
      %v797 = vlaneseq
      %v798 = vshrl.u32 %v797, 7
      %v799 = vsub.s32 %v796, %v798
      %v800 = vrot.slane %v793, %v799
      %v801 = vcombine.low %v707, %v708
      %v803 = vunpack.c.l.s4 1983009808
      %v804 = vunpack.c.0.s8 %v803
      %v805 = vlaneseq
      %v806 = vshrl.u32 %v805, 7
      %v807 = vsub.s32 %v804, %v806
      %v808 = vrot.slane %v801, %v807
      %v809 = vcombine.low %v784, %v792
      %v810 = vcombine.high %v784, %v792
      %v812 = vunpack.c.l.s4 1934713408
      %v813 = vunpack.c.0.s8 %v812
      %v814 = vlaneseq
      %v815 = vshrl.u32 %v814, 7
      %v816 = vsub.s32 %v813, %v815
      %v817 = vrot.slane %v809, %v816
      %v819 = vunpack.c.l.s4 1934713408
      %v820 = vunpack.c.0.s8 %v819
      %v821 = vlaneseq
      %v822 = vshrl.u32 %v821, 7
      %v823 = vsub.s32 %v820, %v822
      %v824 = vrot.slane %v810, %v823
      %v825 = vcombine.low %v800, %v808
      %v826 = vcombine.high %v800, %v808
      %v828 = vunpack.c.l.s4 1934713408
      %v829 = vunpack.c.0.s8 %v828
      %v830 = vlaneseq
      %v831 = vshrl.u32 %v830, 7
      %v832 = vsub.s32 %v829, %v831
      %v833 = vrot.slane %v825, %v832
      %v835 = vunpack.c.l.s4 1934713408
      %v836 = vunpack.c.0.s8 %v835
      %v837 = vlaneseq
      %v838 = vshrl.u32 %v837, 7
      %v839 = vsub.s32 %v836, %v838
      %v840 = vrot.slane %v826, %v839
      %v841 = vcombine.low %v817, %v833
      %v842 = vcombine.high %v817, %v833
      %v843 = vcombine.low %v824, %v840
      %v844 = vcombine.high %v824, %v840
      %v845 = vcombine.low %v749, %v756
      %v847 = vunpack.c.l.s4 1983009808
      %v848 = vunpack.c.0.s8 %v847
      %v849 = vlaneseq
      %v850 = vshrl.u32 %v849, 7
      %v851 = vsub.s32 %v848, %v850
      %v852 = vrot.slane %v845, %v851
      %v853 = vcombine.low %v773, %v774
      %v855 = vunpack.c.l.s4 1983009808
      %v856 = vunpack.c.0.s8 %v855
      %v857 = vlaneseq
      %v858 = vshrl.u32 %v857, 7
      %v859 = vsub.s32 %v856, %v858
      %v860 = vrot.slane %v853, %v859
      %v861 = vcombine.low %v765, %v772
      %v863 = vunpack.c.l.s4 1983009808
      %v864 = vunpack.c.0.s8 %v863
      %v865 = vlaneseq
      %v866 = vshrl.u32 %v865, 7
      %v867 = vsub.s32 %v864, %v866
      %v868 = vrot.slane %v861, %v867
      %v869 = vcombine.low %v775, %v776
      %v871 = vunpack.c.l.s4 1983009808
      %v872 = vunpack.c.0.s8 %v871
      %v873 = vlaneseq
      %v874 = vshrl.u32 %v873, 7
      %v875 = vsub.s32 %v872, %v874
      %v876 = vrot.slane %v869, %v875
      %v877 = vcombine.low %v852, %v860
      %v878 = vcombine.high %v852, %v860
      %v880 = vunpack.c.l.s4 1934713408
      %v881 = vunpack.c.0.s8 %v880
      %v882 = vlaneseq
      %v883 = vshrl.u32 %v882, 7
      %v884 = vsub.s32 %v881, %v883
      %v885 = vrot.slane %v877, %v884
      %v887 = vunpack.c.l.s4 1934713408
      %v888 = vunpack.c.0.s8 %v887
      %v889 = vlaneseq
      %v890 = vshrl.u32 %v889, 7
      %v891 = vsub.s32 %v888, %v890
      %v892 = vrot.slane %v878, %v891
      %v893 = vcombine.low %v868, %v876
      %v894 = vcombine.high %v868, %v876
      %v896 = vunpack.c.l.s4 1934713408
      %v897 = vunpack.c.0.s8 %v896
      %v898 = vlaneseq
      %v899 = vshrl.u32 %v898, 7
      %v900 = vsub.s32 %v897, %v899
      %v901 = vrot.slane %v893, %v900
      %v903 = vunpack.c.l.s4 1934713408
      %v904 = vunpack.c.0.s8 %v903
      %v905 = vlaneseq
      %v906 = vshrl.u32 %v905, 7
      %v907 = vsub.s32 %v904, %v906
      %v908 = vrot.slane %v894, %v907
      %v909 = vcombine.low %v885, %v901
      %v910 = vcombine.high %v885, %v901
      %v911 = vcombine.low %v892, %v908
      %v912 = vcombine.high %v892, %v908
      %913 = vrot.lane.b32.xlu0 %v615, 96
      %v914 = vpop.permute.xlu0 %913
      %915 = vrot.lane.b32.xlu0 %v618, 96
      %v916 = vpop.permute.xlu0 %915
      %917 = vrot.lane.b32.xlu0 %v624, 96
      %v918 = vpop.permute.xlu0 %917
      %919 = vrot.lane.b32.xlu0 %v626, 96
      %v920 = vpop.permute.xlu0 %919
      %921 = vrot.lane.b32.xlu0 %v630, 96
      %v922 = vpop.permute.xlu0 %921
      %923 = vrot.lane.b32.xlu0 %v632, 96
      %v924 = vpop.permute.xlu0 %923
      %925 = vrot.lane.b32.xlu0 %v636, 96
      %v926 = vpop.permute.xlu0 %925
      %927 = vrot.lane.b32.xlu0 %v638, 96
      %v928 = vpop.permute.xlu0 %927
      %v937 = vcombine.low %v914, %v922
      %v938 = vcombine.high %v914, %v922
      %v940 = vunpack.c.l.s4 1983009808
      %v941 = vunpack.c.0.s8 %v940
      %v942 = vlaneseq
      %v943 = vshrl.u32 %v942, 7
      %v944 = vsub.s32 %v941, %v943
      %v945 = vrot.slane %v937, %v944
      %v947 = vunpack.c.l.s4 1983009808
      %v948 = vunpack.c.0.s8 %v947
      %v949 = vlaneseq
      %v950 = vshrl.u32 %v949, 7
      %v951 = vsub.s32 %v948, %v950
      %v952 = vrot.slane %v938, %v951
      %v953 = vcombine.low %v918, %v926
      %v954 = vcombine.high %v918, %v926
      %v956 = vunpack.c.l.s4 1983009808
      %v957 = vunpack.c.0.s8 %v956
      %v958 = vlaneseq
      %v959 = vshrl.u32 %v958, 7
      %v960 = vsub.s32 %v957, %v959
      %v961 = vrot.slane %v953, %v960
      %v963 = vunpack.c.l.s4 1983009808
      %v964 = vunpack.c.0.s8 %v963
      %v965 = vlaneseq
      %v966 = vshrl.u32 %v965, 7
      %v967 = vsub.s32 %v964, %v966
      %v968 = vrot.slane %v954, %v967
      %v969 = vcombine.low %v945, %v961
      %v970 = vcombine.high %v945, %v961
      %v972 = vunpack.c.l.s4 1934713408
      %v973 = vunpack.c.0.s8 %v972
      %v974 = vlaneseq
      %v975 = vshrl.u32 %v974, 7
      %v976 = vsub.s32 %v973, %v975
      %v977 = vrot.slane %v969, %v976
      %v979 = vunpack.c.l.s4 1934713408
      %v980 = vunpack.c.0.s8 %v979
      %v981 = vlaneseq
      %v982 = vshrl.u32 %v981, 7
      %v983 = vsub.s32 %v980, %v982
      %v984 = vrot.slane %v970, %v983
      %v985 = vcombine.low %v952, %v968
      %v986 = vcombine.high %v952, %v968
      %v988 = vunpack.c.l.s4 1934713408
      %v989 = vunpack.c.0.s8 %v988
      %v990 = vlaneseq
      %v991 = vshrl.u32 %v990, 7
      %v992 = vsub.s32 %v989, %v991
      %v993 = vrot.slane %v985, %v992
      %v995 = vunpack.c.l.s4 1934713408
      %v996 = vunpack.c.0.s8 %v995
      %v997 = vlaneseq
      %v998 = vshrl.u32 %v997, 7
      %v999 = vsub.s32 %v996, %v998
      %v1000 = vrot.slane %v986, %v999
      %v1001 = vcombine.high %v977, 0.0
      %v1002 = vcombine.high %v984, 0.0
      %v1003 = vcombine.high %v993, 0.0
      %v1004 = vcombine.high %v1000, 0.0
      %v1005 = vcombine.low %v916, %v924
      %v1006 = vcombine.high %v916, %v924
      %v1008 = vunpack.c.l.s4 1983009808
      %v1009 = vunpack.c.0.s8 %v1008
      %v1010 = vlaneseq
      %v1011 = vshrl.u32 %v1010, 7
      %v1012 = vsub.s32 %v1009, %v1011
      %v1013 = vrot.slane %v1005, %v1012
      %v1015 = vunpack.c.l.s4 1983009808
      %v1016 = vunpack.c.0.s8 %v1015
      %v1017 = vlaneseq
      %v1018 = vshrl.u32 %v1017, 7
      %v1019 = vsub.s32 %v1016, %v1018
      %v1020 = vrot.slane %v1006, %v1019
      %v1021 = vcombine.low %v920, %v928
      %v1022 = vcombine.high %v920, %v928
      %v1024 = vunpack.c.l.s4 1983009808
      %v1025 = vunpack.c.0.s8 %v1024
      %v1026 = vlaneseq
      %v1027 = vshrl.u32 %v1026, 7
      %v1028 = vsub.s32 %v1025, %v1027
      %v1029 = vrot.slane %v1021, %v1028
      %v1031 = vunpack.c.l.s4 1983009808
      %v1032 = vunpack.c.0.s8 %v1031
      %v1033 = vlaneseq
      %v1034 = vshrl.u32 %v1033, 7
      %v1035 = vsub.s32 %v1032, %v1034
      %v1036 = vrot.slane %v1022, %v1035
      %v1037 = vcombine.low %v1013, %v1029
      %v1038 = vcombine.high %v1013, %v1029
      %v1040 = vunpack.c.l.s4 1934713408
      %v1041 = vunpack.c.0.s8 %v1040
      %v1042 = vlaneseq
      %v1043 = vshrl.u32 %v1042, 7
      %v1044 = vsub.s32 %v1041, %v1043
      %v1045 = vrot.slane %v1037, %v1044
      %v1047 = vunpack.c.l.s4 1934713408
      %v1048 = vunpack.c.0.s8 %v1047
      %v1049 = vlaneseq
      %v1050 = vshrl.u32 %v1049, 7
      %v1051 = vsub.s32 %v1048, %v1050
      %v1052 = vrot.slane %v1038, %v1051
      %v1053 = vcombine.low %v1020, %v1036
      %v1054 = vcombine.high %v1020, %v1036
      %v1056 = vunpack.c.l.s4 1934713408
      %v1057 = vunpack.c.0.s8 %v1056
      %v1058 = vlaneseq
      %v1059 = vshrl.u32 %v1058, 7
      %v1060 = vsub.s32 %v1057, %v1059
      %v1061 = vrot.slane %v1053, %v1060
      %v1063 = vunpack.c.l.s4 1934713408
      %v1064 = vunpack.c.0.s8 %v1063
      %v1065 = vlaneseq
      %v1066 = vshrl.u32 %v1065, 7
      %v1067 = vsub.s32 %v1064, %v1066
      %v1068 = vrot.slane %v1054, %v1067
      %v1069 = vcombine.high %v1045, 0.0
      %v1070 = vcombine.high %v1052, 0.0
      %v1071 = vcombine.high %v1061, 0.0
      %v1072 = vcombine.high %v1068, 0.0
      %1073 = vxpose.xlu0.b32.start [1/16] %v977, 128
      %1074 = vxpose.xlu0.b32.cont [2/16] 0.0, 128
      %1075 = vxpose.xlu0.b32.cont [3/16] 0.0, 128
      %1076 = vxpose.xlu0.b32.cont [4/16] 0.0, 128
      %1077 = vxpose.xlu0.b32.cont [5/16] 0.0, 128
      %1078 = vxpose.xlu0.b32.cont [6/16] 0.0, 128
      %1079 = vxpose.xlu0.b32.cont [7/16] 0.0, 128
      %1080 = vxpose.xlu0.b32.cont [8/16] 0.0, 128
      %1081 = vxpose.xlu0.b32.cont [9/16] 0.0, 128
      %1082 = vxpose.xlu0.b32.cont [10/16] 0.0, 128
      %1083 = vxpose.xlu0.b32.cont [11/16] 0.0, 128
      %1084 = vxpose.xlu0.b32.cont [12/16] 0.0, 128
      %1085 = vxpose.xlu0.b32.cont [13/16] 0.0, 128
      %1086 = vxpose.xlu0.b32.cont [14/16] 0.0, 128
      %1087 = vxpose.xlu0.b32.cont [15/16] 0.0, 128
      %1088 = vxpose.xlu0.b32.end [16/16] 0.0, 128
      %v1089 = vpop.trf.xlu0
      %v1090 = vpop.trf.xlu0
      %v1091 = vpop.trf.xlu0
      %v1092 = vpop.trf.xlu0
      %v1093 = vpop.trf.xlu0
      %v1094 = vpop.trf.xlu0
      %v1095 = vpop.trf.xlu0
      %v1096 = vpop.trf.xlu0
      %v1097 = vpop.trf.xlu0
      %v1098 = vpop.trf.xlu0
      %v1099 = vpop.trf.xlu0
      %v1100 = vpop.trf.xlu0
      %v1101 = vpop.trf.xlu0
      %v1102 = vpop.trf.xlu0
      %v1103 = vpop.trf.xlu0
      %v1104 = vpop.trf.xlu0
      %1105 = vxpose.xlu0.b32.start [1/16] %v1001, 128
      %1106 = vxpose.xlu0.b32.cont [2/16] 0.0, 128
      %1107 = vxpose.xlu0.b32.cont [3/16] 0.0, 128
      %1108 = vxpose.xlu0.b32.cont [4/16] 0.0, 128
      %1109 = vxpose.xlu0.b32.cont [5/16] 0.0, 128
      %1110 = vxpose.xlu0.b32.cont [6/16] 0.0, 128
      %1111 = vxpose.xlu0.b32.cont [7/16] 0.0, 128
      %1112 = vxpose.xlu0.b32.cont [8/16] 0.0, 128
      %1113 = vxpose.xlu0.b32.cont [9/16] 0.0, 128
      %1114 = vxpose.xlu0.b32.cont [10/16] 0.0, 128
      %1115 = vxpose.xlu0.b32.cont [11/16] 0.0, 128
      %1116 = vxpose.xlu0.b32.cont [12/16] 0.0, 128
      %1117 = vxpose.xlu0.b32.cont [13/16] 0.0, 128
      %1118 = vxpose.xlu0.b32.cont [14/16] 0.0, 128
      %1119 = vxpose.xlu0.b32.cont [15/16] 0.0, 128
      %1120 = vxpose.xlu0.b32.end [16/16] 0.0, 128
      %v1121 = vpop.trf.xlu0
      %v1122 = vpop.trf.xlu0
      %v1123 = vpop.trf.xlu0
      %v1124 = vpop.trf.xlu0
      %v1125 = vpop.trf.xlu0
      %v1126 = vpop.trf.xlu0
      %v1127 = vpop.trf.xlu0
      %v1128 = vpop.trf.xlu0
      %v1129 = vpop.trf.xlu0
      %v1130 = vpop.trf.xlu0
      %v1131 = vpop.trf.xlu0
      %v1132 = vpop.trf.xlu0
      %v1133 = vpop.trf.xlu0
      %v1134 = vpop.trf.xlu0
      %v1135 = vpop.trf.xlu0
      %v1136 = vpop.trf.xlu0
      %1137 = vxpose.xlu0.b32.start [1/16] %v984, 128
      %1138 = vxpose.xlu0.b32.cont [2/16] 0.0, 128
      %1139 = vxpose.xlu0.b32.cont [3/16] 0.0, 128
      %1140 = vxpose.xlu0.b32.cont [4/16] 0.0, 128
      %1141 = vxpose.xlu0.b32.cont [5/16] 0.0, 128
      %1142 = vxpose.xlu0.b32.cont [6/16] 0.0, 128
      %1143 = vxpose.xlu0.b32.cont [7/16] 0.0, 128
      %1144 = vxpose.xlu0.b32.cont [8/16] 0.0, 128
      %1145 = vxpose.xlu0.b32.cont [9/16] 0.0, 128
      %1146 = vxpose.xlu0.b32.cont [10/16] 0.0, 128
      %1147 = vxpose.xlu0.b32.cont [11/16] 0.0, 128
      %1148 = vxpose.xlu0.b32.cont [12/16] 0.0, 128
      %1149 = vxpose.xlu0.b32.cont [13/16] 0.0, 128
      %1150 = vxpose.xlu0.b32.cont [14/16] 0.0, 128
      %1151 = vxpose.xlu0.b32.cont [15/16] 0.0, 128
      %1152 = vxpose.xlu0.b32.end [16/16] 0.0, 128
      %v1153 = vpop.trf.xlu0
      %v1154 = vpop.trf.xlu0
      %v1155 = vpop.trf.xlu0
      %v1156 = vpop.trf.xlu0
      %v1157 = vpop.trf.xlu0
      %v1158 = vpop.trf.xlu0
      %v1159 = vpop.trf.xlu0
      %v1160 = vpop.trf.xlu0
      %v1161 = vpop.trf.xlu0
      %v1162 = vpop.trf.xlu0
      %v1163 = vpop.trf.xlu0
      %v1164 = vpop.trf.xlu0
      %v1165 = vpop.trf.xlu0
      %v1166 = vpop.trf.xlu0
      %v1167 = vpop.trf.xlu0
      %v1168 = vpop.trf.xlu0
      %1169 = vxpose.xlu0.b32.start [1/16] %v1002, 128
      %1170 = vxpose.xlu0.b32.cont [2/16] 0.0, 128
      %1171 = vxpose.xlu0.b32.cont [3/16] 0.0, 128
      %1172 = vxpose.xlu0.b32.cont [4/16] 0.0, 128
      %1173 = vxpose.xlu0.b32.cont [5/16] 0.0, 128
      %1174 = vxpose.xlu0.b32.cont [6/16] 0.0, 128
      %1175 = vxpose.xlu0.b32.cont [7/16] 0.0, 128
      %1176 = vxpose.xlu0.b32.cont [8/16] 0.0, 128
      %1177 = vxpose.xlu0.b32.cont [9/16] 0.0, 128
      %1178 = vxpose.xlu0.b32.cont [10/16] 0.0, 128
      %1179 = vxpose.xlu0.b32.cont [11/16] 0.0, 128
      %1180 = vxpose.xlu0.b32.cont [12/16] 0.0, 128
      %1181 = vxpose.xlu0.b32.cont [13/16] 0.0, 128
      %1182 = vxpose.xlu0.b32.cont [14/16] 0.0, 128
      %1183 = vxpose.xlu0.b32.cont [15/16] 0.0, 128
      %1184 = vxpose.xlu0.b32.end [16/16] 0.0, 128
      %v1185 = vpop.trf.xlu0
      %v1186 = vpop.trf.xlu0
      %v1187 = vpop.trf.xlu0
      %v1188 = vpop.trf.xlu0
      %v1189 = vpop.trf.xlu0
      %v1190 = vpop.trf.xlu0
      %v1191 = vpop.trf.xlu0
      %v1192 = vpop.trf.xlu0
      %v1193 = vpop.trf.xlu0
      %v1194 = vpop.trf.xlu0
      %v1195 = vpop.trf.xlu0
      %v1196 = vpop.trf.xlu0
      %v1197 = vpop.trf.xlu0
      %v1198 = vpop.trf.xlu0
      %v1199 = vpop.trf.xlu0
      %v1200 = vpop.trf.xlu0
      %1201 = vxpose.xlu0.b32.start [1/16] %v993, 128
      %1202 = vxpose.xlu0.b32.cont [2/16] 0.0, 128
      %1203 = vxpose.xlu0.b32.cont [3/16] 0.0, 128
      %1204 = vxpose.xlu0.b32.cont [4/16] 0.0, 128
      %1205 = vxpose.xlu0.b32.cont [5/16] 0.0, 128
      %1206 = vxpose.xlu0.b32.cont [6/16] 0.0, 128
      %1207 = vxpose.xlu0.b32.cont [7/16] 0.0, 128
      %1208 = vxpose.xlu0.b32.cont [8/16] 0.0, 128
      %1209 = vxpose.xlu0.b32.cont [9/16] 0.0, 128
      %1210 = vxpose.xlu0.b32.cont [10/16] 0.0, 128
      %1211 = vxpose.xlu0.b32.cont [11/16] 0.0, 128
      %1212 = vxpose.xlu0.b32.cont [12/16] 0.0, 128
      %1213 = vxpose.xlu0.b32.cont [13/16] 0.0, 128
      %1214 = vxpose.xlu0.b32.cont [14/16] 0.0, 128
      %1215 = vxpose.xlu0.b32.cont [15/16] 0.0, 128
      %1216 = vxpose.xlu0.b32.end [16/16] 0.0, 128
      %v1217 = vpop.trf.xlu0
      %v1218 = vpop.trf.xlu0
      %v1219 = vpop.trf.xlu0
      %v1220 = vpop.trf.xlu0
      %v1221 = vpop.trf.xlu0
      %v1222 = vpop.trf.xlu0
      %v1223 = vpop.trf.xlu0
      %v1224 = vpop.trf.xlu0
      %v1225 = vpop.trf.xlu0
      %v1226 = vpop.trf.xlu0
      %v1227 = vpop.trf.xlu0
      %v1228 = vpop.trf.xlu0
      %v1229 = vpop.trf.xlu0
      %v1230 = vpop.trf.xlu0
      %v1231 = vpop.trf.xlu0
      %v1232 = vpop.trf.xlu0
      %1233 = vxpose.xlu0.b32.start [1/16] %v1003, 128
      %1234 = vxpose.xlu0.b32.cont [2/16] 0.0, 128
      %1235 = vxpose.xlu0.b32.cont [3/16] 0.0, 128
      %1236 = vxpose.xlu0.b32.cont [4/16] 0.0, 128
      %1237 = vxpose.xlu0.b32.cont [5/16] 0.0, 128
      %1238 = vxpose.xlu0.b32.cont [6/16] 0.0, 128
      %1239 = vxpose.xlu0.b32.cont [7/16] 0.0, 128
      %1240 = vxpose.xlu0.b32.cont [8/16] 0.0, 128
      %1241 = vxpose.xlu0.b32.cont [9/16] 0.0, 128
      %1242 = vxpose.xlu0.b32.cont [10/16] 0.0, 128
      %1243 = vxpose.xlu0.b32.cont [11/16] 0.0, 128
      %1244 = vxpose.xlu0.b32.cont [12/16] 0.0, 128
      %1245 = vxpose.xlu0.b32.cont [13/16] 0.0, 128
      %1246 = vxpose.xlu0.b32.cont [14/16] 0.0, 128
      %1247 = vxpose.xlu0.b32.cont [15/16] 0.0, 128
      %1248 = vxpose.xlu0.b32.end [16/16] 0.0, 128
      %v1249 = vpop.trf.xlu0
      %v1250 = vpop.trf.xlu0
      %v1251 = vpop.trf.xlu0
      %v1252 = vpop.trf.xlu0
      %v1253 = vpop.trf.xlu0
      %v1254 = vpop.trf.xlu0
      %v1255 = vpop.trf.xlu0
      %v1256 = vpop.trf.xlu0
      %v1257 = vpop.trf.xlu0
      %v1258 = vpop.trf.xlu0
      %v1259 = vpop.trf.xlu0
      %v1260 = vpop.trf.xlu0
      %v1261 = vpop.trf.xlu0
      %v1262 = vpop.trf.xlu0
      %v1263 = vpop.trf.xlu0
      %v1264 = vpop.trf.xlu0
      %1265 = vxpose.xlu0.b32.start [1/16] %v1000, 128
      %1266 = vxpose.xlu0.b32.cont [2/16] 0.0, 128
      %1267 = vxpose.xlu0.b32.cont [3/16] 0.0, 128
      %1268 = vxpose.xlu0.b32.cont [4/16] 0.0, 128
      %1269 = vxpose.xlu0.b32.cont [5/16] 0.0, 128
      %1270 = vxpose.xlu0.b32.cont [6/16] 0.0, 128
      %1271 = vxpose.xlu0.b32.cont [7/16] 0.0, 128
      %1272 = vxpose.xlu0.b32.cont [8/16] 0.0, 128
      %1273 = vxpose.xlu0.b32.cont [9/16] 0.0, 128
      %1274 = vxpose.xlu0.b32.cont [10/16] 0.0, 128
      %1275 = vxpose.xlu0.b32.cont [11/16] 0.0, 128
      %1276 = vxpose.xlu0.b32.cont [12/16] 0.0, 128
      %1277 = vxpose.xlu0.b32.cont [13/16] 0.0, 128
      %1278 = vxpose.xlu0.b32.cont [14/16] 0.0, 128
      %1279 = vxpose.xlu0.b32.cont [15/16] 0.0, 128
      %1280 = vxpose.xlu0.b32.end [16/16] 0.0, 128
      %v1281 = vpop.trf.xlu0
      %v1282 = vpop.trf.xlu0
      %v1283 = vpop.trf.xlu0
      %v1284 = vpop.trf.xlu0
      %v1285 = vpop.trf.xlu0
      %v1286 = vpop.trf.xlu0
      %v1287 = vpop.trf.xlu0
      %v1288 = vpop.trf.xlu0
      %v1289 = vpop.trf.xlu0
      %v1290 = vpop.trf.xlu0
      %v1291 = vpop.trf.xlu0
      %v1292 = vpop.trf.xlu0
      %v1293 = vpop.trf.xlu0
      %v1294 = vpop.trf.xlu0
      %v1295 = vpop.trf.xlu0
      %v1296 = vpop.trf.xlu0
      %1297 = vxpose.xlu0.b32.start [1/16] %v1004, 128
      %1298 = vxpose.xlu0.b32.cont [2/16] 0.0, 128
      %1299 = vxpose.xlu0.b32.cont [3/16] 0.0, 128
      %1300 = vxpose.xlu0.b32.cont [4/16] 0.0, 128
      %1301 = vxpose.xlu0.b32.cont [5/16] 0.0, 128
      %1302 = vxpose.xlu0.b32.cont [6/16] 0.0, 128
      %1303 = vxpose.xlu0.b32.cont [7/16] 0.0, 128
      %1304 = vxpose.xlu0.b32.cont [8/16] 0.0, 128
      %1305 = vxpose.xlu0.b32.cont [9/16] 0.0, 128
      %1306 = vxpose.xlu0.b32.cont [10/16] 0.0, 128
      %1307 = vxpose.xlu0.b32.cont [11/16] 0.0, 128
      %1308 = vxpose.xlu0.b32.cont [12/16] 0.0, 128
      %1309 = vxpose.xlu0.b32.cont [13/16] 0.0, 128
      %1310 = vxpose.xlu0.b32.cont [14/16] 0.0, 128
      %1311 = vxpose.xlu0.b32.cont [15/16] 0.0, 128
      %1312 = vxpose.xlu0.b32.end [16/16] 0.0, 128
      %v1313 = vpop.trf.xlu0
      %v1314 = vpop.trf.xlu0
      %v1315 = vpop.trf.xlu0
      %v1316 = vpop.trf.xlu0
      %v1317 = vpop.trf.xlu0
      %v1318 = vpop.trf.xlu0
      %v1319 = vpop.trf.xlu0
      %v1320 = vpop.trf.xlu0
      %v1321 = vpop.trf.xlu0
      %v1322 = vpop.trf.xlu0
      %v1323 = vpop.trf.xlu0
      %v1324 = vpop.trf.xlu0
      %v1325 = vpop.trf.xlu0
      %v1326 = vpop.trf.xlu0
      %v1327 = vpop.trf.xlu0
      %v1328 = vpop.trf.xlu0
      %1329 = vxpose.xlu0.b32.start [1/16] %v1045, 128
      %1330 = vxpose.xlu0.b32.cont [2/16] 0.0, 128
      %1331 = vxpose.xlu0.b32.cont [3/16] 0.0, 128
      %1332 = vxpose.xlu0.b32.cont [4/16] 0.0, 128
      %1333 = vxpose.xlu0.b32.cont [5/16] 0.0, 128
      %1334 = vxpose.xlu0.b32.cont [6/16] 0.0, 128
      %1335 = vxpose.xlu0.b32.cont [7/16] 0.0, 128
      %1336 = vxpose.xlu0.b32.cont [8/16] 0.0, 128
      %1337 = vxpose.xlu0.b32.cont [9/16] 0.0, 128
      %1338 = vxpose.xlu0.b32.cont [10/16] 0.0, 128
      %1339 = vxpose.xlu0.b32.cont [11/16] 0.0, 128
      %1340 = vxpose.xlu0.b32.cont [12/16] 0.0, 128
      %1341 = vxpose.xlu0.b32.cont [13/16] 0.0, 128
      %1342 = vxpose.xlu0.b32.cont [14/16] 0.0, 128
      %1343 = vxpose.xlu0.b32.cont [15/16] 0.0, 128
      %1344 = vxpose.xlu0.b32.end [16/16] 0.0, 128
      %v1345 = vpop.trf.xlu0
      %v1346 = vpop.trf.xlu0
      %v1347 = vpop.trf.xlu0
      %v1348 = vpop.trf.xlu0
      %v1349 = vpop.trf.xlu0
      %v1350 = vpop.trf.xlu0
      %v1351 = vpop.trf.xlu0
      %v1352 = vpop.trf.xlu0
      %v1353 = vpop.trf.xlu0
      %v1354 = vpop.trf.xlu0
      %v1355 = vpop.trf.xlu0
      %v1356 = vpop.trf.xlu0
      %v1357 = vpop.trf.xlu0
      %v1358 = vpop.trf.xlu0
      %v1359 = vpop.trf.xlu0
      %v1360 = vpop.trf.xlu0
      %1361 = vxpose.xlu0.b32.start [1/16] %v1069, 128
      %1362 = vxpose.xlu0.b32.cont [2/16] 0.0, 128
      %1363 = vxpose.xlu0.b32.cont [3/16] 0.0, 128
      %1364 = vxpose.xlu0.b32.cont [4/16] 0.0, 128
      %1365 = vxpose.xlu0.b32.cont [5/16] 0.0, 128
      %1366 = vxpose.xlu0.b32.cont [6/16] 0.0, 128
      %1367 = vxpose.xlu0.b32.cont [7/16] 0.0, 128
      %1368 = vxpose.xlu0.b32.cont [8/16] 0.0, 128
      %1369 = vxpose.xlu0.b32.cont [9/16] 0.0, 128
      %1370 = vxpose.xlu0.b32.cont [10/16] 0.0, 128
      %1371 = vxpose.xlu0.b32.cont [11/16] 0.0, 128
      %1372 = vxpose.xlu0.b32.cont [12/16] 0.0, 128
      %1373 = vxpose.xlu0.b32.cont [13/16] 0.0, 128
      %1374 = vxpose.xlu0.b32.cont [14/16] 0.0, 128
      %1375 = vxpose.xlu0.b32.cont [15/16] 0.0, 128
      %1376 = vxpose.xlu0.b32.end [16/16] 0.0, 128
      %v1377 = vpop.trf.xlu0
      %v1378 = vpop.trf.xlu0
      %v1379 = vpop.trf.xlu0
      %v1380 = vpop.trf.xlu0
      %v1381 = vpop.trf.xlu0
      %v1382 = vpop.trf.xlu0
      %v1383 = vpop.trf.xlu0
      %v1384 = vpop.trf.xlu0
      %v1385 = vpop.trf.xlu0
      %v1386 = vpop.trf.xlu0
      %v1387 = vpop.trf.xlu0
      %v1388 = vpop.trf.xlu0
      %v1389 = vpop.trf.xlu0
      %v1390 = vpop.trf.xlu0
      %v1391 = vpop.trf.xlu0
      %v1392 = vpop.trf.xlu0
      %1393 = vxpose.xlu0.b32.start [1/16] %v1052, 128
      %1394 = vxpose.xlu0.b32.cont [2/16] 0.0, 128
      %1395 = vxpose.xlu0.b32.cont [3/16] 0.0, 128
      %1396 = vxpose.xlu0.b32.cont [4/16] 0.0, 128
      %1397 = vxpose.xlu0.b32.cont [5/16] 0.0, 128
      %1398 = vxpose.xlu0.b32.cont [6/16] 0.0, 128
      %1399 = vxpose.xlu0.b32.cont [7/16] 0.0, 128
      %1400 = vxpose.xlu0.b32.cont [8/16] 0.0, 128
      %1401 = vxpose.xlu0.b32.cont [9/16] 0.0, 128
      %1402 = vxpose.xlu0.b32.cont [10/16] 0.0, 128
      %1403 = vxpose.xlu0.b32.cont [11/16] 0.0, 128
      %1404 = vxpose.xlu0.b32.cont [12/16] 0.0, 128
      %1405 = vxpose.xlu0.b32.cont [13/16] 0.0, 128
      %1406 = vxpose.xlu0.b32.cont [14/16] 0.0, 128
      %1407 = vxpose.xlu0.b32.cont [15/16] 0.0, 128
      %1408 = vxpose.xlu0.b32.end [16/16] 0.0, 128
      %v1409 = vpop.trf.xlu0
      %v1410 = vpop.trf.xlu0
      %v1411 = vpop.trf.xlu0
      %v1412 = vpop.trf.xlu0
      %v1413 = vpop.trf.xlu0
      %v1414 = vpop.trf.xlu0
      %v1415 = vpop.trf.xlu0
      %v1416 = vpop.trf.xlu0
      %v1417 = vpop.trf.xlu0
      %v1418 = vpop.trf.xlu0
      %v1419 = vpop.trf.xlu0
      %v1420 = vpop.trf.xlu0
      %v1421 = vpop.trf.xlu0
      %v1422 = vpop.trf.xlu0
      %v1423 = vpop.trf.xlu0
      %v1424 = vpop.trf.xlu0
      %1425 = vxpose.xlu0.b32.start [1/16] %v1070, 128
      %1426 = vxpose.xlu0.b32.cont [2/16] 0.0, 128
      %1427 = vxpose.xlu0.b32.cont [3/16] 0.0, 128
      %1428 = vxpose.xlu0.b32.cont [4/16] 0.0, 128
      %1429 = vxpose.xlu0.b32.cont [5/16] 0.0, 128
      %1430 = vxpose.xlu0.b32.cont [6/16] 0.0, 128
      %1431 = vxpose.xlu0.b32.cont [7/16] 0.0, 128
      %1432 = vxpose.xlu0.b32.cont [8/16] 0.0, 128
      %1433 = vxpose.xlu0.b32.cont [9/16] 0.0, 128
      %1434 = vxpose.xlu0.b32.cont [10/16] 0.0, 128
      %1435 = vxpose.xlu0.b32.cont [11/16] 0.0, 128
      %1436 = vxpose.xlu0.b32.cont [12/16] 0.0, 128
      %1437 = vxpose.xlu0.b32.cont [13/16] 0.0, 128
      %1438 = vxpose.xlu0.b32.cont [14/16] 0.0, 128
      %1439 = vxpose.xlu0.b32.cont [15/16] 0.0, 128
      %1440 = vxpose.xlu0.b32.end [16/16] 0.0, 128
      %v1441 = vpop.trf.xlu0
      %v1442 = vpop.trf.xlu0
      %v1443 = vpop.trf.xlu0
      %v1444 = vpop.trf.xlu0
      %v1445 = vpop.trf.xlu0
      %v1446 = vpop.trf.xlu0
      %v1447 = vpop.trf.xlu0
      %v1448 = vpop.trf.xlu0
      %v1449 = vpop.trf.xlu0
      %v1450 = vpop.trf.xlu0
      %v1451 = vpop.trf.xlu0
      %v1452 = vpop.trf.xlu0
      %v1453 = vpop.trf.xlu0
      %v1454 = vpop.trf.xlu0
      %v1455 = vpop.trf.xlu0
      %v1456 = vpop.trf.xlu0
      %1457 = vxpose.xlu0.b32.start [1/16] %v1061, 128
      %1458 = vxpose.xlu0.b32.cont [2/16] 0.0, 128
      %1459 = vxpose.xlu0.b32.cont [3/16] 0.0, 128
      %1460 = vxpose.xlu0.b32.cont [4/16] 0.0, 128
      %1461 = vxpose.xlu0.b32.cont [5/16] 0.0, 128
      %1462 = vxpose.xlu0.b32.cont [6/16] 0.0, 128
      %1463 = vxpose.xlu0.b32.cont [7/16] 0.0, 128
      %1464 = vxpose.xlu0.b32.cont [8/16] 0.0, 128
      %1465 = vxpose.xlu0.b32.cont [9/16] 0.0, 128
      %1466 = vxpose.xlu0.b32.cont [10/16] 0.0, 128
      %1467 = vxpose.xlu0.b32.cont [11/16] 0.0, 128
      %1468 = vxpose.xlu0.b32.cont [12/16] 0.0, 128
      %1469 = vxpose.xlu0.b32.cont [13/16] 0.0, 128
      %1470 = vxpose.xlu0.b32.cont [14/16] 0.0, 128
      %1471 = vxpose.xlu0.b32.cont [15/16] 0.0, 128
      %1472 = vxpose.xlu0.b32.end [16/16] 0.0, 128
      %v1473 = vpop.trf.xlu0
      %v1474 = vpop.trf.xlu0
      %v1475 = vpop.trf.xlu0
      %v1476 = vpop.trf.xlu0
      %v1477 = vpop.trf.xlu0
      %v1478 = vpop.trf.xlu0
      %v1479 = vpop.trf.xlu0
      %v1480 = vpop.trf.xlu0
      %v1481 = vpop.trf.xlu0
      %v1482 = vpop.trf.xlu0
      %v1483 = vpop.trf.xlu0
      %v1484 = vpop.trf.xlu0
      %v1485 = vpop.trf.xlu0
      %v1486 = vpop.trf.xlu0
      %v1487 = vpop.trf.xlu0
      %v1488 = vpop.trf.xlu0
      %1489 = vxpose.xlu0.b32.start [1/16] %v1071, 128
      %1490 = vxpose.xlu0.b32.cont [2/16] 0.0, 128
      %1491 = vxpose.xlu0.b32.cont [3/16] 0.0, 128
      %1492 = vxpose.xlu0.b32.cont [4/16] 0.0, 128
      %1493 = vxpose.xlu0.b32.cont [5/16] 0.0, 128
      %1494 = vxpose.xlu0.b32.cont [6/16] 0.0, 128
      %1495 = vxpose.xlu0.b32.cont [7/16] 0.0, 128
      %1496 = vxpose.xlu0.b32.cont [8/16] 0.0, 128
      %1497 = vxpose.xlu0.b32.cont [9/16] 0.0, 128
      %1498 = vxpose.xlu0.b32.cont [10/16] 0.0, 128
      %1499 = vxpose.xlu0.b32.cont [11/16] 0.0, 128
      %1500 = vxpose.xlu0.b32.cont [12/16] 0.0, 128
      %1501 = vxpose.xlu0.b32.cont [13/16] 0.0, 128
      %1502 = vxpose.xlu0.b32.cont [14/16] 0.0, 128
      %1503 = vxpose.xlu0.b32.cont [15/16] 0.0, 128
      %1504 = vxpose.xlu0.b32.end [16/16] 0.0, 128
      %v1505 = vpop.trf.xlu0
      %v1506 = vpop.trf.xlu0
      %v1507 = vpop.trf.xlu0
      %v1508 = vpop.trf.xlu0
      %v1509 = vpop.trf.xlu0
      %v1510 = vpop.trf.xlu0
      %v1511 = vpop.trf.xlu0
      %v1512 = vpop.trf.xlu0
      %v1513 = vpop.trf.xlu0
      %v1514 = vpop.trf.xlu0
      %v1515 = vpop.trf.xlu0
      %v1516 = vpop.trf.xlu0
      %v1517 = vpop.trf.xlu0
      %v1518 = vpop.trf.xlu0
      %v1519 = vpop.trf.xlu0
      %v1520 = vpop.trf.xlu0
      %1521 = vxpose.xlu0.b32.start [1/16] %v1068, 128
      %1522 = vxpose.xlu0.b32.cont [2/16] 0.0, 128
      %1523 = vxpose.xlu0.b32.cont [3/16] 0.0, 128
      %1524 = vxpose.xlu0.b32.cont [4/16] 0.0, 128
      %1525 = vxpose.xlu0.b32.cont [5/16] 0.0, 128
      %1526 = vxpose.xlu0.b32.cont [6/16] 0.0, 128
      %1527 = vxpose.xlu0.b32.cont [7/16] 0.0, 128
      %1528 = vxpose.xlu0.b32.cont [8/16] 0.0, 128
      %1529 = vxpose.xlu0.b32.cont [9/16] 0.0, 128
      %1530 = vxpose.xlu0.b32.cont [10/16] 0.0, 128
      %1531 = vxpose.xlu0.b32.cont [11/16] 0.0, 128
      %1532 = vxpose.xlu0.b32.cont [12/16] 0.0, 128
      %1533 = vxpose.xlu0.b32.cont [13/16] 0.0, 128
      %1534 = vxpose.xlu0.b32.cont [14/16] 0.0, 128
      %1535 = vxpose.xlu0.b32.cont [15/16] 0.0, 128
      %1536 = vxpose.xlu0.b32.end [16/16] 0.0, 128
      %v1537 = vpop.trf.xlu0
      %v1538 = vpop.trf.xlu0
      %v1539 = vpop.trf.xlu0
      %v1540 = vpop.trf.xlu0
      %v1541 = vpop.trf.xlu0
      %v1542 = vpop.trf.xlu0
      %v1543 = vpop.trf.xlu0
      %v1544 = vpop.trf.xlu0
      %v1545 = vpop.trf.xlu0
      %v1546 = vpop.trf.xlu0
      %v1547 = vpop.trf.xlu0
      %v1548 = vpop.trf.xlu0
      %v1549 = vpop.trf.xlu0
      %v1550 = vpop.trf.xlu0
      %v1551 = vpop.trf.xlu0
      %v1552 = vpop.trf.xlu0
      %1553 = vxpose.xlu0.b32.start [1/16] %v1072, 128
      %1554 = vxpose.xlu0.b32.cont [2/16] 0.0, 128
      %1555 = vxpose.xlu0.b32.cont [3/16] 0.0, 128
      %1556 = vxpose.xlu0.b32.cont [4/16] 0.0, 128
      %1557 = vxpose.xlu0.b32.cont [5/16] 0.0, 128
      %1558 = vxpose.xlu0.b32.cont [6/16] 0.0, 128
      %1559 = vxpose.xlu0.b32.cont [7/16] 0.0, 128
      %1560 = vxpose.xlu0.b32.cont [8/16] 0.0, 128
      %1561 = vxpose.xlu0.b32.cont [9/16] 0.0, 128
      %1562 = vxpose.xlu0.b32.cont [10/16] 0.0, 128
      %1563 = vxpose.xlu0.b32.cont [11/16] 0.0, 128
      %1564 = vxpose.xlu0.b32.cont [12/16] 0.0, 128
      %1565 = vxpose.xlu0.b32.cont [13/16] 0.0, 128
      %1566 = vxpose.xlu0.b32.cont [14/16] 0.0, 128
      %1567 = vxpose.xlu0.b32.cont [15/16] 0.0, 128
      %1568 = vxpose.xlu0.b32.end [16/16] 0.0, 128
      %v1569 = vpop.trf.xlu0
      %v1570 = vpop.trf.xlu0
      %v1571 = vpop.trf.xlu0
      %v1572 = vpop.trf.xlu0
      %v1573 = vpop.trf.xlu0
      %v1574 = vpop.trf.xlu0
      %v1575 = vpop.trf.xlu0
      %v1576 = vpop.trf.xlu0
      %v1577 = vpop.trf.xlu0
      %v1578 = vpop.trf.xlu0
      %v1579 = vpop.trf.xlu0
      %v1580 = vpop.trf.xlu0
      %v1581 = vpop.trf.xlu0
      %v1582 = vpop.trf.xlu0
      %v1583 = vpop.trf.xlu0
      %v1584 = vpop.trf.xlu0
      %v1585 = vcombine.low %v1089, %v1153
      %v1586 = vcombine.high %v1089, %v1153
      %v1588 = vunpack.c.l.s4 1983009808
      %v1589 = vunpack.c.0.s8 %v1588
      %v1590 = vlaneseq
      %v1591 = vshrl.u32 %v1590, 7
      %v1592 = vsub.s32 %v1589, %v1591
      %v1593 = vrot.slane %v1585, %v1592
      %v1595 = vunpack.c.l.s4 1983009808
      %v1596 = vunpack.c.0.s8 %v1595
      %v1597 = vlaneseq
      %v1598 = vshrl.u32 %v1597, 7
      %v1599 = vsub.s32 %v1596, %v1598
      %v1600 = vrot.slane %v1586, %v1599
      %v1601 = vcombine.low %v1121, %v1185
      %v1602 = vcombine.high %v1121, %v1185
      %v1604 = vunpack.c.l.s4 1983009808
      %v1605 = vunpack.c.0.s8 %v1604
      %v1606 = vlaneseq
      %v1607 = vshrl.u32 %v1606, 7
      %v1608 = vsub.s32 %v1605, %v1607
      %v1609 = vrot.slane %v1601, %v1608
      %v1611 = vunpack.c.l.s4 1983009808
      %v1612 = vunpack.c.0.s8 %v1611
      %v1613 = vlaneseq
      %v1614 = vshrl.u32 %v1613, 7
      %v1615 = vsub.s32 %v1612, %v1614
      %v1616 = vrot.slane %v1602, %v1615
      %v1617 = vcombine.low %v1217, %v1281
      %v1618 = vcombine.high %v1217, %v1281
      %v1620 = vunpack.c.l.s4 1983009808
      %v1621 = vunpack.c.0.s8 %v1620
      %v1622 = vlaneseq
      %v1623 = vshrl.u32 %v1622, 7
      %v1624 = vsub.s32 %v1621, %v1623
      %v1625 = vrot.slane %v1617, %v1624
      %v1627 = vunpack.c.l.s4 1983009808
      %v1628 = vunpack.c.0.s8 %v1627
      %v1629 = vlaneseq
      %v1630 = vshrl.u32 %v1629, 7
      %v1631 = vsub.s32 %v1628, %v1630
      %v1632 = vrot.slane %v1618, %v1631
      %v1633 = vcombine.low %v1249, %v1313
      %v1634 = vcombine.high %v1249, %v1313
      %v1636 = vunpack.c.l.s4 1983009808
      %v1637 = vunpack.c.0.s8 %v1636
      %v1638 = vlaneseq
      %v1639 = vshrl.u32 %v1638, 7
      %v1640 = vsub.s32 %v1637, %v1639
      %v1641 = vrot.slane %v1633, %v1640
      %v1643 = vunpack.c.l.s4 1983009808
      %v1644 = vunpack.c.0.s8 %v1643
      %v1645 = vlaneseq
      %v1646 = vshrl.u32 %v1645, 7
      %v1647 = vsub.s32 %v1644, %v1646
      %v1648 = vrot.slane %v1634, %v1647
      %v1649 = vcombine.low %v1593, %v1609
      %v1650 = vcombine.high %v1593, %v1609
      %v1652 = vunpack.c.l.s4 1934713408
      %v1653 = vunpack.c.0.s8 %v1652
      %v1654 = vlaneseq
      %v1655 = vshrl.u32 %v1654, 7
      %v1656 = vsub.s32 %v1653, %v1655
      %v1657 = vrot.slane %v1649, %v1656
      %v1659 = vunpack.c.l.s4 1934713408
      %v1660 = vunpack.c.0.s8 %v1659
      %v1661 = vlaneseq
      %v1662 = vshrl.u32 %v1661, 7
      %v1663 = vsub.s32 %v1660, %v1662
      %v1664 = vrot.slane %v1650, %v1663
      %v1665 = vcombine.low %v1600, %v1616
      %v1666 = vcombine.high %v1600, %v1616
      %v1668 = vunpack.c.l.s4 1934713408
      %v1669 = vunpack.c.0.s8 %v1668
      %v1670 = vlaneseq
      %v1671 = vshrl.u32 %v1670, 7
      %v1672 = vsub.s32 %v1669, %v1671
      %v1673 = vrot.slane %v1665, %v1672
      %v1675 = vunpack.c.l.s4 1934713408
      %v1676 = vunpack.c.0.s8 %v1675
      %v1677 = vlaneseq
      %v1678 = vshrl.u32 %v1677, 7
      %v1679 = vsub.s32 %v1676, %v1678
      %v1680 = vrot.slane %v1666, %v1679
      %v1681 = vcombine.low %v1625, %v1641
      %v1682 = vcombine.high %v1625, %v1641
      %v1684 = vunpack.c.l.s4 1934713408
      %v1685 = vunpack.c.0.s8 %v1684
      %v1686 = vlaneseq
      %v1687 = vshrl.u32 %v1686, 7
      %v1688 = vsub.s32 %v1685, %v1687
      %v1689 = vrot.slane %v1681, %v1688
      %v1691 = vunpack.c.l.s4 1934713408
      %v1692 = vunpack.c.0.s8 %v1691
      %v1693 = vlaneseq
      %v1694 = vshrl.u32 %v1693, 7
      %v1695 = vsub.s32 %v1692, %v1694
      %v1696 = vrot.slane %v1682, %v1695
      %v1697 = vcombine.low %v1632, %v1648
      %v1698 = vcombine.high %v1632, %v1648
      %v1700 = vunpack.c.l.s4 1934713408
      %v1701 = vunpack.c.0.s8 %v1700
      %v1702 = vlaneseq
      %v1703 = vshrl.u32 %v1702, 7
      %v1704 = vsub.s32 %v1701, %v1703
      %v1705 = vrot.slane %v1697, %v1704
      %v1707 = vunpack.c.l.s4 1934713408
      %v1708 = vunpack.c.0.s8 %v1707
      %v1709 = vlaneseq
      %v1710 = vshrl.u32 %v1709, 7
      %v1711 = vsub.s32 %v1708, %v1710
      %v1712 = vrot.slane %v1698, %v1711
      %v1713 = vcombine.low %v1657, %v1689
      %v1714 = vcombine.high %v1657, %v1689
      %v1715 = vcombine.low %v1664, %v1696
      %v1716 = vcombine.high %v1664, %v1696
      %v1717 = vcombine.low %v1673, %v1705
      %v1718 = vcombine.high %v1673, %v1705
      %v1719 = vcombine.low %v1680, %v1712
      %v1720 = vcombine.high %v1680, %v1712
      %v1721 = vcombine.low %v1345, %v1409
      %v1722 = vcombine.high %v1345, %v1409
      %v1724 = vunpack.c.l.s4 1983009808
      %v1725 = vunpack.c.0.s8 %v1724
      %v1726 = vlaneseq
      %v1727 = vshrl.u32 %v1726, 7
      %v1728 = vsub.s32 %v1725, %v1727
      %v1729 = vrot.slane %v1721, %v1728
      %v1731 = vunpack.c.l.s4 1983009808
      %v1732 = vunpack.c.0.s8 %v1731
      %v1733 = vlaneseq
      %v1734 = vshrl.u32 %v1733, 7
      %v1735 = vsub.s32 %v1732, %v1734
      %v1736 = vrot.slane %v1722, %v1735
      %v1737 = vcombine.low %v1377, %v1441
      %v1738 = vcombine.high %v1377, %v1441
      %v1740 = vunpack.c.l.s4 1983009808
      %v1741 = vunpack.c.0.s8 %v1740
      %v1742 = vlaneseq
      %v1743 = vshrl.u32 %v1742, 7
      %v1744 = vsub.s32 %v1741, %v1743
      %v1745 = vrot.slane %v1737, %v1744
      %v1747 = vunpack.c.l.s4 1983009808
      %v1748 = vunpack.c.0.s8 %v1747
      %v1749 = vlaneseq
      %v1750 = vshrl.u32 %v1749, 7
      %v1751 = vsub.s32 %v1748, %v1750
      %v1752 = vrot.slane %v1738, %v1751
      %v1753 = vcombine.low %v1473, %v1537
      %v1754 = vcombine.high %v1473, %v1537
      %v1756 = vunpack.c.l.s4 1983009808
      %v1757 = vunpack.c.0.s8 %v1756
      %v1758 = vlaneseq
      %v1759 = vshrl.u32 %v1758, 7
      %v1760 = vsub.s32 %v1757, %v1759
      %v1761 = vrot.slane %v1753, %v1760
      %v1763 = vunpack.c.l.s4 1983009808
      %v1764 = vunpack.c.0.s8 %v1763
      %v1765 = vlaneseq
      %v1766 = vshrl.u32 %v1765, 7
      %v1767 = vsub.s32 %v1764, %v1766
      %v1768 = vrot.slane %v1754, %v1767
      %v1769 = vcombine.low %v1505, %v1569
      %v1770 = vcombine.high %v1505, %v1569
      %v1772 = vunpack.c.l.s4 1983009808
      %v1773 = vunpack.c.0.s8 %v1772
      %v1774 = vlaneseq
      %v1775 = vshrl.u32 %v1774, 7
      %v1776 = vsub.s32 %v1773, %v1775
      %v1777 = vrot.slane %v1769, %v1776
      %v1779 = vunpack.c.l.s4 1983009808
      %v1780 = vunpack.c.0.s8 %v1779
      %v1781 = vlaneseq
      %v1782 = vshrl.u32 %v1781, 7
      %v1783 = vsub.s32 %v1780, %v1782
      %v1784 = vrot.slane %v1770, %v1783
      %v1785 = vcombine.low %v1729, %v1745
      %v1786 = vcombine.high %v1729, %v1745
      %v1788 = vunpack.c.l.s4 1934713408
      %v1789 = vunpack.c.0.s8 %v1788
      %v1790 = vlaneseq
      %v1791 = vshrl.u32 %v1790, 7
      %v1792 = vsub.s32 %v1789, %v1791
      %v1793 = vrot.slane %v1785, %v1792
      %v1795 = vunpack.c.l.s4 1934713408
      %v1796 = vunpack.c.0.s8 %v1795
      %v1797 = vlaneseq
      %v1798 = vshrl.u32 %v1797, 7
      %v1799 = vsub.s32 %v1796, %v1798
      %v1800 = vrot.slane %v1786, %v1799
      %v1801 = vcombine.low %v1736, %v1752
      %v1802 = vcombine.high %v1736, %v1752
      %v1804 = vunpack.c.l.s4 1934713408
      %v1805 = vunpack.c.0.s8 %v1804
      %v1806 = vlaneseq
      %v1807 = vshrl.u32 %v1806, 7
      %v1808 = vsub.s32 %v1805, %v1807
      %v1809 = vrot.slane %v1801, %v1808
      %v1811 = vunpack.c.l.s4 1934713408
      %v1812 = vunpack.c.0.s8 %v1811
      %v1813 = vlaneseq
      %v1814 = vshrl.u32 %v1813, 7
      %v1815 = vsub.s32 %v1812, %v1814
      %v1816 = vrot.slane %v1802, %v1815
      %v1817 = vcombine.low %v1761, %v1777
      %v1818 = vcombine.high %v1761, %v1777
      %v1820 = vunpack.c.l.s4 1934713408
      %v1821 = vunpack.c.0.s8 %v1820
      %v1822 = vlaneseq
      %v1823 = vshrl.u32 %v1822, 7
      %v1824 = vsub.s32 %v1821, %v1823
      %v1825 = vrot.slane %v1817, %v1824
      %v1827 = vunpack.c.l.s4 1934713408
      %v1828 = vunpack.c.0.s8 %v1827
      %v1829 = vlaneseq
      %v1830 = vshrl.u32 %v1829, 7
      %v1831 = vsub.s32 %v1828, %v1830
      %v1832 = vrot.slane %v1818, %v1831
      %v1833 = vcombine.low %v1768, %v1784
      %v1834 = vcombine.high %v1768, %v1784
      %v1836 = vunpack.c.l.s4 1934713408
      %v1837 = vunpack.c.0.s8 %v1836
      %v1838 = vlaneseq
      %v1839 = vshrl.u32 %v1838, 7
      %v1840 = vsub.s32 %v1837, %v1839
      %v1841 = vrot.slane %v1833, %v1840
      %v1843 = vunpack.c.l.s4 1934713408
      %v1844 = vunpack.c.0.s8 %v1843
      %v1845 = vlaneseq
      %v1846 = vshrl.u32 %v1845, 7
      %v1847 = vsub.s32 %v1844, %v1846
      %v1848 = vrot.slane %v1834, %v1847
      %v1849 = vcombine.low %v1793, %v1825
      %v1850 = vcombine.high %v1793, %v1825
      %v1851 = vcombine.low %v1800, %v1832
      %v1852 = vcombine.high %v1800, %v1832
      %v1853 = vcombine.low %v1809, %v1841
      %v1854 = vcombine.high %v1809, %v1841
      %v1855 = vcombine.low %v1816, %v1848
      %v1856 = vcombine.high %v1816, %v1848
      %1857 = vxpose.xlu0.b32.start [1/16] %v1713, 128
      %1858 = vxpose.xlu0.b32.cont [2/16] %v1849, 128
      %1859 = vxpose.xlu0.b32.cont [3/16] 0.0, 128
      %1860 = vxpose.xlu0.b32.cont [4/16] 0.0, 128
      %1861 = vxpose.xlu0.b32.cont [5/16] 0.0, 128
      %1862 = vxpose.xlu0.b32.cont [6/16] 0.0, 128
      %1863 = vxpose.xlu0.b32.cont [7/16] 0.0, 128
      %1864 = vxpose.xlu0.b32.cont [8/16] 0.0, 128
      %1865 = vxpose.xlu0.b32.cont [9/16] 0.0, 128
      %1866 = vxpose.xlu0.b32.cont [10/16] 0.0, 128
      %1867 = vxpose.xlu0.b32.cont [11/16] 0.0, 128
      %1868 = vxpose.xlu0.b32.cont [12/16] 0.0, 128
      %1869 = vxpose.xlu0.b32.cont [13/16] 0.0, 128
      %1870 = vxpose.xlu0.b32.cont [14/16] 0.0, 128
      %1871 = vxpose.xlu0.b32.cont [15/16] 0.0, 128
      %1872 = vxpose.xlu0.b32.end [16/16] 0.0, 128
      %v1873 = vpop.trf.xlu0
      %v1874 = vpop.trf.xlu0
      %v1875 = vpop.trf.xlu0
      %v1876 = vpop.trf.xlu0
      %v1877 = vpop.trf.xlu0
      %v1878 = vpop.trf.xlu0
      %v1879 = vpop.trf.xlu0
      %v1880 = vpop.trf.xlu0
      %v1881 = vpop.trf.xlu0
      %v1882 = vpop.trf.xlu0
      %v1883 = vpop.trf.xlu0
      %v1884 = vpop.trf.xlu0
      %v1885 = vpop.trf.xlu0
      %v1886 = vpop.trf.xlu0
      %v1887 = vpop.trf.xlu0
      %v1888 = vpop.trf.xlu0
      %1889 = vxpose.xlu0.b32.start [1/16] %v1714, 128
      %1890 = vxpose.xlu0.b32.cont [2/16] %v1850, 128
      %1891 = vxpose.xlu0.b32.cont [3/16] 0.0, 128
      %1892 = vxpose.xlu0.b32.cont [4/16] 0.0, 128
      %1893 = vxpose.xlu0.b32.cont [5/16] 0.0, 128
      %1894 = vxpose.xlu0.b32.cont [6/16] 0.0, 128
      %1895 = vxpose.xlu0.b32.cont [7/16] 0.0, 128
      %1896 = vxpose.xlu0.b32.cont [8/16] 0.0, 128
      %1897 = vxpose.xlu0.b32.cont [9/16] 0.0, 128
      %1898 = vxpose.xlu0.b32.cont [10/16] 0.0, 128
      %1899 = vxpose.xlu0.b32.cont [11/16] 0.0, 128
      %1900 = vxpose.xlu0.b32.cont [12/16] 0.0, 128
      %1901 = vxpose.xlu0.b32.cont [13/16] 0.0, 128
      %1902 = vxpose.xlu0.b32.cont [14/16] 0.0, 128
      %1903 = vxpose.xlu0.b32.cont [15/16] 0.0, 128
      %1904 = vxpose.xlu0.b32.end [16/16] 0.0, 128
      %v1905 = vpop.trf.xlu0
      %v1906 = vpop.trf.xlu0
      %v1907 = vpop.trf.xlu0
      %v1908 = vpop.trf.xlu0
      %v1909 = vpop.trf.xlu0
      %v1910 = vpop.trf.xlu0
      %v1911 = vpop.trf.xlu0
      %v1912 = vpop.trf.xlu0
      %v1913 = vpop.trf.xlu0
      %v1914 = vpop.trf.xlu0
      %v1915 = vpop.trf.xlu0
      %v1916 = vpop.trf.xlu0
      %v1917 = vpop.trf.xlu0
      %v1918 = vpop.trf.xlu0
      %v1919 = vpop.trf.xlu0
      %v1920 = vpop.trf.xlu0
      %1921 = vxpose.xlu0.b32.start [1/16] %v1715, 128
      %1922 = vxpose.xlu0.b32.cont [2/16] %v1851, 128
      %1923 = vxpose.xlu0.b32.cont [3/16] 0.0, 128
      %1924 = vxpose.xlu0.b32.cont [4/16] 0.0, 128
      %1925 = vxpose.xlu0.b32.cont [5/16] 0.0, 128
      %1926 = vxpose.xlu0.b32.cont [6/16] 0.0, 128
      %1927 = vxpose.xlu0.b32.cont [7/16] 0.0, 128
      %1928 = vxpose.xlu0.b32.cont [8/16] 0.0, 128
      %1929 = vxpose.xlu0.b32.cont [9/16] 0.0, 128
      %1930 = vxpose.xlu0.b32.cont [10/16] 0.0, 128
      %1931 = vxpose.xlu0.b32.cont [11/16] 0.0, 128
      %1932 = vxpose.xlu0.b32.cont [12/16] 0.0, 128
      %1933 = vxpose.xlu0.b32.cont [13/16] 0.0, 128
      %1934 = vxpose.xlu0.b32.cont [14/16] 0.0, 128
      %1935 = vxpose.xlu0.b32.cont [15/16] 0.0, 128
      %1936 = vxpose.xlu0.b32.end [16/16] 0.0, 128
      %v1937 = vpop.trf.xlu0
      %v1938 = vpop.trf.xlu0
      %v1939 = vpop.trf.xlu0
      %v1940 = vpop.trf.xlu0
      %v1941 = vpop.trf.xlu0
      %v1942 = vpop.trf.xlu0
      %v1943 = vpop.trf.xlu0
      %v1944 = vpop.trf.xlu0
      %v1945 = vpop.trf.xlu0
      %v1946 = vpop.trf.xlu0
      %v1947 = vpop.trf.xlu0
      %v1948 = vpop.trf.xlu0
      %v1949 = vpop.trf.xlu0
      %v1950 = vpop.trf.xlu0
      %v1951 = vpop.trf.xlu0
      %v1952 = vpop.trf.xlu0
      %1953 = vxpose.xlu0.b32.start [1/16] %v1716, 128
      %1954 = vxpose.xlu0.b32.cont [2/16] %v1852, 128
      %1955 = vxpose.xlu0.b32.cont [3/16] 0.0, 128
      %1956 = vxpose.xlu0.b32.cont [4/16] 0.0, 128
      %1957 = vxpose.xlu0.b32.cont [5/16] 0.0, 128
      %1958 = vxpose.xlu0.b32.cont [6/16] 0.0, 128
      %1959 = vxpose.xlu0.b32.cont [7/16] 0.0, 128
      %1960 = vxpose.xlu0.b32.cont [8/16] 0.0, 128
      %1961 = vxpose.xlu0.b32.cont [9/16] 0.0, 128
      %1962 = vxpose.xlu0.b32.cont [10/16] 0.0, 128
      %1963 = vxpose.xlu0.b32.cont [11/16] 0.0, 128
      %1964 = vxpose.xlu0.b32.cont [12/16] 0.0, 128
      %1965 = vxpose.xlu0.b32.cont [13/16] 0.0, 128
      %1966 = vxpose.xlu0.b32.cont [14/16] 0.0, 128
      %1967 = vxpose.xlu0.b32.cont [15/16] 0.0, 128
      %1968 = vxpose.xlu0.b32.end [16/16] 0.0, 128
      %v1969 = vpop.trf.xlu0
      %v1970 = vpop.trf.xlu0
      %v1971 = vpop.trf.xlu0
      %v1972 = vpop.trf.xlu0
      %v1973 = vpop.trf.xlu0
      %v1974 = vpop.trf.xlu0
      %v1975 = vpop.trf.xlu0
      %v1976 = vpop.trf.xlu0
      %v1977 = vpop.trf.xlu0
      %v1978 = vpop.trf.xlu0
      %v1979 = vpop.trf.xlu0
      %v1980 = vpop.trf.xlu0
      %v1981 = vpop.trf.xlu0
      %v1982 = vpop.trf.xlu0
      %v1983 = vpop.trf.xlu0
      %v1984 = vpop.trf.xlu0
      %1985 = vxpose.xlu0.b32.start [1/16] %v1717, 128
      %1986 = vxpose.xlu0.b32.cont [2/16] %v1853, 128
      %1987 = vxpose.xlu0.b32.cont [3/16] 0.0, 128
      %1988 = vxpose.xlu0.b32.cont [4/16] 0.0, 128
      %1989 = vxpose.xlu0.b32.cont [5/16] 0.0, 128
      %1990 = vxpose.xlu0.b32.cont [6/16] 0.0, 128
      %1991 = vxpose.xlu0.b32.cont [7/16] 0.0, 128
      %1992 = vxpose.xlu0.b32.cont [8/16] 0.0, 128
      %1993 = vxpose.xlu0.b32.cont [9/16] 0.0, 128
      %1994 = vxpose.xlu0.b32.cont [10/16] 0.0, 128
      %1995 = vxpose.xlu0.b32.cont [11/16] 0.0, 128
      %1996 = vxpose.xlu0.b32.cont [12/16] 0.0, 128
      %1997 = vxpose.xlu0.b32.cont [13/16] 0.0, 128
      %1998 = vxpose.xlu0.b32.cont [14/16] 0.0, 128
      %1999 = vxpose.xlu0.b32.cont [15/16] 0.0, 128
      %2000 = vxpose.xlu0.b32.end [16/16] 0.0, 128
      %v2001 = vpop.trf.xlu0
      %v2002 = vpop.trf.xlu0
      %v2003 = vpop.trf.xlu0
      %v2004 = vpop.trf.xlu0
      %v2005 = vpop.trf.xlu0
      %v2006 = vpop.trf.xlu0
      %v2007 = vpop.trf.xlu0
      %v2008 = vpop.trf.xlu0
      %v2009 = vpop.trf.xlu0
      %v2010 = vpop.trf.xlu0
      %v2011 = vpop.trf.xlu0
      %v2012 = vpop.trf.xlu0
      %v2013 = vpop.trf.xlu0
      %v2014 = vpop.trf.xlu0
      %v2015 = vpop.trf.xlu0
      %v2016 = vpop.trf.xlu0
      %2017 = vxpose.xlu0.b32.start [1/16] %v1718, 128
      %2018 = vxpose.xlu0.b32.cont [2/16] %v1854, 128
      %2019 = vxpose.xlu0.b32.cont [3/16] 0.0, 128
      %2020 = vxpose.xlu0.b32.cont [4/16] 0.0, 128
      %2021 = vxpose.xlu0.b32.cont [5/16] 0.0, 128
      %2022 = vxpose.xlu0.b32.cont [6/16] 0.0, 128
      %2023 = vxpose.xlu0.b32.cont [7/16] 0.0, 128
      %2024 = vxpose.xlu0.b32.cont [8/16] 0.0, 128
      %2025 = vxpose.xlu0.b32.cont [9/16] 0.0, 128
      %2026 = vxpose.xlu0.b32.cont [10/16] 0.0, 128
      %2027 = vxpose.xlu0.b32.cont [11/16] 0.0, 128
      %2028 = vxpose.xlu0.b32.cont [12/16] 0.0, 128
      %2029 = vxpose.xlu0.b32.cont [13/16] 0.0, 128
      %2030 = vxpose.xlu0.b32.cont [14/16] 0.0, 128
      %2031 = vxpose.xlu0.b32.cont [15/16] 0.0, 128
      %2032 = vxpose.xlu0.b32.end [16/16] 0.0, 128
      %v2033 = vpop.trf.xlu0
      %v2034 = vpop.trf.xlu0
      %v2035 = vpop.trf.xlu0
      %v2036 = vpop.trf.xlu0
      %v2037 = vpop.trf.xlu0
      %v2038 = vpop.trf.xlu0
      %v2039 = vpop.trf.xlu0
      %v2040 = vpop.trf.xlu0
      %v2041 = vpop.trf.xlu0
      %v2042 = vpop.trf.xlu0
      %v2043 = vpop.trf.xlu0
      %v2044 = vpop.trf.xlu0
      %v2045 = vpop.trf.xlu0
      %v2046 = vpop.trf.xlu0
      %v2047 = vpop.trf.xlu0
      %v2048 = vpop.trf.xlu0
      %2049 = vxpose.xlu0.b32.start [1/16] %v1719, 128
      %2050 = vxpose.xlu0.b32.cont [2/16] %v1855, 128
      %2051 = vxpose.xlu0.b32.cont [3/16] 0.0, 128
      %2052 = vxpose.xlu0.b32.cont [4/16] 0.0, 128
      %2053 = vxpose.xlu0.b32.cont [5/16] 0.0, 128
      %2054 = vxpose.xlu0.b32.cont [6/16] 0.0, 128
      %2055 = vxpose.xlu0.b32.cont [7/16] 0.0, 128
      %2056 = vxpose.xlu0.b32.cont [8/16] 0.0, 128
      %2057 = vxpose.xlu0.b32.cont [9/16] 0.0, 128
      %2058 = vxpose.xlu0.b32.cont [10/16] 0.0, 128
      %2059 = vxpose.xlu0.b32.cont [11/16] 0.0, 128
      %2060 = vxpose.xlu0.b32.cont [12/16] 0.0, 128
      %2061 = vxpose.xlu0.b32.cont [13/16] 0.0, 128
      %2062 = vxpose.xlu0.b32.cont [14/16] 0.0, 128
      %2063 = vxpose.xlu0.b32.cont [15/16] 0.0, 128
      %2064 = vxpose.xlu0.b32.end [16/16] 0.0, 128
      %v2065 = vpop.trf.xlu0
      %v2066 = vpop.trf.xlu0
      %v2067 = vpop.trf.xlu0
      %v2068 = vpop.trf.xlu0
      %v2069 = vpop.trf.xlu0
      %v2070 = vpop.trf.xlu0
      %v2071 = vpop.trf.xlu0
      %v2072 = vpop.trf.xlu0
      %v2073 = vpop.trf.xlu0
      %v2074 = vpop.trf.xlu0
      %v2075 = vpop.trf.xlu0
      %v2076 = vpop.trf.xlu0
      %v2077 = vpop.trf.xlu0
      %v2078 = vpop.trf.xlu0
      %v2079 = vpop.trf.xlu0
      %v2080 = vpop.trf.xlu0
      %2081 = vxpose.xlu0.b32.start [1/16] %v1720, 128
      %2082 = vxpose.xlu0.b32.cont [2/16] %v1856, 128
      %2083 = vxpose.xlu0.b32.cont [3/16] 0.0, 128
      %2084 = vxpose.xlu0.b32.cont [4/16] 0.0, 128
      %2085 = vxpose.xlu0.b32.cont [5/16] 0.0, 128
      %2086 = vxpose.xlu0.b32.cont [6/16] 0.0, 128
      %2087 = vxpose.xlu0.b32.cont [7/16] 0.0, 128
      %2088 = vxpose.xlu0.b32.cont [8/16] 0.0, 128
      %2089 = vxpose.xlu0.b32.cont [9/16] 0.0, 128
      %2090 = vxpose.xlu0.b32.cont [10/16] 0.0, 128
      %2091 = vxpose.xlu0.b32.cont [11/16] 0.0, 128
      %2092 = vxpose.xlu0.b32.cont [12/16] 0.0, 128
      %2093 = vxpose.xlu0.b32.cont [13/16] 0.0, 128
      %2094 = vxpose.xlu0.b32.cont [14/16] 0.0, 128
      %2095 = vxpose.xlu0.b32.cont [15/16] 0.0, 128
      %2096 = vxpose.xlu0.b32.end [16/16] 0.0, 128
      %v2097 = vpop.trf.xlu0
      %v2098 = vpop.trf.xlu0
      %v2099 = vpop.trf.xlu0
      %v2100 = vpop.trf.xlu0
      %v2101 = vpop.trf.xlu0
      %v2102 = vpop.trf.xlu0
      %v2103 = vpop.trf.xlu0
      %v2104 = vpop.trf.xlu0
      %v2105 = vpop.trf.xlu0
      %v2106 = vpop.trf.xlu0
      %v2107 = vpop.trf.xlu0
      %v2108 = vpop.trf.xlu0
      %v2109 = vpop.trf.xlu0
      %v2110 = vpop.trf.xlu0
      %v2111 = vpop.trf.xlu0
      %v2112 = vpop.trf.xlu0
      %v2113 = vcombine.low %v1873, %v1937
      %v2115 = vunpack.c.l.s4 1983009808
      %v2116 = vunpack.c.0.s8 %v2115
      %v2117 = vlaneseq
      %v2118 = vshrl.u32 %v2117, 7
      %v2119 = vsub.s32 %v2116, %v2118
      %v2120 = vrot.slane %v2113, %v2119
      %v2121 = vcombine.low %v1905, %v1969
      %v2123 = vunpack.c.l.s4 1983009808
      %v2124 = vunpack.c.0.s8 %v2123
      %v2125 = vlaneseq
      %v2126 = vshrl.u32 %v2125, 7
      %v2127 = vsub.s32 %v2124, %v2126
      %v2128 = vrot.slane %v2121, %v2127
      %v2129 = vcombine.low %v2001, %v2065
      %v2131 = vunpack.c.l.s4 1983009808
      %v2132 = vunpack.c.0.s8 %v2131
      %v2133 = vlaneseq
      %v2134 = vshrl.u32 %v2133, 7
      %v2135 = vsub.s32 %v2132, %v2134
      %v2136 = vrot.slane %v2129, %v2135
      %v2137 = vcombine.low %v2033, %v2097
      %v2139 = vunpack.c.l.s4 1983009808
      %v2140 = vunpack.c.0.s8 %v2139
      %v2141 = vlaneseq
      %v2142 = vshrl.u32 %v2141, 7
      %v2143 = vsub.s32 %v2140, %v2142
      %v2144 = vrot.slane %v2137, %v2143
      %v2145 = vcombine.low %v2120, %v2128
      %v2146 = vcombine.high %v2120, %v2128
      %v2148 = vunpack.c.l.s4 1934713408
      %v2149 = vunpack.c.0.s8 %v2148
      %v2150 = vlaneseq
      %v2151 = vshrl.u32 %v2150, 7
      %v2152 = vsub.s32 %v2149, %v2151
      %v2153 = vrot.slane %v2145, %v2152
      %v2155 = vunpack.c.l.s4 1934713408
      %v2156 = vunpack.c.0.s8 %v2155
      %v2157 = vlaneseq
      %v2158 = vshrl.u32 %v2157, 7
      %v2159 = vsub.s32 %v2156, %v2158
      %v2160 = vrot.slane %v2146, %v2159
      %v2161 = vcombine.low %v2136, %v2144
      %v2162 = vcombine.high %v2136, %v2144
      %v2164 = vunpack.c.l.s4 1934713408
      %v2165 = vunpack.c.0.s8 %v2164
      %v2166 = vlaneseq
      %v2167 = vshrl.u32 %v2166, 7
      %v2168 = vsub.s32 %v2165, %v2167
      %v2169 = vrot.slane %v2161, %v2168
      %v2171 = vunpack.c.l.s4 1934713408
      %v2172 = vunpack.c.0.s8 %v2171
      %v2173 = vlaneseq
      %v2174 = vshrl.u32 %v2173, 7
      %v2175 = vsub.s32 %v2172, %v2174
      %v2176 = vrot.slane %v2162, %v2175
      %v2177 = vcombine.low %v2153, %v2169
      %v2178 = vcombine.high %v2153, %v2169
      %v2179 = vcombine.low %v2160, %v2176
      %v2180 = vcombine.high %v2160, %v2176
      %2181 = vrot.lane.b32.xlu0 %v615, 64
      %v2182 = vpop.permute.xlu0 %2181
      %2183 = vrot.lane.b32.xlu0 %v618, 64
      %v2184 = vpop.permute.xlu0 %2183
      %2185 = vrot.lane.b32.xlu0 %v624, 64
      %v2186 = vpop.permute.xlu0 %2185
      %2187 = vrot.lane.b32.xlu0 %v626, 64
      %v2188 = vpop.permute.xlu0 %2187
      %2189 = vrot.lane.b32.xlu0 %v630, 64
      %v2190 = vpop.permute.xlu0 %2189
      %2191 = vrot.lane.b32.xlu0 %v632, 64
      %v2192 = vpop.permute.xlu0 %2191
      %2193 = vrot.lane.b32.xlu0 %v636, 64
      %v2194 = vpop.permute.xlu0 %2193
      %2195 = vrot.lane.b32.xlu0 %v638, 64
      %v2196 = vpop.permute.xlu0 %2195
      %v2205 = vcombine.low %v2182, %v2190
      %v2206 = vcombine.high %v2182, %v2190
      %v2208 = vunpack.c.l.s4 1983009808
      %v2209 = vunpack.c.0.s8 %v2208
      %v2210 = vlaneseq
      %v2211 = vshrl.u32 %v2210, 7
      %v2212 = vsub.s32 %v2209, %v2211
      %v2213 = vrot.slane %v2205, %v2212
      %v2215 = vunpack.c.l.s4 1983009808
      %v2216 = vunpack.c.0.s8 %v2215
      %v2217 = vlaneseq
      %v2218 = vshrl.u32 %v2217, 7
      %v2219 = vsub.s32 %v2216, %v2218
      %v2220 = vrot.slane %v2206, %v2219
      %v2221 = vcombine.low %v2186, %v2194
      %v2222 = vcombine.high %v2186, %v2194
      %v2224 = vunpack.c.l.s4 1983009808
      %v2225 = vunpack.c.0.s8 %v2224
      %v2226 = vlaneseq
      %v2227 = vshrl.u32 %v2226, 7
      %v2228 = vsub.s32 %v2225, %v2227
      %v2229 = vrot.slane %v2221, %v2228
      %v2231 = vunpack.c.l.s4 1983009808
      %v2232 = vunpack.c.0.s8 %v2231
      %v2233 = vlaneseq
      %v2234 = vshrl.u32 %v2233, 7
      %v2235 = vsub.s32 %v2232, %v2234
      %v2236 = vrot.slane %v2222, %v2235
      %v2237 = vcombine.low %v2213, %v2229
      %v2238 = vcombine.high %v2213, %v2229
      %v2240 = vunpack.c.l.s4 1934713408
      %v2241 = vunpack.c.0.s8 %v2240
      %v2242 = vlaneseq
      %v2243 = vshrl.u32 %v2242, 7
      %v2244 = vsub.s32 %v2241, %v2243
      %v2245 = vrot.slane %v2237, %v2244
      %v2247 = vunpack.c.l.s4 1934713408
      %v2248 = vunpack.c.0.s8 %v2247
      %v2249 = vlaneseq
      %v2250 = vshrl.u32 %v2249, 7
      %v2251 = vsub.s32 %v2248, %v2250
      %v2252 = vrot.slane %v2238, %v2251
      %v2253 = vcombine.low %v2220, %v2236
      %v2254 = vcombine.high %v2220, %v2236
      %v2256 = vunpack.c.l.s4 1934713408
      %v2257 = vunpack.c.0.s8 %v2256
      %v2258 = vlaneseq
      %v2259 = vshrl.u32 %v2258, 7
      %v2260 = vsub.s32 %v2257, %v2259
      %v2261 = vrot.slane %v2253, %v2260
      %v2263 = vunpack.c.l.s4 1934713408
      %v2264 = vunpack.c.0.s8 %v2263
      %v2265 = vlaneseq
      %v2266 = vshrl.u32 %v2265, 7
      %v2267 = vsub.s32 %v2264, %v2266
      %v2268 = vrot.slane %v2254, %v2267
      %v2269 = vcombine.high %v2245, 0.0
      %v2270 = vcombine.high %v2252, 0.0
      %v2271 = vcombine.high %v2261, 0.0
      %v2272 = vcombine.high %v2268, 0.0
      %v2273 = vcombine.low %v2184, %v2192
      %v2274 = vcombine.high %v2184, %v2192
      %v2276 = vunpack.c.l.s4 1983009808
      %v2277 = vunpack.c.0.s8 %v2276
      %v2278 = vlaneseq
      %v2279 = vshrl.u32 %v2278, 7
      %v2280 = vsub.s32 %v2277, %v2279
      %v2281 = vrot.slane %v2273, %v2280
      %v2283 = vunpack.c.l.s4 1983009808
      %v2284 = vunpack.c.0.s8 %v2283
      %v2285 = vlaneseq
      %v2286 = vshrl.u32 %v2285, 7
      %v2287 = vsub.s32 %v2284, %v2286
      %v2288 = vrot.slane %v2274, %v2287
      %v2289 = vcombine.low %v2188, %v2196
      %v2290 = vcombine.high %v2188, %v2196
      %v2292 = vunpack.c.l.s4 1983009808
      %v2293 = vunpack.c.0.s8 %v2292
      %v2294 = vlaneseq
      %v2295 = vshrl.u32 %v2294, 7
      %v2296 = vsub.s32 %v2293, %v2295
      %v2297 = vrot.slane %v2289, %v2296
      %v2299 = vunpack.c.l.s4 1983009808
      %v2300 = vunpack.c.0.s8 %v2299
      %v2301 = vlaneseq
      %v2302 = vshrl.u32 %v2301, 7
      %v2303 = vsub.s32 %v2300, %v2302
      %v2304 = vrot.slane %v2290, %v2303
      %v2305 = vcombine.low %v2281, %v2297
      %v2306 = vcombine.high %v2281, %v2297
      %v2308 = vunpack.c.l.s4 1934713408
      %v2309 = vunpack.c.0.s8 %v2308
      %v2310 = vlaneseq
      %v2311 = vshrl.u32 %v2310, 7
      %v2312 = vsub.s32 %v2309, %v2311
      %v2313 = vrot.slane %v2305, %v2312
      %v2315 = vunpack.c.l.s4 1934713408
      %v2316 = vunpack.c.0.s8 %v2315
      %v2317 = vlaneseq
      %v2318 = vshrl.u32 %v2317, 7
      %v2319 = vsub.s32 %v2316, %v2318
      %v2320 = vrot.slane %v2306, %v2319
      %v2321 = vcombine.low %v2288, %v2304
      %v2322 = vcombine.high %v2288, %v2304
      %v2324 = vunpack.c.l.s4 1934713408
      %v2325 = vunpack.c.0.s8 %v2324
      %v2326 = vlaneseq
      %v2327 = vshrl.u32 %v2326, 7
      %v2328 = vsub.s32 %v2325, %v2327
      %v2329 = vrot.slane %v2321, %v2328
      %v2331 = vunpack.c.l.s4 1934713408
      %v2332 = vunpack.c.0.s8 %v2331
      %v2333 = vlaneseq
      %v2334 = vshrl.u32 %v2333, 7
      %v2335 = vsub.s32 %v2332, %v2334
      %v2336 = vrot.slane %v2322, %v2335
      %v2337 = vcombine.high %v2313, 0.0
      %v2338 = vcombine.high %v2320, 0.0
      %v2339 = vcombine.high %v2329, 0.0
      %v2340 = vcombine.high %v2336, 0.0
      %v2341 = vcombine.low %v2245, %v2252
      %v2343 = vunpack.c.l.s4 1983009808
      %v2344 = vunpack.c.0.s8 %v2343
      %v2345 = vlaneseq
      %v2346 = vshrl.u32 %v2345, 7
      %v2347 = vsub.s32 %v2344, %v2346
      %v2348 = vrot.slane %v2341, %v2347
      %v2349 = vcombine.low %v2269, %v2270
      %v2351 = vunpack.c.l.s4 1983009808
      %v2352 = vunpack.c.0.s8 %v2351
      %v2353 = vlaneseq
      %v2354 = vshrl.u32 %v2353, 7
      %v2355 = vsub.s32 %v2352, %v2354
      %v2356 = vrot.slane %v2349, %v2355
      %v2357 = vcombine.low %v2261, %v2268
      %v2359 = vunpack.c.l.s4 1983009808
      %v2360 = vunpack.c.0.s8 %v2359
      %v2361 = vlaneseq
      %v2362 = vshrl.u32 %v2361, 7
      %v2363 = vsub.s32 %v2360, %v2362
      %v2364 = vrot.slane %v2357, %v2363
      %v2365 = vcombine.low %v2271, %v2272
      %v2367 = vunpack.c.l.s4 1983009808
      %v2368 = vunpack.c.0.s8 %v2367
      %v2369 = vlaneseq
      %v2370 = vshrl.u32 %v2369, 7
      %v2371 = vsub.s32 %v2368, %v2370
      %v2372 = vrot.slane %v2365, %v2371
      %v2373 = vcombine.low %v2348, %v2356
      %v2374 = vcombine.high %v2348, %v2356
      %v2376 = vunpack.c.l.s4 1934713408
      %v2377 = vunpack.c.0.s8 %v2376
      %v2378 = vlaneseq
      %v2379 = vshrl.u32 %v2378, 7
      %v2380 = vsub.s32 %v2377, %v2379
      %v2381 = vrot.slane %v2373, %v2380
      %v2383 = vunpack.c.l.s4 1934713408
      %v2384 = vunpack.c.0.s8 %v2383
      %v2385 = vlaneseq
      %v2386 = vshrl.u32 %v2385, 7
      %v2387 = vsub.s32 %v2384, %v2386
      %v2388 = vrot.slane %v2374, %v2387
      %v2389 = vcombine.low %v2364, %v2372
      %v2390 = vcombine.high %v2364, %v2372
      %v2392 = vunpack.c.l.s4 1934713408
      %v2393 = vunpack.c.0.s8 %v2392
      %v2394 = vlaneseq
      %v2395 = vshrl.u32 %v2394, 7
      %v2396 = vsub.s32 %v2393, %v2395
      %v2397 = vrot.slane %v2389, %v2396
      %v2399 = vunpack.c.l.s4 1934713408
      %v2400 = vunpack.c.0.s8 %v2399
      %v2401 = vlaneseq
      %v2402 = vshrl.u32 %v2401, 7
      %v2403 = vsub.s32 %v2400, %v2402
      %v2404 = vrot.slane %v2390, %v2403
      %v2405 = vcombine.low %v2381, %v2397
      %v2406 = vcombine.high %v2381, %v2397
      %v2407 = vcombine.low %v2388, %v2404
      %v2408 = vcombine.high %v2388, %v2404
      %v2409 = vcombine.low %v2313, %v2320
      %v2411 = vunpack.c.l.s4 1983009808
      %v2412 = vunpack.c.0.s8 %v2411
      %v2413 = vlaneseq
      %v2414 = vshrl.u32 %v2413, 7
      %v2415 = vsub.s32 %v2412, %v2414
      %v2416 = vrot.slane %v2409, %v2415
      %v2417 = vcombine.low %v2337, %v2338
      %v2419 = vunpack.c.l.s4 1983009808
      %v2420 = vunpack.c.0.s8 %v2419
      %v2421 = vlaneseq
      %v2422 = vshrl.u32 %v2421, 7
      %v2423 = vsub.s32 %v2420, %v2422
      %v2424 = vrot.slane %v2417, %v2423
      %v2425 = vcombine.low %v2329, %v2336
      %v2427 = vunpack.c.l.s4 1983009808
      %v2428 = vunpack.c.0.s8 %v2427
      %v2429 = vlaneseq
      %v2430 = vshrl.u32 %v2429, 7
      %v2431 = vsub.s32 %v2428, %v2430
      %v2432 = vrot.slane %v2425, %v2431
      %v2433 = vcombine.low %v2339, %v2340
      %v2435 = vunpack.c.l.s4 1983009808
      %v2436 = vunpack.c.0.s8 %v2435
      %v2437 = vlaneseq
      %v2438 = vshrl.u32 %v2437, 7
      %v2439 = vsub.s32 %v2436, %v2438
      %v2440 = vrot.slane %v2433, %v2439
      %v2441 = vcombine.low %v2416, %v2424
      %v2442 = vcombine.high %v2416, %v2424
      %v2444 = vunpack.c.l.s4 1934713408
      %v2445 = vunpack.c.0.s8 %v2444
      %v2446 = vlaneseq
      %v2447 = vshrl.u32 %v2446, 7
      %v2448 = vsub.s32 %v2445, %v2447
      %v2449 = vrot.slane %v2441, %v2448
      %v2451 = vunpack.c.l.s4 1934713408
      %v2452 = vunpack.c.0.s8 %v2451
      %v2453 = vlaneseq
      %v2454 = vshrl.u32 %v2453, 7
      %v2455 = vsub.s32 %v2452, %v2454
      %v2456 = vrot.slane %v2442, %v2455
      %v2457 = vcombine.low %v2432, %v2440
      %v2458 = vcombine.high %v2432, %v2440
      %v2460 = vunpack.c.l.s4 1934713408
      %v2461 = vunpack.c.0.s8 %v2460
      %v2462 = vlaneseq
      %v2463 = vshrl.u32 %v2462, 7
      %v2464 = vsub.s32 %v2461, %v2463
      %v2465 = vrot.slane %v2457, %v2464
      %v2467 = vunpack.c.l.s4 1934713408
      %v2468 = vunpack.c.0.s8 %v2467
      %v2469 = vlaneseq
      %v2470 = vshrl.u32 %v2469, 7
      %v2471 = vsub.s32 %v2468, %v2470
      %v2472 = vrot.slane %v2458, %v2471
      %v2473 = vcombine.low %v2449, %v2465
      %v2474 = vcombine.high %v2449, %v2465
      %v2475 = vcombine.low %v2456, %v2472
      %v2476 = vcombine.high %v2456, %v2472
      %v2477 = vpack.c.bf16 %v909, %v841
      %v2478 = vpack.c.bf16 %v910, %v842
      %v2479 = vpack.c.bf16 %v911, %v843
      %v2480 = vpack.c.bf16 %v912, %v844
      %v2481 = vpack.c.bf16 %v2177, %v2177
      %v2482 = vpack.c.bf16 %v2178, %v2178
      %v2483 = vpack.c.bf16 %v2179, %v2179
      %v2484 = vpack.c.bf16 %v2180, %v2180
      %vm2485 = vcmask 64512
      %v2487 = vsel %vm2485, %v2477, 0
      %vm2489 = vcmask 1043456
      %v2491 = vsel %vm2489, %v2481, 0
      %2493 = vmatprep.subr.bf16.mxu0 0
      %2494 = vmatpush1.bf16.msra.mxu0 0
      %2495 = vmatprep.subr.bf16.mxu0 0
      %2496 = vmatpush1.bf16.msra.mxu0 0
      %2497 = vmatprep.subr.bf16.mxu0 0
      %2498 = vmatpush1.bf16.msra.mxu0 0
      %2499 = vmatprep.subr.bf16.mxu0 0
      %2500 = vmatpush1.bf16.msra.mxu0 0
      %2501 = vmatprep.subr.bf16.mxu0 0
      %2502 = vmatpush1.bf16.msra.mxu0 0
      %2503 = vmatprep.subr.bf16.mxu0 0
      %2504 = vmatpush1.bf16.msra.mxu0 0
      %2505 = vmatprep.subr.bf16.mxu0 0
      %2506 = vmatpush1.bf16.msra.mxu0 0
      %2507 = vmatprep.subr.bf16.mxu0 0
      %2508 = vmatpush1.bf16.msra.mxu0 %v2491
      %2509 = vmatprep.subr.bf16.mxu0 0
      %2510 = vmatpush2.bf16.msra.mxu0 0
      %2511 = vmatprep.subr.bf16.mxu0 0
      %2512 = vmatpush2.bf16.msra.mxu0 0
      %2513 = vmatprep.subr.bf16.mxu0 0
      %2514 = vmatpush2.bf16.msra.mxu0 0
      %2515 = vmatprep.subr.bf16.mxu0 0
      %2516 = vmatpush2.bf16.msra.mxu0 0
      %2517 = vmatprep.subr.bf16.mxu0 0
      %2518 = vmatpush2.bf16.msra.mxu0 0
      %2519 = vmatprep.subr.bf16.mxu0 0
      %2520 = vmatpush2.bf16.msra.mxu0 0
      %2521 = vmatprep.subr.bf16.mxu0 0
      %2522 = vmatpush2.bf16.msra.mxu0 0
      %2523 = vmatprep.subr.bf16.mxu0 0
      %2524 = vmatpush2.bf16.msra.mxu0 0
      %2525 = vmatprep.mubr.bf16.mxu0 0
      %2526 = vmatmul.mubr.bf16.gmra.mxu0 %v2487
      %v2527 = vpop.f32.mrf.mxu0
      %v2528 = vadd.f32 0.0, %v2527
      %v2529 = vpop.f32.mrf.mxu0
      %v2530 = vpop.f32.mrf.mxu0
      %v2531 = vadd.f32 0.0, %v2530
      %v2532 = vpop.f32.mrf.mxu0
      %2533 = vdwg.mxu0
      %v2535 = vsel %vm2485, %v2478, 0
      %v2538 = vsel %vm2489, %v2482, 0
      %2540 = vmatprep.subr.bf16.mxu0 0
      %2541 = vmatpush1.bf16.msra.mxu0 0
      %2542 = vmatprep.subr.bf16.mxu0 0
      %2543 = vmatpush1.bf16.msra.mxu0 0
      %2544 = vmatprep.subr.bf16.mxu0 0
      %2545 = vmatpush1.bf16.msra.mxu0 0
      %2546 = vmatprep.subr.bf16.mxu0 0
      %2547 = vmatpush1.bf16.msra.mxu0 0
      %2548 = vmatprep.subr.bf16.mxu0 0
      %2549 = vmatpush1.bf16.msra.mxu0 0
      %2550 = vmatprep.subr.bf16.mxu0 0
      %2551 = vmatpush1.bf16.msra.mxu0 0
      %2552 = vmatprep.subr.bf16.mxu0 0
      %2553 = vmatpush1.bf16.msra.mxu0 0
      %2554 = vmatprep.subr.bf16.mxu0 0
      %2555 = vmatpush1.bf16.msra.mxu0 %v2538
      %2556 = vmatprep.subr.bf16.mxu0 0
      %2557 = vmatpush2.bf16.msra.mxu0 0
      %2558 = vmatprep.subr.bf16.mxu0 0
      %2559 = vmatpush2.bf16.msra.mxu0 0
      %2560 = vmatprep.subr.bf16.mxu0 0
      %2561 = vmatpush2.bf16.msra.mxu0 0
      %2562 = vmatprep.subr.bf16.mxu0 0
      %2563 = vmatpush2.bf16.msra.mxu0 0
      %2564 = vmatprep.subr.bf16.mxu0 0
      %2565 = vmatpush2.bf16.msra.mxu0 0
      %2566 = vmatprep.subr.bf16.mxu0 0
      %2567 = vmatpush2.bf16.msra.mxu0 0
      %2568 = vmatprep.subr.bf16.mxu0 0
      %2569 = vmatpush2.bf16.msra.mxu0 0
      %2570 = vmatprep.subr.bf16.mxu0 0
      %2571 = vmatpush2.bf16.msra.mxu0 0
      %2572 = vmatprep.mubr.bf16.mxu0 0
      %2573 = vmatmul.mubr.bf16.gmra.mxu0 %v2535
      %v2574 = vpop.f32.mrf.mxu0
      %v2575 = vadd.f32 0.0, %v2574
      %v2576 = vpop.f32.mrf.mxu0
      %v2577 = vpop.f32.mrf.mxu0
      %v2578 = vadd.f32 0.0, %v2577
      %v2579 = vpop.f32.mrf.mxu0
      %2580 = vdwg.mxu0
      %v2582 = vsel %vm2485, %v2479, 0
      %v2585 = vsel %vm2489, %v2483, 0
      %2587 = vmatprep.subr.bf16.mxu0 0
      %2588 = vmatpush1.bf16.msra.mxu0 0
      %2589 = vmatprep.subr.bf16.mxu0 0
      %2590 = vmatpush1.bf16.msra.mxu0 0
      %2591 = vmatprep.subr.bf16.mxu0 0
      %2592 = vmatpush1.bf16.msra.mxu0 0
      %2593 = vmatprep.subr.bf16.mxu0 0
      %2594 = vmatpush1.bf16.msra.mxu0 0
      %2595 = vmatprep.subr.bf16.mxu0 0
      %2596 = vmatpush1.bf16.msra.mxu0 0
      %2597 = vmatprep.subr.bf16.mxu0 0
      %2598 = vmatpush1.bf16.msra.mxu0 0
      %2599 = vmatprep.subr.bf16.mxu0 0
      %2600 = vmatpush1.bf16.msra.mxu0 0
      %2601 = vmatprep.subr.bf16.mxu0 0
      %2602 = vmatpush1.bf16.msra.mxu0 %v2585
      %2603 = vmatprep.subr.bf16.mxu0 0
      %2604 = vmatpush2.bf16.msra.mxu0 0
      %2605 = vmatprep.subr.bf16.mxu0 0
      %2606 = vmatpush2.bf16.msra.mxu0 0
      %2607 = vmatprep.subr.bf16.mxu0 0
      %2608 = vmatpush2.bf16.msra.mxu0 0
      %2609 = vmatprep.subr.bf16.mxu0 0
      %2610 = vmatpush2.bf16.msra.mxu0 0
      %2611 = vmatprep.subr.bf16.mxu0 0
      %2612 = vmatpush2.bf16.msra.mxu0 0
      %2613 = vmatprep.subr.bf16.mxu0 0
      %2614 = vmatpush2.bf16.msra.mxu0 0
      %2615 = vmatprep.subr.bf16.mxu0 0
      %2616 = vmatpush2.bf16.msra.mxu0 0
      %2617 = vmatprep.subr.bf16.mxu0 0
      %2618 = vmatpush2.bf16.msra.mxu0 0
      %2619 = vmatprep.mubr.bf16.mxu0 0
      %2620 = vmatmul.mubr.bf16.gmra.mxu0 %v2582
      %v2621 = vpop.f32.mrf.mxu0
      %v2622 = vadd.f32 0.0, %v2621
      %v2623 = vpop.f32.mrf.mxu0
      %v2624 = vpop.f32.mrf.mxu0
      %v2625 = vadd.f32 0.0, %v2624
      %v2626 = vpop.f32.mrf.mxu0
      %2627 = vdwg.mxu0
      %v2629 = vsel %vm2485, %v2480, 0
      %v2632 = vsel %vm2489, %v2484, 0
      %2634 = vmatprep.subr.bf16.mxu0 0
      %2635 = vmatpush1.bf16.msra.mxu0 0
      %2636 = vmatprep.subr.bf16.mxu0 0
      %2637 = vmatpush1.bf16.msra.mxu0 0
      %2638 = vmatprep.subr.bf16.mxu0 0
      %2639 = vmatpush1.bf16.msra.mxu0 0
      %2640 = vmatprep.subr.bf16.mxu0 0
      %2641 = vmatpush1.bf16.msra.mxu0 0
      %2642 = vmatprep.subr.bf16.mxu0 0
      %2643 = vmatpush1.bf16.msra.mxu0 0
      %2644 = vmatprep.subr.bf16.mxu0 0
      %2645 = vmatpush1.bf16.msra.mxu0 0
      %2646 = vmatprep.subr.bf16.mxu0 0
      %2647 = vmatpush1.bf16.msra.mxu0 0
      %2648 = vmatprep.subr.bf16.mxu0 0
      %2649 = vmatpush1.bf16.msra.mxu0 %v2632
      %2650 = vmatprep.subr.bf16.mxu0 0
      %2651 = vmatpush2.bf16.msra.mxu0 0
      %2652 = vmatprep.subr.bf16.mxu0 0
      %2653 = vmatpush2.bf16.msra.mxu0 0
      %2654 = vmatprep.subr.bf16.mxu0 0
      %2655 = vmatpush2.bf16.msra.mxu0 0
      %2656 = vmatprep.subr.bf16.mxu0 0
      %2657 = vmatpush2.bf16.msra.mxu0 0
      %2658 = vmatprep.subr.bf16.mxu0 0
      %2659 = vmatpush2.bf16.msra.mxu0 0
      %2660 = vmatprep.subr.bf16.mxu0 0
      %2661 = vmatpush2.bf16.msra.mxu0 0
      %2662 = vmatprep.subr.bf16.mxu0 0
      %2663 = vmatpush2.bf16.msra.mxu0 0
      %2664 = vmatprep.subr.bf16.mxu0 0
      %2665 = vmatpush2.bf16.msra.mxu0 0
      %2666 = vmatprep.mubr.bf16.mxu0 0
      %2667 = vmatmul.mubr.bf16.gmra.mxu0 %v2629
      %v2668 = vpop.f32.mrf.mxu0
      %v2669 = vadd.f32 0.0, %v2668
      %v2670 = vpop.f32.mrf.mxu0
      %v2671 = vpop.f32.mrf.mxu0
      %v2672 = vadd.f32 0.0, %v2671
      %v2673 = vpop.f32.mrf.mxu0
      %2674 = vdwg.mxu0
      %v2675 = vmul.f32 %v2528, 0.35355338
      %v2676 = vmul.f32 %v2531, 0.35355338
      %v2677 = vmul.f32 %v2575, 0.35355338
      %v2678 = vmul.f32 %v2578, 0.35355338
      %v2679 = vmul.f32 %v2622, 0.35355338
      %v2680 = vmul.f32 %v2625, 0.35355338
      %v2681 = vmul.f32 %v2669, 0.35355338
      %v2682 = vmul.f32 %v2672, 0.35355338
      %v2683 = vld [vmem:[#allocation3] sm:$0xff]
      %v2684 = vld [vmem:[#allocation3 + $0x8] sm:$0xff]
      %v2685 = vadd.f32 %v2675, %v2683
      %v2686 = vadd.f32 %v2676, %v2684
      %v2687 = vadd.f32 %v2677, %v2683
      %v2688 = vadd.f32 %v2678, %v2684
      %v2689 = vadd.f32 %v2679, %v2683
      %v2690 = vadd.f32 %v2680, %v2684
      %v2691 = vadd.f32 %v2681, %v2683
      %v2692 = vadd.f32 %v2682, %v2684
      %vm2693 = vcmask 130048
      %v2694 = vsel %vm2693, %v2685, -inf
      %2695 = vmax.xlane.f32.xlu0 %v2694
      %v2696 = vpop.xlane.xlu0 %2695
      %v2697 = vsel %vm2693, %v2686, -inf
      %2698 = vmax.xlane.f32.xlu0 %v2697
      %v2699 = vpop.xlane.xlu0 %2698
      %v2700 = vsel %vm2693, %v2687, -inf
      %2701 = vmax.xlane.f32.xlu0 %v2700
      %v2702 = vpop.xlane.xlu0 %2701
      %v2703 = vsel %vm2693, %v2688, -inf
      %2704 = vmax.xlane.f32.xlu0 %v2703
      %v2705 = vpop.xlane.xlu0 %2704
      %v2706 = vsel %vm2693, %v2689, -inf
      %2707 = vmax.xlane.f32.xlu0 %v2706
      %v2708 = vpop.xlane.xlu0 %2707
      %v2709 = vsel %vm2693, %v2690, -inf
      %2710 = vmax.xlane.f32.xlu0 %v2709
      %v2711 = vpop.xlane.xlu0 %2710
      %v2712 = vsel %vm2693, %v2691, -inf
      %2713 = vmax.xlane.f32.xlu0 %v2712
      %v2714 = vpop.xlane.xlu0 %2713
      %v2715 = vsel %vm2693, %v2692, -inf
      %2716 = vmax.xlane.f32.xlu0 %v2715
      %v2717 = vpop.xlane.xlu0 %2716
      %v2718 = vsub.f32 %v2685, %v2696
      %v2719 = vsub.f32 %v2686, %v2699
      %v2720 = vsub.f32 %v2687, %v2702
      %v2721 = vsub.f32 %v2688, %v2705
      %v2722 = vsub.f32 %v2689, %v2708
      %v2723 = vsub.f32 %v2690, %v2711
      %v2724 = vsub.f32 %v2691, %v2714
      %v2725 = vsub.f32 %v2692, %v2717
      %v2726 = vmul.f32 %v2718, 1.442695
      %v2727 = vpow.pop %v2726
      %v2728 = vmul.f32 %v2719, 1.442695
      %v2729 = vpow.pop %v2728
      %v2730 = vmul.f32 %v2720, 1.442695
      %v2731 = vpow.pop %v2730
      %v2732 = vmul.f32 %v2721, 1.442695
      %v2733 = vpow.pop %v2732
      %v2734 = vmul.f32 %v2722, 1.442695
      %v2735 = vpow.pop %v2734
      %v2736 = vmul.f32 %v2723, 1.442695
      %v2737 = vpow.pop %v2736
      %v2738 = vmul.f32 %v2724, 1.442695
      %v2739 = vpow.pop %v2738
      %v2740 = vmul.f32 %v2725, 1.442695
      %v2741 = vpow.pop %v2740
      %v2742 = vsel %vm2693, %v2727, 0.0
      %2743 = vadd.xlane.f32.xlu0 %v2742
      %v2744 = vpop.xlane.xlu0 %2743
      %v2745 = vsel %vm2693, %v2729, 0.0
      %2746 = vadd.xlane.f32.xlu0 %v2745
      %v2747 = vpop.xlane.xlu0 %2746
      %v2748 = vsel %vm2693, %v2731, 0.0
      %2749 = vadd.xlane.f32.xlu0 %v2748
      %v2750 = vpop.xlane.xlu0 %2749
      %v2751 = vsel %vm2693, %v2733, 0.0
      %2752 = vadd.xlane.f32.xlu0 %v2751
      %v2753 = vpop.xlane.xlu0 %2752
      %v2754 = vsel %vm2693, %v2735, 0.0
      %2755 = vadd.xlane.f32.xlu0 %v2754
      %v2756 = vpop.xlane.xlu0 %2755
      %v2757 = vsel %vm2693, %v2737, 0.0
      %2758 = vadd.xlane.f32.xlu0 %v2757
      %v2759 = vpop.xlane.xlu0 %2758
      %v2760 = vsel %vm2693, %v2739, 0.0
      %2761 = vadd.xlane.f32.xlu0 %v2760
      %v2762 = vpop.xlane.xlu0 %2761
      %v2763 = vsel %vm2693, %v2741, 0.0
      %2764 = vadd.xlane.f32.xlu0 %v2763
      %v2765 = vpop.xlane.xlu0 %2764
      %v2766 = vrcp.pop %v2744
      %v2767 = vrcp.pop %v2747
      %v2768 = vrcp.pop %v2750
      %v2769 = vrcp.pop %v2753
      %v2770 = vrcp.pop %v2756
      %v2771 = vrcp.pop %v2759
      %v2772 = vrcp.pop %v2762
      %v2773 = vrcp.pop %v2765
      %v2774 = vmul.f32 %v2727, %v2766
      %v2775 = vmul.f32 %v2729, %v2767
      %v2776 = vmul.f32 %v2731, %v2768
      %v2777 = vmul.f32 %v2733, %v2769
      %v2778 = vmul.f32 %v2735, %v2770
      %v2779 = vmul.f32 %v2737, %v2771
      %v2780 = vmul.f32 %v2739, %v2772
      %v2781 = vmul.f32 %v2741, %v2773
      %v2782 = vcombine.low %v2774, %v2778
      %v2783 = vcombine.high %v2774, %v2778
      %v2785 = vunpack.c.l.s4 1983009808
      %v2786 = vunpack.c.0.s8 %v2785
      %v2787 = vlaneseq
      %v2788 = vshrl.u32 %v2787, 7
      %v2789 = vsub.s32 %v2786, %v2788
      %v2790 = vrot.slane %v2782, %v2789
      %v2792 = vunpack.c.l.s4 1983009808
      %v2793 = vunpack.c.0.s8 %v2792
      %v2794 = vlaneseq
      %v2795 = vshrl.u32 %v2794, 7
      %v2796 = vsub.s32 %v2793, %v2795
      %v2797 = vrot.slane %v2783, %v2796
      %v2798 = vcombine.low %v2776, %v2780
      %v2799 = vcombine.high %v2776, %v2780
      %v2801 = vunpack.c.l.s4 1983009808
      %v2802 = vunpack.c.0.s8 %v2801
      %v2803 = vlaneseq
      %v2804 = vshrl.u32 %v2803, 7
      %v2805 = vsub.s32 %v2802, %v2804
      %v2806 = vrot.slane %v2798, %v2805
      %v2808 = vunpack.c.l.s4 1983009808
      %v2809 = vunpack.c.0.s8 %v2808
      %v2810 = vlaneseq
      %v2811 = vshrl.u32 %v2810, 7
      %v2812 = vsub.s32 %v2809, %v2811
      %v2813 = vrot.slane %v2799, %v2812
      %v2814 = vcombine.low %v2790, %v2806
      %v2815 = vcombine.high %v2790, %v2806
      %v2817 = vunpack.c.l.s4 1934713408
      %v2818 = vunpack.c.0.s8 %v2817
      %v2819 = vlaneseq
      %v2820 = vshrl.u32 %v2819, 7
      %v2821 = vsub.s32 %v2818, %v2820
      %v2822 = vrot.slane %v2814, %v2821
      %v2824 = vunpack.c.l.s4 1934713408
      %v2825 = vunpack.c.0.s8 %v2824
      %v2826 = vlaneseq
      %v2827 = vshrl.u32 %v2826, 7
      %v2828 = vsub.s32 %v2825, %v2827
      %v2829 = vrot.slane %v2815, %v2828
      %v2830 = vcombine.low %v2797, %v2813
      %v2831 = vcombine.high %v2797, %v2813
      %v2833 = vunpack.c.l.s4 1934713408
      %v2834 = vunpack.c.0.s8 %v2833
      %v2835 = vlaneseq
      %v2836 = vshrl.u32 %v2835, 7
      %v2837 = vsub.s32 %v2834, %v2836
      %v2838 = vrot.slane %v2830, %v2837
      %v2840 = vunpack.c.l.s4 1934713408
      %v2841 = vunpack.c.0.s8 %v2840
      %v2842 = vlaneseq
      %v2843 = vshrl.u32 %v2842, 7
      %v2844 = vsub.s32 %v2841, %v2843
      %v2845 = vrot.slane %v2831, %v2844
      %v2846 = vcombine.high %v2822, 0.0
      %v2847 = vcombine.high %v2829, 0.0
      %v2848 = vcombine.high %v2838, 0.0
      %v2849 = vcombine.high %v2845, 0.0
      %v2850 = vcombine.low %v2775, %v2779
      %v2851 = vcombine.high %v2775, %v2779
      %v2853 = vunpack.c.l.s4 1983009808
      %v2854 = vunpack.c.0.s8 %v2853
      %v2855 = vlaneseq
      %v2856 = vshrl.u32 %v2855, 7
      %v2857 = vsub.s32 %v2854, %v2856
      %v2858 = vrot.slane %v2850, %v2857
      %v2860 = vunpack.c.l.s4 1983009808
      %v2861 = vunpack.c.0.s8 %v2860
      %v2862 = vlaneseq
      %v2863 = vshrl.u32 %v2862, 7
      %v2864 = vsub.s32 %v2861, %v2863
      %v2865 = vrot.slane %v2851, %v2864
      %v2866 = vcombine.low %v2777, %v2781
      %v2867 = vcombine.high %v2777, %v2781
      %v2869 = vunpack.c.l.s4 1983009808
      %v2870 = vunpack.c.0.s8 %v2869
      %v2871 = vlaneseq
      %v2872 = vshrl.u32 %v2871, 7
      %v2873 = vsub.s32 %v2870, %v2872
      %v2874 = vrot.slane %v2866, %v2873
      %v2876 = vunpack.c.l.s4 1983009808
      %v2877 = vunpack.c.0.s8 %v2876
      %v2878 = vlaneseq
      %v2879 = vshrl.u32 %v2878, 7
      %v2880 = vsub.s32 %v2877, %v2879
      %v2881 = vrot.slane %v2867, %v2880
      %v2882 = vcombine.low %v2858, %v2874
      %v2883 = vcombine.high %v2858, %v2874
      %v2885 = vunpack.c.l.s4 1934713408
      %v2886 = vunpack.c.0.s8 %v2885
      %v2887 = vlaneseq
      %v2888 = vshrl.u32 %v2887, 7
      %v2889 = vsub.s32 %v2886, %v2888
      %v2890 = vrot.slane %v2882, %v2889
      %v2892 = vunpack.c.l.s4 1934713408
      %v2893 = vunpack.c.0.s8 %v2892
      %v2894 = vlaneseq
      %v2895 = vshrl.u32 %v2894, 7
      %v2896 = vsub.s32 %v2893, %v2895
      %v2897 = vrot.slane %v2883, %v2896
      %v2898 = vcombine.low %v2865, %v2881
      %v2899 = vcombine.high %v2865, %v2881
      %v2901 = vunpack.c.l.s4 1934713408
      %v2902 = vunpack.c.0.s8 %v2901
      %v2903 = vlaneseq
      %v2904 = vshrl.u32 %v2903, 7
      %v2905 = vsub.s32 %v2902, %v2904
      %v2906 = vrot.slane %v2898, %v2905
      %v2908 = vunpack.c.l.s4 1934713408
      %v2909 = vunpack.c.0.s8 %v2908
      %v2910 = vlaneseq
      %v2911 = vshrl.u32 %v2910, 7
      %v2912 = vsub.s32 %v2909, %v2911
      %v2913 = vrot.slane %v2899, %v2912
      %v2914 = vcombine.high %v2890, 0.0
      %v2915 = vcombine.high %v2897, 0.0
      %v2916 = vcombine.high %v2906, 0.0
      %v2917 = vcombine.high %v2913, 0.0
      %2919 = vrot.lane.b32.xlu0 %v2846, 16
      %v2920 = vpop.permute.xlu0 %2919
      %2923 = vrot.lane.b32.xlu0 %v2829, 32
      %v2924 = vpop.permute.xlu0 %2923
      %2927 = vrot.lane.b32.xlu0 %v2847, 48
      %v2928 = vpop.permute.xlu0 %2927
      %2931 = vrot.lane.b32.xlu0 %v2838, 64
      %v2932 = vpop.permute.xlu0 %2931
      %2935 = vrot.lane.b32.xlu0 %v2848, 80
      %v2936 = vpop.permute.xlu0 %2935
      %2939 = vrot.lane.b32.xlu0 %v2845, 96
      %v2940 = vpop.permute.xlu0 %2939
      %2943 = vrot.lane.b32.xlu0 %v2849, 112
      %v2944 = vpop.permute.xlu0 %2943
      %2947 = vrot.lane.b32.xlu0 %v2914, 16
      %v2948 = vpop.permute.xlu0 %2947
      %2951 = vrot.lane.b32.xlu0 %v2897, 32
      %v2952 = vpop.permute.xlu0 %2951
      %2955 = vrot.lane.b32.xlu0 %v2915, 48
      %v2956 = vpop.permute.xlu0 %2955
      %2959 = vrot.lane.b32.xlu0 %v2906, 64
      %v2960 = vpop.permute.xlu0 %2959
      %2963 = vrot.lane.b32.xlu0 %v2916, 80
      %v2964 = vpop.permute.xlu0 %2963
      %2967 = vrot.lane.b32.xlu0 %v2913, 96
      %v2968 = vpop.permute.xlu0 %2967
      %2971 = vrot.lane.b32.xlu0 %v2917, 112
      %v2972 = vpop.permute.xlu0 %2971
      %v2974 = vsel %vm2693, %v2822, %v2920
      %v2975 = vsel %vm576, %v2974, %v2924
      %vm2976 = vcmask 392192
      %v2977 = vsel %vm2976, %v2975, %v2928
      %vm2978 = vcmask 523264
      %v2979 = vsel %vm2978, %v2977, %v2932
      %vm2980 = vcmask 654336
      %v2981 = vsel %vm2980, %v2979, %v2936
      %vm2982 = vcmask 785408
      %v2983 = vsel %vm2982, %v2981, %v2940
      %vm2984 = vcmask 916480
      %v2985 = vsel %vm2984, %v2983, %v2944
      %v2986 = vsel %vm2693, %v2890, %v2948
      %v2987 = vsel %vm576, %v2986, %v2952
      %v2988 = vsel %vm2976, %v2987, %v2956
      %v2989 = vsel %vm2978, %v2988, %v2960
      %v2990 = vsel %vm2980, %v2989, %v2964
      %v2991 = vsel %vm2982, %v2990, %v2968
      %v2992 = vsel %vm2984, %v2991, %v2972
      %v2995 = vcombine.low %v2985, %v2992
      %2997 = vst [vmem:[%s527] sm:$0xff] %v2995
      %v2998 = vpack.c.bf16 %v2775, %v2774
      %v2999 = vpack.c.bf16 %v2777, %v2776
      %v3000 = vpack.c.bf16 %v2779, %v2778
      %v3001 = vpack.c.bf16 %v2781, %v2780
      %v3002 = vpack.c.bf16 %v2473, %v2405
      %v3003 = vpack.c.bf16 %v2474, %v2406
      %v3004 = vpack.c.bf16 %v2475, %v2407
      %v3005 = vpack.c.bf16 %v2476, %v2408
      %v3007 = vsel %vm2693, %v2998, 0
      %3009 = vmatprep.subr.bf16.mxu0 0
      %3010 = vmatpush1.bf16.msra.mxu0 0
      %3011 = vmatprep.subr.bf16.mxu0 0
      %3012 = vmatpush1.bf16.msra.mxu0 0
      %3013 = vmatprep.subr.bf16.mxu0 0
      %3014 = vmatpush1.bf16.msra.mxu0 0
      %3015 = vmatprep.subr.bf16.mxu0 0
      %3016 = vmatpush1.bf16.msra.mxu0 0
      %3017 = vmatprep.subr.bf16.mxu0 0
      %3018 = vmatpush1.bf16.msra.mxu0 0
      %3019 = vmatprep.subr.bf16.mxu0 0
      %3020 = vmatpush1.bf16.msra.mxu0 0
      %3021 = vmatprep.subr.bf16.mxu0 0
      %3022 = vmatpush1.bf16.msra.mxu0 0
      %3023 = vmatprep.subr.bf16.mxu0 0
      %3024 = vmatpush1.bf16.msra.mxu0 %v3002
      %3025 = vmatprep.subr.bf16.mxu0 0
      %3026 = vmatpush2.bf16.msra.mxu0 0
      %3027 = vmatprep.subr.bf16.mxu0 0
      %3028 = vmatpush2.bf16.msra.mxu0 0
      %3029 = vmatprep.subr.bf16.mxu0 0
      %3030 = vmatpush2.bf16.msra.mxu0 0
      %3031 = vmatprep.subr.bf16.mxu0 0
      %3032 = vmatpush2.bf16.msra.mxu0 0
      %3033 = vmatprep.subr.bf16.mxu0 0
      %3034 = vmatpush2.bf16.msra.mxu0 0
      %3035 = vmatprep.subr.bf16.mxu0 0
      %3036 = vmatpush2.bf16.msra.mxu0 0
      %3037 = vmatprep.subr.bf16.mxu0 0
      %3038 = vmatpush2.bf16.msra.mxu0 0
      %3039 = vmatprep.subr.bf16.mxu0 0
      %3040 = vmatpush2.bf16.msra.mxu0 0
      %3041 = vmatprep.mubr.bf16.mxu0 0
      %3042 = vmatmul.mubr.bf16.gmra.mxu0 %v3007
      %v3043 = vpop.f32.mrf.mxu0
      %v3044 = vadd.f32 0.0, %v3043
      %v3045 = vpop.f32.mrf.mxu0
      %v3046 = vpop.f32.mrf.mxu0
      %v3047 = vadd.f32 0.0, %v3046
      %v3048 = vpop.f32.mrf.mxu0
      %3049 = vdwg.mxu0
      %v3051 = vsel %vm2693, %v2999, 0
      %3053 = vmatprep.subr.bf16.mxu0 0
      %3054 = vmatpush1.bf16.msra.mxu0 0
      %3055 = vmatprep.subr.bf16.mxu0 0
      %3056 = vmatpush1.bf16.msra.mxu0 0
      %3057 = vmatprep.subr.bf16.mxu0 0
      %3058 = vmatpush1.bf16.msra.mxu0 0
      %3059 = vmatprep.subr.bf16.mxu0 0
      %3060 = vmatpush1.bf16.msra.mxu0 0
      %3061 = vmatprep.subr.bf16.mxu0 0
      %3062 = vmatpush1.bf16.msra.mxu0 0
      %3063 = vmatprep.subr.bf16.mxu0 0
      %3064 = vmatpush1.bf16.msra.mxu0 0
      %3065 = vmatprep.subr.bf16.mxu0 0
      %3066 = vmatpush1.bf16.msra.mxu0 0
      %3067 = vmatprep.subr.bf16.mxu0 0
      %3068 = vmatpush1.bf16.msra.mxu0 %v3003
      %3069 = vmatprep.subr.bf16.mxu0 0
      %3070 = vmatpush2.bf16.msra.mxu0 0
      %3071 = vmatprep.subr.bf16.mxu0 0
      %3072 = vmatpush2.bf16.msra.mxu0 0
      %3073 = vmatprep.subr.bf16.mxu0 0
      %3074 = vmatpush2.bf16.msra.mxu0 0
      %3075 = vmatprep.subr.bf16.mxu0 0
      %3076 = vmatpush2.bf16.msra.mxu0 0
      %3077 = vmatprep.subr.bf16.mxu0 0
      %3078 = vmatpush2.bf16.msra.mxu0 0
      %3079 = vmatprep.subr.bf16.mxu0 0
      %3080 = vmatpush2.bf16.msra.mxu0 0
      %3081 = vmatprep.subr.bf16.mxu0 0
      %3082 = vmatpush2.bf16.msra.mxu0 0
      %3083 = vmatprep.subr.bf16.mxu0 0
      %3084 = vmatpush2.bf16.msra.mxu0 0
      %3085 = vmatprep.mubr.bf16.mxu0 0
      %3086 = vmatmul.mubr.bf16.gmra.mxu0 %v3051
      %v3087 = vpop.f32.mrf.mxu0
      %v3088 = vadd.f32 0.0, %v3087
      %v3089 = vpop.f32.mrf.mxu0
      %v3090 = vpop.f32.mrf.mxu0
      %v3091 = vadd.f32 0.0, %v3090
      %v3092 = vpop.f32.mrf.mxu0
      %3093 = vdwg.mxu0
      %v3095 = vsel %vm2693, %v3000, 0
      %3097 = vmatprep.subr.bf16.mxu0 0
      %3098 = vmatpush1.bf16.msra.mxu0 0
      %3099 = vmatprep.subr.bf16.mxu0 0
      %3100 = vmatpush1.bf16.msra.mxu0 0
      %3101 = vmatprep.subr.bf16.mxu0 0
      %3102 = vmatpush1.bf16.msra.mxu0 0
      %3103 = vmatprep.subr.bf16.mxu0 0
      %3104 = vmatpush1.bf16.msra.mxu0 0
      %3105 = vmatprep.subr.bf16.mxu0 0
      %3106 = vmatpush1.bf16.msra.mxu0 0
      %3107 = vmatprep.subr.bf16.mxu0 0
      %3108 = vmatpush1.bf16.msra.mxu0 0
      %3109 = vmatprep.subr.bf16.mxu0 0
      %3110 = vmatpush1.bf16.msra.mxu0 0
      %3111 = vmatprep.subr.bf16.mxu0 0
      %3112 = vmatpush1.bf16.msra.mxu0 %v3004
      %3113 = vmatprep.subr.bf16.mxu0 0
      %3114 = vmatpush2.bf16.msra.mxu0 0
      %3115 = vmatprep.subr.bf16.mxu0 0
      %3116 = vmatpush2.bf16.msra.mxu0 0
      %3117 = vmatprep.subr.bf16.mxu0 0
      %3118 = vmatpush2.bf16.msra.mxu0 0
      %3119 = vmatprep.subr.bf16.mxu0 0
      %3120 = vmatpush2.bf16.msra.mxu0 0
      %3121 = vmatprep.subr.bf16.mxu0 0
      %3122 = vmatpush2.bf16.msra.mxu0 0
      %3123 = vmatprep.subr.bf16.mxu0 0
      %3124 = vmatpush2.bf16.msra.mxu0 0
      %3125 = vmatprep.subr.bf16.mxu0 0
      %3126 = vmatpush2.bf16.msra.mxu0 0
      %3127 = vmatprep.subr.bf16.mxu0 0
      %3128 = vmatpush2.bf16.msra.mxu0 0
      %3129 = vmatprep.mubr.bf16.mxu0 0
      %3130 = vmatmul.mubr.bf16.gmra.mxu0 %v3095
      %v3131 = vpop.f32.mrf.mxu0
      %v3132 = vadd.f32 0.0, %v3131
      %v3133 = vpop.f32.mrf.mxu0
      %v3134 = vpop.f32.mrf.mxu0
      %v3135 = vadd.f32 0.0, %v3134
      %v3136 = vpop.f32.mrf.mxu0
      %3137 = vdwg.mxu0
      %v3139 = vsel %vm2693, %v3001, 0
      %3141 = vmatprep.subr.bf16.mxu0 0
      %3142 = vmatpush1.bf16.msra.mxu0 0
      %3143 = vmatprep.subr.bf16.mxu0 0
      %3144 = vmatpush1.bf16.msra.mxu0 0
      %3145 = vmatprep.subr.bf16.mxu0 0
      %3146 = vmatpush1.bf16.msra.mxu0 0
      %3147 = vmatprep.subr.bf16.mxu0 0
      %3148 = vmatpush1.bf16.msra.mxu0 0
      %3149 = vmatprep.subr.bf16.mxu0 0
      %3150 = vmatpush1.bf16.msra.mxu0 0
      %3151 = vmatprep.subr.bf16.mxu0 0
      %3152 = vmatpush1.bf16.msra.mxu0 0
      %3153 = vmatprep.subr.bf16.mxu0 0
      %3154 = vmatpush1.bf16.msra.mxu0 0
      %3155 = vmatprep.subr.bf16.mxu0 0
      %3156 = vmatpush1.bf16.msra.mxu0 %v3005
      %3157 = vmatprep.subr.bf16.mxu0 0
      %3158 = vmatpush2.bf16.msra.mxu0 0
      %3159 = vmatprep.subr.bf16.mxu0 0
      %3160 = vmatpush2.bf16.msra.mxu0 0
      %3161 = vmatprep.subr.bf16.mxu0 0
      %3162 = vmatpush2.bf16.msra.mxu0 0
      %3163 = vmatprep.subr.bf16.mxu0 0
      %3164 = vmatpush2.bf16.msra.mxu0 0
      %3165 = vmatprep.subr.bf16.mxu0 0
      %3166 = vmatpush2.bf16.msra.mxu0 0
      %3167 = vmatprep.subr.bf16.mxu0 0
      %3168 = vmatpush2.bf16.msra.mxu0 0
      %3169 = vmatprep.subr.bf16.mxu0 0
      %3170 = vmatpush2.bf16.msra.mxu0 0
      %3171 = vmatprep.subr.bf16.mxu0 0
      %3172 = vmatpush2.bf16.msra.mxu0 0
      %3173 = vmatprep.mubr.bf16.mxu0 0
      %3174 = vmatmul.mubr.bf16.gmra.mxu0 %v3139
      %v3175 = vpop.f32.mrf.mxu0
      %v3176 = vadd.f32 0.0, %v3175
      %v3177 = vpop.f32.mrf.mxu0
      %v3178 = vpop.f32.mrf.mxu0
      %v3179 = vadd.f32 0.0, %v3178
      %v3180 = vpop.f32.mrf.mxu0
      %3181 = vdwg.mxu0
      %v3182 = vcombine.low %v3044, %v3132
      %v3183 = vcombine.high %v3044, %v3132
      %v3185 = vunpack.c.l.s4 1983009808
      %v3186 = vunpack.c.0.s8 %v3185
      %v3187 = vlaneseq
      %v3188 = vshrl.u32 %v3187, 7
      %v3189 = vsub.s32 %v3186, %v3188
      %v3190 = vrot.slane %v3182, %v3189
      %v3192 = vunpack.c.l.s4 1983009808
      %v3193 = vunpack.c.0.s8 %v3192
      %v3194 = vlaneseq
      %v3195 = vshrl.u32 %v3194, 7
      %v3196 = vsub.s32 %v3193, %v3195
      %v3197 = vrot.slane %v3183, %v3196
      %v3198 = vcombine.low %v3088, %v3176
      %v3199 = vcombine.high %v3088, %v3176
      %v3201 = vunpack.c.l.s4 1983009808
      %v3202 = vunpack.c.0.s8 %v3201
      %v3203 = vlaneseq
      %v3204 = vshrl.u32 %v3203, 7
      %v3205 = vsub.s32 %v3202, %v3204
      %v3206 = vrot.slane %v3198, %v3205
      %v3208 = vunpack.c.l.s4 1983009808
      %v3209 = vunpack.c.0.s8 %v3208
      %v3210 = vlaneseq
      %v3211 = vshrl.u32 %v3210, 7
      %v3212 = vsub.s32 %v3209, %v3211
      %v3213 = vrot.slane %v3199, %v3212
      %v3214 = vcombine.low %v3190, %v3206
      %v3215 = vcombine.high %v3190, %v3206
      %v3217 = vunpack.c.l.s4 1934713408
      %v3218 = vunpack.c.0.s8 %v3217
      %v3219 = vlaneseq
      %v3220 = vshrl.u32 %v3219, 7
      %v3221 = vsub.s32 %v3218, %v3220
      %v3222 = vrot.slane %v3214, %v3221
      %v3224 = vunpack.c.l.s4 1934713408
      %v3225 = vunpack.c.0.s8 %v3224
      %v3226 = vlaneseq
      %v3227 = vshrl.u32 %v3226, 7
      %v3228 = vsub.s32 %v3225, %v3227
      %v3229 = vrot.slane %v3215, %v3228
      %v3230 = vcombine.low %v3197, %v3213
      %v3231 = vcombine.high %v3197, %v3213
      %v3233 = vunpack.c.l.s4 1934713408
      %v3234 = vunpack.c.0.s8 %v3233
      %v3235 = vlaneseq
      %v3236 = vshrl.u32 %v3235, 7
      %v3237 = vsub.s32 %v3234, %v3236
      %v3238 = vrot.slane %v3230, %v3237
      %v3240 = vunpack.c.l.s4 1934713408
      %v3241 = vunpack.c.0.s8 %v3240
      %v3242 = vlaneseq
      %v3243 = vshrl.u32 %v3242, 7
      %v3244 = vsub.s32 %v3241, %v3243
      %v3245 = vrot.slane %v3231, %v3244
      %v3246 = vcombine.high %v3222, 0.0
      %v3247 = vcombine.high %v3229, 0.0
      %v3248 = vcombine.high %v3238, 0.0
      %v3249 = vcombine.high %v3245, 0.0
      %v3250 = vcombine.low %v3047, %v3135
      %v3251 = vcombine.high %v3047, %v3135
      %v3253 = vunpack.c.l.s4 1983009808
      %v3254 = vunpack.c.0.s8 %v3253
      %v3255 = vlaneseq
      %v3256 = vshrl.u32 %v3255, 7
      %v3257 = vsub.s32 %v3254, %v3256
      %v3258 = vrot.slane %v3250, %v3257
      %v3260 = vunpack.c.l.s4 1983009808
      %v3261 = vunpack.c.0.s8 %v3260
      %v3262 = vlaneseq
      %v3263 = vshrl.u32 %v3262, 7
      %v3264 = vsub.s32 %v3261, %v3263
      %v3265 = vrot.slane %v3251, %v3264
      %v3266 = vcombine.low %v3091, %v3179
      %v3267 = vcombine.high %v3091, %v3179
      %v3269 = vunpack.c.l.s4 1983009808
      %v3270 = vunpack.c.0.s8 %v3269
      %v3271 = vlaneseq
      %v3272 = vshrl.u32 %v3271, 7
      %v3273 = vsub.s32 %v3270, %v3272
      %v3274 = vrot.slane %v3266, %v3273
      %v3276 = vunpack.c.l.s4 1983009808
      %v3277 = vunpack.c.0.s8 %v3276
      %v3278 = vlaneseq
      %v3279 = vshrl.u32 %v3278, 7
      %v3280 = vsub.s32 %v3277, %v3279
      %v3281 = vrot.slane %v3267, %v3280
      %v3282 = vcombine.low %v3258, %v3274
      %v3283 = vcombine.high %v3258, %v3274
      %v3285 = vunpack.c.l.s4 1934713408
      %v3286 = vunpack.c.0.s8 %v3285
      %v3287 = vlaneseq
      %v3288 = vshrl.u32 %v3287, 7
      %v3289 = vsub.s32 %v3286, %v3288
      %v3290 = vrot.slane %v3282, %v3289
      %v3292 = vunpack.c.l.s4 1934713408
      %v3293 = vunpack.c.0.s8 %v3292
      %v3294 = vlaneseq
      %v3295 = vshrl.u32 %v3294, 7
      %v3296 = vsub.s32 %v3293, %v3295
      %v3297 = vrot.slane %v3283, %v3296
      %v3298 = vcombine.low %v3265, %v3281
      %v3299 = vcombine.high %v3265, %v3281
      %v3301 = vunpack.c.l.s4 1934713408
      %v3302 = vunpack.c.0.s8 %v3301
      %v3303 = vlaneseq
      %v3304 = vshrl.u32 %v3303, 7
      %v3305 = vsub.s32 %v3302, %v3304
      %v3306 = vrot.slane %v3298, %v3305
      %v3308 = vunpack.c.l.s4 1934713408
      %v3309 = vunpack.c.0.s8 %v3308
      %v3310 = vlaneseq
      %v3311 = vshrl.u32 %v3310, 7
      %v3312 = vsub.s32 %v3309, %v3311
      %v3313 = vrot.slane %v3299, %v3312
      %v3314 = vcombine.high %v3290, 0.0
      %v3315 = vcombine.high %v3297, 0.0
      %v3316 = vcombine.high %v3306, 0.0
      %v3317 = vcombine.high %v3313, 0.0
      %v3318 = vcombine.low %v3222, %v3229
      %v3320 = vunpack.c.l.s4 1983009808
      %v3321 = vunpack.c.0.s8 %v3320
      %v3322 = vlaneseq
      %v3323 = vshrl.u32 %v3322, 7
      %v3324 = vsub.s32 %v3321, %v3323
      %v3325 = vrot.slane %v3318, %v3324
      %v3326 = vcombine.low %v3246, %v3247
      %v3328 = vunpack.c.l.s4 1983009808
      %v3329 = vunpack.c.0.s8 %v3328
      %v3330 = vlaneseq
      %v3331 = vshrl.u32 %v3330, 7
      %v3332 = vsub.s32 %v3329, %v3331
      %v3333 = vrot.slane %v3326, %v3332
      %v3334 = vcombine.low %v3238, %v3245
      %v3336 = vunpack.c.l.s4 1983009808
      %v3337 = vunpack.c.0.s8 %v3336
      %v3338 = vlaneseq
      %v3339 = vshrl.u32 %v3338, 7
      %v3340 = vsub.s32 %v3337, %v3339
      %v3341 = vrot.slane %v3334, %v3340
      %v3342 = vcombine.low %v3248, %v3249
      %v3344 = vunpack.c.l.s4 1983009808
      %v3345 = vunpack.c.0.s8 %v3344
      %v3346 = vlaneseq
      %v3347 = vshrl.u32 %v3346, 7
      %v3348 = vsub.s32 %v3345, %v3347
      %v3349 = vrot.slane %v3342, %v3348
      %v3350 = vcombine.low %v3325, %v3333
      %v3351 = vcombine.high %v3325, %v3333
      %v3353 = vunpack.c.l.s4 1934713408
      %v3354 = vunpack.c.0.s8 %v3353
      %v3355 = vlaneseq
      %v3356 = vshrl.u32 %v3355, 7
      %v3357 = vsub.s32 %v3354, %v3356
      %v3358 = vrot.slane %v3350, %v3357
      %v3360 = vunpack.c.l.s4 1934713408
      %v3361 = vunpack.c.0.s8 %v3360
      %v3362 = vlaneseq
      %v3363 = vshrl.u32 %v3362, 7
      %v3364 = vsub.s32 %v3361, %v3363
      %v3365 = vrot.slane %v3351, %v3364
      %v3366 = vcombine.low %v3341, %v3349
      %v3367 = vcombine.high %v3341, %v3349
      %v3369 = vunpack.c.l.s4 1934713408
      %v3370 = vunpack.c.0.s8 %v3369
      %v3371 = vlaneseq
      %v3372 = vshrl.u32 %v3371, 7
      %v3373 = vsub.s32 %v3370, %v3372
      %v3374 = vrot.slane %v3366, %v3373
      %v3376 = vunpack.c.l.s4 1934713408
      %v3377 = vunpack.c.0.s8 %v3376
      %v3378 = vlaneseq
      %v3379 = vshrl.u32 %v3378, 7
      %v3380 = vsub.s32 %v3377, %v3379
      %v3381 = vrot.slane %v3367, %v3380
      %v3382 = vcombine.low %v3358, %v3374
      %v3383 = vcombine.high %v3358, %v3374
      %v3384 = vcombine.low %v3365, %v3381
      %v3385 = vcombine.high %v3365, %v3381
      %v3386 = vcombine.low %v3290, %v3297
      %v3388 = vunpack.c.l.s4 1983009808
      %v3389 = vunpack.c.0.s8 %v3388
      %v3390 = vlaneseq
      %v3391 = vshrl.u32 %v3390, 7
      %v3392 = vsub.s32 %v3389, %v3391
      %v3393 = vrot.slane %v3386, %v3392
      %v3394 = vcombine.low %v3314, %v3315
      %v3396 = vunpack.c.l.s4 1983009808
      %v3397 = vunpack.c.0.s8 %v3396
      %v3398 = vlaneseq
      %v3399 = vshrl.u32 %v3398, 7
      %v3400 = vsub.s32 %v3397, %v3399
      %v3401 = vrot.slane %v3394, %v3400
      %v3402 = vcombine.low %v3306, %v3313
      %v3404 = vunpack.c.l.s4 1983009808
      %v3405 = vunpack.c.0.s8 %v3404
      %v3406 = vlaneseq
      %v3407 = vshrl.u32 %v3406, 7
      %v3408 = vsub.s32 %v3405, %v3407
      %v3409 = vrot.slane %v3402, %v3408
      %v3410 = vcombine.low %v3316, %v3317
      %v3412 = vunpack.c.l.s4 1983009808
      %v3413 = vunpack.c.0.s8 %v3412
      %v3414 = vlaneseq
      %v3415 = vshrl.u32 %v3414, 7
      %v3416 = vsub.s32 %v3413, %v3415
      %v3417 = vrot.slane %v3410, %v3416
      %v3418 = vcombine.low %v3393, %v3401
      %v3419 = vcombine.high %v3393, %v3401
      %v3421 = vunpack.c.l.s4 1934713408
      %v3422 = vunpack.c.0.s8 %v3421
      %v3423 = vlaneseq
      %v3424 = vshrl.u32 %v3423, 7
      %v3425 = vsub.s32 %v3422, %v3424
      %v3426 = vrot.slane %v3418, %v3425
      %v3428 = vunpack.c.l.s4 1934713408
      %v3429 = vunpack.c.0.s8 %v3428
      %v3430 = vlaneseq
      %v3431 = vshrl.u32 %v3430, 7
      %v3432 = vsub.s32 %v3429, %v3431
      %v3433 = vrot.slane %v3419, %v3432
      %v3434 = vcombine.low %v3409, %v3417
      %v3435 = vcombine.high %v3409, %v3417
      %v3437 = vunpack.c.l.s4 1934713408
      %v3438 = vunpack.c.0.s8 %v3437
      %v3439 = vlaneseq
      %v3440 = vshrl.u32 %v3439, 7
      %v3441 = vsub.s32 %v3438, %v3440
      %v3442 = vrot.slane %v3434, %v3441
      %v3444 = vunpack.c.l.s4 1934713408
      %v3445 = vunpack.c.0.s8 %v3444
      %v3446 = vlaneseq
      %v3447 = vshrl.u32 %v3446, 7
      %v3448 = vsub.s32 %v3445, %v3447
      %v3449 = vrot.slane %v3435, %v3448
      %v3450 = vcombine.low %v3426, %v3442
      %v3451 = vcombine.high %v3426, %v3442
      %v3452 = vcombine.low %v3433, %v3449
      %v3453 = vcombine.high %v3433, %v3449
      %3456 = vrot.lane.b32.xlu0 %v3383, 8
      %v3457 = vpop.permute.xlu0 %3456
      %3458 = vrot.lane.b32.xlu0 %v3451, 8
      %v3459 = vpop.permute.xlu0 %3458
      %3464 = vrot.lane.b32.xlu0 %v3384, 16
      %v3465 = vpop.permute.xlu0 %3464
      %3466 = vrot.lane.b32.xlu0 %v3452, 16
      %v3467 = vpop.permute.xlu0 %3466
      %3472 = vrot.lane.b32.xlu0 %v3385, 24
      %v3473 = vpop.permute.xlu0 %3472
      %3474 = vrot.lane.b32.xlu0 %v3453, 24
      %v3475 = vpop.permute.xlu0 %3474
      %v3478 = vsel %vm2485, %v3382, %v3457
      %v3479 = vsel %vm2485, %v3450, %v3459
      %v3480 = vsel %vm2693, %v3478, %v3465
      %v3481 = vsel %vm2693, %v3479, %v3467
      %vm3482 = vcmask 195584
      %v3483 = vsel %vm3482, %v3480, %v3473
      %v3484 = vsel %vm3482, %v3481, %v3475
      %v3485 = vpack.c.bf16 %v3484, %v3483
      %v3486 = vld [vmem:[%s503] sm:$0xf]
      %v3487 = vld [vmem:[%s503 + $0x4] sm:$0xf]
      %v3488 = vld [vmem:[%s503 + $0x8] sm:$0xf]
      %v3489 = vld [vmem:[%s503 + $0xc] sm:$0xf]
      %v3490 = vld [vmem:[%s506] sm:$0x1]
      %v3492 = vlaneseq
      %v3493 = vshrl.u32 %v3492, 7
      %v3494 = vsub.s32 0, %v3493
      %v3495 = vrot.slane %v3490, %v3494
      %v3501 = vunpack.c.l.b16 %v3486
      %v3502 = vunpack.c.l.b16 %v3487
      %v3503 = vunpack.c.l.b16 %v3488
      %v3504 = vunpack.c.l.b16 %v3489
      %v3505 = vpack.c.b16 %v3502, %v3501
      %v3506 = vpack.c.b16 %v3504, %v3503
      %v3510 = vsel %vm576, %v3485, 0
      %3512 = vmatprep.subr.bf16.mxu0 0
      %3513 = vmatpush1.bf16.msra.mxu0 0
      %3514 = vmatprep.subr.bf16.mxu0 0
      %3515 = vmatpush1.bf16.msra.mxu0 0
      %3516 = vmatprep.subr.bf16.mxu0 0
      %3517 = vmatpush1.bf16.msra.mxu0 0
      %3518 = vmatprep.subr.bf16.mxu0 0
      %3519 = vmatpush1.bf16.msra.mxu0 0
      %3520 = vmatprep.subr.bf16.mxu0 0
      %3521 = vmatpush1.bf16.msra.mxu0 0
      %3522 = vmatprep.subr.bf16.mxu0 0
      %3523 = vmatpush1.bf16.msra.mxu0 0
      %3524 = vmatprep.subr.bf16.mxu0 0
      %3525 = vmatpush1.bf16.msra.mxu0 %v3506
      %3526 = vmatprep.subr.bf16.mxu0 0
      %3527 = vmatpush1.bf16.msra.mxu0 %v3505
      %3528 = vmatprep.subr.bf16.mxu0 0
      %3529 = vmatpush2.bf16.msra.mxu0 0
      %3530 = vmatprep.subr.bf16.mxu0 0
      %3531 = vmatpush2.bf16.msra.mxu0 0
      %3532 = vmatprep.subr.bf16.mxu0 0
      %3533 = vmatpush2.bf16.msra.mxu0 0
      %3534 = vmatprep.subr.bf16.mxu0 0
      %3535 = vmatpush2.bf16.msra.mxu0 0
      %3536 = vmatprep.subr.bf16.mxu0 0
      %3537 = vmatpush2.bf16.msra.mxu0 0
      %3538 = vmatprep.subr.bf16.mxu0 0
      %3539 = vmatpush2.bf16.msra.mxu0 0
      %3540 = vmatprep.subr.bf16.mxu0 0
      %3541 = vmatpush2.bf16.msra.mxu0 0
      %3542 = vmatprep.subr.bf16.mxu0 0
      %3543 = vmatpush2.bf16.msra.mxu0 0
      %3544 = vmatprep.mubr.bf16.mxu0 0
      %3545 = vmatmul.mubr.bf16.gmra.mxu0 %v3510
      %v3546 = vpop.f32.mrf.mxu0
      %v3547 = vadd.f32 %v3495, %v3546
      %v3548 = vpop.f32.mrf.mxu0
      %v3549 = vpop.f32.mrf.mxu0
      %v3550 = vadd.f32 %v3495, %v3549
      %v3551 = vpop.f32.mrf.mxu0
      %3552 = vdwg.mxu0
      %v3553 = vadd.f32 %v3547, %v550
      %v3554 = vadd.f32 %v3550, %v551
      %v3555 = vpack.c.bf16 %v3554, %v3553
      %v3556 = vld [vmem:[%s511] sm:$0xf]
      %v3557 = vld [vmem:[%s511 + $0x4] sm:$0xf]
      %v3558 = vld [vmem:[%s511 + $0x8] sm:$0xf]
      %v3559 = vld [vmem:[%s511 + $0xc] sm:$0xf]
      %v3560 = vld [vmem:[%s514] sm:$0x1]
      %v3562 = vlaneseq
      %v3563 = vshrl.u32 %v3562, 7
      %v3564 = vsub.s32 0, %v3563
      %v3565 = vrot.slane %v3560, %v3564
      %v3571 = vunpack.c.l.b16 %v3556
      %v3572 = vunpack.c.l.b16 %v3557
      %v3573 = vunpack.c.l.b16 %v3558
      %v3574 = vunpack.c.l.b16 %v3559
      %v3575 = vpack.c.b16 %v3572, %v3571
      %v3576 = vpack.c.b16 %v3574, %v3573
      %v3580 = vsel %vm576, %v3555, 0
      %3582 = vmatprep.subr.bf16.mxu0 0
      %3583 = vmatpush1.bf16.msra.mxu0 0
      %3584 = vmatprep.subr.bf16.mxu0 0
      %3585 = vmatpush1.bf16.msra.mxu0 0
      %3586 = vmatprep.subr.bf16.mxu0 0
      %3587 = vmatpush1.bf16.msra.mxu0 0
      %3588 = vmatprep.subr.bf16.mxu0 0
      %3589 = vmatpush1.bf16.msra.mxu0 0
      %3590 = vmatprep.subr.bf16.mxu0 0
      %3591 = vmatpush1.bf16.msra.mxu0 0
      %3592 = vmatprep.subr.bf16.mxu0 0
      %3593 = vmatpush1.bf16.msra.mxu0 0
      %3594 = vmatprep.subr.bf16.mxu0 0
      %3595 = vmatpush1.bf16.msra.mxu0 %v3576
      %3596 = vmatprep.subr.bf16.mxu0 0
      %3597 = vmatpush1.bf16.msra.mxu0 %v3575
      %3598 = vmatprep.subr.bf16.mxu0 0
      %3599 = vmatpush2.bf16.msra.mxu0 0
      %3600 = vmatprep.subr.bf16.mxu0 0
      %3601 = vmatpush2.bf16.msra.mxu0 0
      %3602 = vmatprep.subr.bf16.mxu0 0
      %3603 = vmatpush2.bf16.msra.mxu0 0
      %3604 = vmatprep.subr.bf16.mxu0 0
      %3605 = vmatpush2.bf16.msra.mxu0 0
      %3606 = vmatprep.subr.bf16.mxu0 0
      %3607 = vmatpush2.bf16.msra.mxu0 0
      %3608 = vmatprep.subr.bf16.mxu0 0
      %3609 = vmatpush2.bf16.msra.mxu0 0
      %3610 = vmatprep.subr.bf16.mxu0 0
      %3611 = vmatpush2.bf16.msra.mxu0 0
      %3612 = vmatprep.subr.bf16.mxu0 0
      %3613 = vmatpush2.bf16.msra.mxu0 0
      %3614 = vmatprep.mubr.bf16.mxu0 0
      %3615 = vmatmul.mubr.bf16.gmra.mxu0 %v3580
      %v3616 = vpop.f32.mrf.mxu0
      %v3617 = vadd.f32 %v3565, %v3616
      %v3618 = vpop.f32.mrf.mxu0
      %v3619 = vpop.f32.mrf.mxu0
      %v3620 = vadd.f32 %v3565, %v3619
      %v3621 = vpop.f32.mrf.mxu0
      %3622 = vdwg.mxu0
      %v3623 = vmax.f32 %v3617, 0.0
      %v3624 = vmax.f32 %v3620, 0.0
      %v3625 = vpack.c.bf16 %v3624, %v3623
      %v3626 = vld [vmem:[%s519] sm:$0xf]
      %v3627 = vld [vmem:[%s519 + $0x4] sm:$0xf]
      %v3628 = vld [vmem:[%s519 + $0x8] sm:$0xf]
      %v3629 = vld [vmem:[%s519 + $0xc] sm:$0xf]
      %v3630 = vld [vmem:[%s519 + $0x10] sm:$0xf]
      %v3631 = vld [vmem:[%s519 + $0x14] sm:$0xf]
      %v3632 = vld [vmem:[%s519 + $0x18] sm:$0xf]
      %v3633 = vld [vmem:[%s519 + $0x1c] sm:$0xf]
      %v3634 = vld [vmem:[%s522] sm:$0x1]
      %v3636 = vlaneseq
      %v3637 = vshrl.u32 %v3636, 7
      %v3638 = vsub.s32 0, %v3637
      %v3639 = vrot.slane %v3634, %v3638
      %v3649 = vunpack.c.l.b16 %v3626
      %v3650 = vunpack.c.l.b16 %v3627
      %v3651 = vunpack.c.l.b16 %v3628
      %v3652 = vunpack.c.l.b16 %v3629
      %v3653 = vunpack.c.l.b16 %v3630
      %v3654 = vunpack.c.l.b16 %v3631
      %v3655 = vunpack.c.l.b16 %v3632
      %v3656 = vunpack.c.l.b16 %v3633
      %v3657 = vpack.c.b16 %v3650, %v3649
      %v3658 = vpack.c.b16 %v3652, %v3651
      %v3659 = vpack.c.b16 %v3654, %v3653
      %v3660 = vpack.c.b16 %v3656, %v3655
      %v3666 = vsel %vm2978, %v3625, 0
      %3668 = vmatprep.subr.bf16.mxu0 0
      %3669 = vmatpush1.bf16.msra.mxu0 0
      %3670 = vmatprep.subr.bf16.mxu0 0
      %3671 = vmatpush1.bf16.msra.mxu0 0
      %3672 = vmatprep.subr.bf16.mxu0 0
      %3673 = vmatpush1.bf16.msra.mxu0 0
      %3674 = vmatprep.subr.bf16.mxu0 0
      %3675 = vmatpush1.bf16.msra.mxu0 0
      %3676 = vmatprep.subr.bf16.mxu0 0
      %3677 = vmatpush1.bf16.msra.mxu0 %v3660
      %3678 = vmatprep.subr.bf16.mxu0 0
      %3679 = vmatpush1.bf16.msra.mxu0 %v3659
      %3680 = vmatprep.subr.bf16.mxu0 0
      %3681 = vmatpush1.bf16.msra.mxu0 %v3658
      %3682 = vmatprep.subr.bf16.mxu0 0
      %3683 = vmatpush1.bf16.msra.mxu0 %v3657
      %3684 = vmatprep.subr.bf16.mxu0 0
      %3685 = vmatpush2.bf16.msra.mxu0 0
      %3686 = vmatprep.subr.bf16.mxu0 0
      %3687 = vmatpush2.bf16.msra.mxu0 0
      %3688 = vmatprep.subr.bf16.mxu0 0
      %3689 = vmatpush2.bf16.msra.mxu0 0
      %3690 = vmatprep.subr.bf16.mxu0 0
      %3691 = vmatpush2.bf16.msra.mxu0 0
      %3692 = vmatprep.subr.bf16.mxu0 0
      %3693 = vmatpush2.bf16.msra.mxu0 0
      %3694 = vmatprep.subr.bf16.mxu0 0
      %3695 = vmatpush2.bf16.msra.mxu0 0
      %3696 = vmatprep.subr.bf16.mxu0 0
      %3697 = vmatpush2.bf16.msra.mxu0 0
      %3698 = vmatprep.subr.bf16.mxu0 0
      %3699 = vmatpush2.bf16.msra.mxu0 0
      %3700 = vmatprep.mubr.bf16.mxu0 0
      %3701 = vmatmul.mubr.bf16.gmra.mxu0 %v3666
      %v3702 = vpop.f32.mrf.mxu0
      %v3703 = vadd.f32 %v3639, %v3702
      %v3704 = vpop.f32.mrf.mxu0
      %v3705 = vpop.f32.mrf.mxu0
      %v3706 = vadd.f32 %v3639, %v3705
      %v3707 = vpop.f32.mrf.mxu0
      %3708 = vdwg.mxu0
      %v3709 = vadd.f32 %v3703, %v3553
      %v3710 = vadd.f32 %v3706, %v3554
      %3711 = vst.msk [vmem:[#allocation2] sm:$0xff] %vm576, %v3709
      %3712 = vst.msk [vmem:[#allocation2 + $0x8] sm:$0xff] %vm576, %v3710
      %p3713 = scmp.eq.s32.totalorder %s24, 1
      // Predicated region
      $region69: #{transformer_forward.1} parent=63 // pred_check
        %p3714 = pneg %p3713
      $region70: #{transformer_forward.1} parent=63 // pred_check_branch
        %3716 = sbr.rel (%p3714) target = $region72
      $region71: #{transformer_forward.1} parent=63 // pred_region
        %v3717 = vpack.c.bf16 %v3710, %v3709
        %v3718 = vld [vmem:[%s9] sm:$0xf]
        %v3719 = vld [vmem:[%s9 + $0x4] sm:$0xf]
        %v3720 = vld [vmem:[%s9 + $0x8] sm:$0xf]
        %v3721 = vld [vmem:[%s9 + $0xc] sm:$0xf]
        %v3722 = vld [vmem:[%s10] sm:$0x1]
        %v3724 = vlaneseq
        %v3725 = vshrl.u32 %v3724, 7
        %v3726 = vsub.s32 0, %v3725
        %v3727 = vrot.slane %v3722, %v3726
        %v3733 = vunpack.c.l.b16 %v3718
        %v3734 = vunpack.c.l.b16 %v3719
        %v3735 = vunpack.c.l.b16 %v3720
        %v3736 = vunpack.c.l.b16 %v3721
        %v3737 = vpack.c.b16 %v3734, %v3733
        %v3738 = vpack.c.b16 %v3736, %v3735
        %v3742 = vsel %vm576, %v3717, 0
        %3744 = vmatprep.subr.bf16.mxu0 0
        %3745 = vmatpush1.bf16.msra.mxu0 0
        %3746 = vmatprep.subr.bf16.mxu0 0
        %3747 = vmatpush1.bf16.msra.mxu0 0
        %3748 = vmatprep.subr.bf16.mxu0 0
        %3749 = vmatpush1.bf16.msra.mxu0 0
        %3750 = vmatprep.subr.bf16.mxu0 0
        %3751 = vmatpush1.bf16.msra.mxu0 0
        %3752 = vmatprep.subr.bf16.mxu0 0
        %3753 = vmatpush1.bf16.msra.mxu0 0
        %3754 = vmatprep.subr.bf16.mxu0 0
        %3755 = vmatpush1.bf16.msra.mxu0 0
        %3756 = vmatprep.subr.bf16.mxu0 0
        %3757 = vmatpush1.bf16.msra.mxu0 %v3738
        %3758 = vmatprep.subr.bf16.mxu0 0
        %3759 = vmatpush1.bf16.msra.mxu0 %v3737
        %3760 = vmatprep.subr.bf16.mxu0 0
        %3761 = vmatpush2.bf16.msra.mxu0 0
        %3762 = vmatprep.subr.bf16.mxu0 0
        %3763 = vmatpush2.bf16.msra.mxu0 0
        %3764 = vmatprep.subr.bf16.mxu0 0
        %3765 = vmatpush2.bf16.msra.mxu0 0
        %3766 = vmatprep.subr.bf16.mxu0 0
        %3767 = vmatpush2.bf16.msra.mxu0 0
        %3768 = vmatprep.subr.bf16.mxu0 0
        %3769 = vmatpush2.bf16.msra.mxu0 0
        %3770 = vmatprep.subr.bf16.mxu0 0
        %3771 = vmatpush2.bf16.msra.mxu0 0
        %3772 = vmatprep.subr.bf16.mxu0 0
        %3773 = vmatpush2.bf16.msra.mxu0 0
        %3774 = vmatprep.subr.bf16.mxu0 0
        %3775 = vmatpush2.bf16.msra.mxu0 0
        %3776 = vmatprep.mubr.bf16.mxu0 0
        %3777 = vmatmul.mubr.bf16.gmra.mxu0 %v3742
        %v3778 = vpop.f32.mrf.mxu0
        %v3779 = vadd.f32 %v3727, %v3778
        %v3780 = vpop.f32.mrf.mxu0
        %v3781 = vpop.f32.mrf.mxu0
        %v3782 = vadd.f32 %v3727, %v3781
        %v3783 = vpop.f32.mrf.mxu0
        %3784 = vdwg.mxu0
        %3785 = vmax.xlane.f32.xlu0 %v3779
        %v3786 = vpop.xlane.xlu0 %3785
        %3787 = vmax.xlane.f32.xlu0 %v3782
        %v3788 = vpop.xlane.xlu0 %3787
        %v3789 = vsub.f32 %v3779, %v3786
        %v3790 = vsub.f32 %v3782, %v3788
        %v3791 = vmul.f32 %v3789, 1.442695
        %v3792 = vpow.pop %v3791
        %v3793 = vmul.f32 %v3790, 1.442695
        %v3794 = vpow.pop %v3793
        %3795 = vadd.xlane.f32.xlu0 %v3792
        %v3796 = vpop.xlane.xlu0 %3795
        %3797 = vadd.xlane.f32.xlu0 %v3794
        %v3798 = vpop.xlane.xlu0 %3797
        %v3799 = vlog2.pop %v3796
        %v3800 = vmul.f32 %v3799, 0.6931472
        %v3801 = vlog2.pop %v3798
        %v3802 = vmul.f32 %v3801, 0.6931472
        %v3803 = vadd.f32 %v3800, %v3786
        %v3804 = vadd.f32 %v3802, %v3788
        %v3805 = vsub.f32 %v3779, %v3803
        %v3806 = vsub.f32 %v3782, %v3804
        %3807 = vst [vmem:[%s12] sm:$0xff] %v3805
        %3808 = vst [vmem:[%s12 + $0x8] sm:$0xff] %v3806
      $region72: #{transformer_forward.1} parent=63 // pred_fallthru
        _
      %p3809 = scmp.lt.s32.totalorder %s24, 1
      %s3810 = scalar_select %p3809, %s24, 1
      %s3811 = smul.addr %s3810, 2
      %s3812 = smul.addr %s3811, 4
      %s3813 = scalar_lea.vmem %s11, %s3812
      // Predicated region
      $region73: #{transformer_forward.1} parent=63 // pred_check
        %p3814 = pneg %p313
      $region74: #{transformer_forward.1} parent=63 // pred_check_branch
        %3816 = sbr.rel (%p3814) target = $region76
      $region75: #{transformer_forward.1} parent=63 // pred_region
        _
      $region76: #{transformer_forward.1} parent=63 // pred_fallthru
        _
      // Predicated region
      $region77: #{transformer_forward.1} parent=63 // pred_check
        %p3817 = pneg %p334
      $region78: #{transformer_forward.1} parent=63 // pred_check_branch
        %3819 = sbr.rel (%p3817) target = $region80
      $region79: #{transformer_forward.1} parent=63 // pred_region
        _
      $region80: #{transformer_forward.1} parent=63 // pred_fallthru
        _
      // Predicated region
      $region81: #{transformer_forward.1} parent=63 // pred_check
        %p3820 = pneg %p334
      $region82: #{transformer_forward.1} parent=63 // pred_check_branch
        %3822 = sbr.rel (%p3820) target = $region84
      $region83: #{transformer_forward.1} parent=63 // pred_region
        _
      $region84: #{transformer_forward.1} parent=63 // pred_fallthru
        _
    $region64: #{transformer_forward.1} parent=5 // pred_fallthru
      _
    %p3823 = scmp.le.s32.totalorder 2, %s19
    // Predicated region
    $region85: #{transformer_forward.1} parent=5 // pred_check
      %p3824 = pneg %p3823
    $region86: #{transformer_forward.1} parent=5 // pred_check_branch
      %3826 = sbr.rel (%p3824) target = $region88
    $region87: #{transformer_forward.1} parent=5 // pred_region
      %s3827 = ssub.s32 %s19, 2
      // Predicated region
      $region89: #{transformer_forward.1} parent=87 // pred_check
        %p3828 = pneg %p319
      $region90: #{transformer_forward.1} parent=87 // pred_check_branch
        %3830 = sbr.rel (%p3828) target = $region92
      $region91: #{transformer_forward.1} parent=87 // pred_region
        %p3831 = scmp.lt.s32.totalorder %s25, 1
        %s3832 = scalar_select %p3831, %s25, 1
        %s3833 = smul.addr %s3832, 2
        %s3834 = smul.addr %s3833, 4
        %s3835 = scalar_lea.vmem %s11, %s3834
      $region92: #{transformer_forward.1} parent=87 // pred_fallthru
        _
    $region88: #{transformer_forward.1} parent=5 // pred_fallthru
      _
  $region6: #{transformer_forward.1} parent=0 // loop_footer
    %s23 = sadd.s32 1, %s19
  $region7: #{transformer_forward.1} parent=0 // loop_footer_branch
    %18 = sbr.rel target = $region3
  $region8: #{transformer_forward.1} parent=0 // loop_exit
    _

</llo_original>
